<compile_context>
chip_gen: v7x
topology: tpu7x:2x2x1
jax: 0.10.0
libtpu: 0.0.40
codegen_flags: <defaults>
</compile_context>

<pallas_src>
import functools
from typing import Dict, List

import jax
import jax.numpy as jnp
from jax.experimental import pallas as pl
from jax.experimental.pallas import tpu as pltpu

LN_EPS = 1e-5  # PyTorch nn.LayerNorm default


def _round_up(x: int, m: int) -> int:
    return ((x + m - 1) // m) * m


def _num_tensorcores() -> int:
    """Best-effort TC-per-chip count: v7x has 2, v5e/v6e have 1."""
    try:
        kind = jax.devices()[0].device_kind.lower()
    except Exception:
        return 1
    return 2 if ("v7" in kind or "7x" in kind) else 1


def _pick_block_batch(batch: int, num_tc: int, max_rows: int = 512) -> int:
    """One grid step per TensorCore (capped), rounded to the sublane size."""
    per_core = -(-max(batch, 1) // num_tc)
    return min(max(8, _round_up(per_core, 8)), max_rows)


# ----------------------------------------------------------------------------
# Kernel
# ----------------------------------------------------------------------------
def _actor_critic_kernel(n_hidden_layers, action_dim, *refs):
    """refs = [x, (W_i bf16, vec_i fp32(3,N)) * n_hidden, W_head bf16, b_head fp32, out]."""
    x_ref = refs[0]
    out_ref = refs[-1]
    h = x_ref[...].astype(jnp.float32)

    idx = 1
    for _ in range(n_hidden_layers):
        w_ref, vec_ref = refs[idx], refs[idx + 1]
        idx += 2
        vec = vec_ref[...]                      # (3, N): rows = [bias, gamma, beta]
        # MXU matmul: bf16 operands (weights pre-cast in prepare_params), fp32 acc.
        z = jnp.dot(h.astype(w_ref.dtype), w_ref[...],
                    preferred_element_type=jnp.float32) + vec[0:1, :]
        # Fused single-pass LayerNorm (fp32 VPU math), FMA-shaped scale/shift.
        mu = jnp.mean(z, axis=-1, keepdims=True)
        ms = jnp.mean(z * z, axis=-1, keepdims=True)
        var = jnp.maximum(ms - mu * mu, 0.0)
        inv = jax.lax.rsqrt(var + LN_EPS)
        scale = inv * vec[1:2, :]
        shift = vec[2:3, :] - mu * scale
        h = jnp.maximum(z * scale + shift, 0.0)

    wh_ref, bh_ref = refs[idx], refs[idx + 1]
    # Fused actor+critic head: one lane-dense matmul (probs lanes [0:A], value lane A).
    head = jnp.dot(h.astype(wh_ref.dtype), wh_ref[...],
                   preferred_element_type=jnp.float32) + bh_ref[...]

    bm, head_n = head.shape
    lane = jax.lax.broadcasted_iota(jnp.int32, (bm, head_n), 1)
    is_actor = lane < action_dim

    # Softmax over the real action lanes only (fp32, EUP reciprocal).
    logits = jnp.where(is_actor, head, -jnp.inf)
    m = jnp.max(logits, axis=-1, keepdims=True)
    e = jnp.exp(logits - m)
    probs = e * pl.reciprocal(jnp.sum(e, axis=-1, keepdims=True), approx=True)

    # probs is already 0 on masked lanes, so one select builds the whole slab.
    out_ref[...] = jnp.where(lane == action_dim, head, probs).astype(out_ref.dtype)


# ----------------------------------------------------------------------------
# One-time parameter preparation (hoisted out of the per-call path)
# ----------------------------------------------------------------------------
def _fuse_heads(wa, ba, wc, bc, head_n):
    h_last, a = wa.shape
    wh = jnp.zeros((h_last, head_n), jnp.float32)
    wh = wh.at[:, :a].set(wa).at[:, a:a + 1].set(wc)
    bh = jnp.zeros((1, head_n), jnp.float32)
    bh = bh.at[:, :a].set(ba.reshape(1, -1)).at[:, a:a + 1].set(bc.reshape(1, 1))
    return wh, bh


def init_params(key, input_dim: int, action_dim: int, hidden_dims: List[int]):
    """Deterministic synthetic init (shapes match the PyTorch module)."""
    params = []
    dims = [input_dim] + list(hidden_dims)
    for i in range(len(hidden_dims)):
        key, k1, k2 = jax.random.split(key, 3)
        fan_in = dims[i]
        w = jax.random.normal(k1, (dims[i], dims[i + 1]), jnp.float32) / jnp.sqrt(fan_in)
        b = 0.01 * jax.random.normal(k2, (1, dims[i + 1]), jnp.float32)
        gamma = jnp.ones((1, dims[i + 1]), jnp.float32)
        beta = jnp.zeros((1, dims[i + 1]), jnp.float32)
        params += [w, b, gamma, beta]
    key, k1, k2, k3, k4 = jax.random.split(key, 5)
    h_last = hidden_dims[-1]
    wa = jax.random.normal(k1, (h_last, action_dim), jnp.float32) / jnp.sqrt(h_last)
    ba = 0.01 * jax.random.normal(k2, (1, action_dim), jnp.float32)
    wc = jax.random.normal(k3, (h_last, 1), jnp.float32) / jnp.sqrt(h_last)
    bc = 0.01 * jax.random.normal(k4, (1, 1), jnp.float32)
    params += [wa, ba, wc, bc]
    return params


def prepare_params(params, input_dim: int, action_dim: int, hidden_dims: List[int],
                   matmul_dtype=jnp.bfloat16) -> Dict:
    """Fuse heads, pack per-layer vectors, pre-cast weights to the MXU dtype.
    Call ONCE; reuse the result for every forward call (no per-call HBM churn)."""
    n_hidden = len(hidden_dims)
    tensors = []
    for li in range(n_hidden):
        w, b, g, be = params[4 * li: 4 * li + 4]
        tensors.append(w.astype(matmul_dtype))
        vec = jnp.concatenate(
            [b.reshape(1, -1), g.reshape(1, -1), be.reshape(1, -1)], axis=0
        ).astype(jnp.float32)                                   # (3, N)
        tensors.append(vec)
    wa, ba, wc, bc = params[4 * n_hidden: 4 * n_hidden + 4]
    head_n = max(128, _round_up(action_dim + 1, 128))
    wh, bh = _fuse_heads(wa, ba, wc, bc, head_n)
    tensors.append(wh.astype(matmul_dtype))
    tensors.append(bh)
    tensors = [jax.block_until_ready(t) for t in tensors]
    return dict(tensors=tensors, n_hidden=n_hidden, action_dim=action_dim,
                head_n=head_n, input_dim=input_dim, hidden_dims=list(hidden_dims))


# ----------------------------------------------------------------------------
# Forward wrapper
# ----------------------------------------------------------------------------
def actor_critic_forward(state, prepared: Dict, block_batch: int = None):
    tensors = prepared["tensors"]
    n_hidden = prepared["n_hidden"]
    action_dim = prepared["action_dim"]
    head_n = prepared["head_n"]

    B, d_in = state.shape
    assert d_in == prepared["input_dim"]

    num_tc = _num_tensorcores()
    if block_batch is None:
        block_batch = _pick_block_batch(B, num_tc)
    block_batch = max(8, _round_up(block_batch, 8))
    b_pad = _round_up(B, block_batch)
    state_p = jnp.pad(state, ((0, b_pad - B), (0, 0))) if b_pad != B else state
    grid = (b_pad // block_batch,)

    kernel = functools.partial(_actor_critic_kernel, n_hidden, action_dim)

    def make_param_spec(shape, ndim, single_buffer):
        # bind ndim as a default arg to avoid Python late-binding bugs
        idx_map = lambda i, nd=ndim: (0,) * nd
        if single_buffer:
            # Constant-index params: single-buffer to halve their VMEM footprint.
            return pl.BlockSpec(shape, idx_map, pipeline_mode=pl.Buffered(1))
        return pl.BlockSpec(shape, idx_map)

    def run(single_buffer_params):
        x_spec = pl.BlockSpec((block_batch, d_in), lambda i: (i, 0))
        param_specs = [make_param_spec(t.shape, t.ndim, single_buffer_params)
                       for t in tensors]
        out_spec = pl.BlockSpec((block_batch, head_n), lambda i: (i, 0))

        # Explicit VMEM budget: params x buffer-count + double-buffered x/out
        # tiles, 1.5x headroom, floored at the 32 MiB scoped default.
        param_bytes = sum(int(t.size) * t.dtype.itemsize for t in tensors)
        buf = 1 if single_buffer_params else 2
        needed = buf * param_bytes + 2 * block_batch * (d_in + head_n) * 4
        vmem_limit = min(128 << 20, max(32 << 20, int(1.5 * needed) + (2 << 20)))

        out = pl.pallas_call(
            kernel,
            out_shape=jax.ShapeDtypeStruct((b_pad, head_n), jnp.float32),
            grid_spec=pltpu.PrefetchScalarGridSpec(
                num_scalar_prefetch=0,
                grid=grid,
                in_specs=[x_spec] + param_specs,
                out_specs=out_spec,
            ),
            compiler_params=pltpu.CompilerParams(
                dimension_semantics=("parallel",),
                vmem_limit_bytes=vmem_limit,
            ),
        )(state_p, *tensors)
        return jax.block_until_ready(out)

    try:
        out = run(True)
    except Exception:
        # Fallback if this JAX build rejects pipeline_mode=Buffered(1) on a
        # top-level pallas_call BlockSpec; semantics are identical.
        out = run(False)

    probs = out[:B, :action_dim]
    value = out[:B, action_dim:action_dim + 1]
    return probs, value


# ----------------------------------------------------------------------------
# Pure-JAX reference (PyTorch semantics; optional bf16 operand quantization)
# ----------------------------------------------------------------------------
def reference_forward(state, params, hidden_dims, matmul_dtype=jnp.float32):
    n_hidden = len(hidden_dims)
    h = state.astype(jnp.float32)
    idx = 0
    for _ in range(n_hidden):
        w, b, g, be = params[idx:idx + 4]
        idx += 4
        z = jnp.dot(h.astype(matmul_dtype), w.astype(matmul_dtype),
                    preferred_element_type=jnp.float32) + b
        mu = jnp.mean(z, axis=-1, keepdims=True)
        var = jnp.mean((z - mu) ** 2, axis=-1, keepdims=True)
        h = jnp.maximum((z - mu) * jax.lax.rsqrt(var + LN_EPS) * g + be, 0.0)
    wa, ba, wc, bc = params[idx:idx + 4]
    logits = jnp.dot(h.astype(matmul_dtype), wa.astype(matmul_dtype),
                     preferred_element_type=jnp.float32) + ba
    probs = jax.nn.softmax(logits, axis=-1)
    value = jnp.dot(h.astype(matmul_dtype), wc.astype(matmul_dtype),
                    preferred_element_type=jnp.float32) + bc
    return probs, value


if __name__ == "__main__":
    input_dim = 32
    action_dim = 4
    hidden_dims = [128, 64]
    batch = 256  # -> grid=(1,) on v5e/v6e, grid=(2,) with 128-row tiles on v7x

    key = jax.random.PRNGKey(0)
    key, pkey, xkey = jax.random.split(key, 3)
    params = init_params(pkey, input_dim, action_dim, hidden_dims)
    state = jax.random.normal(xkey, (batch, input_dim), jnp.float32)

    # One-time weight preparation (cast/fuse/pack), reused by every forward.
    prepared = prepare_params(params, input_dim, action_dim, hidden_dims,
                              matmul_dtype=jnp.bfloat16)

    probs, value = actor_critic_forward(state, prepared)
    probs = jax.block_until_ready(probs)
    value = jax.block_until_ready(value)

    assert probs.shape == (batch, action_dim)
    assert value.shape == (batch, 1)

    # Matched-precision reference (same bf16 operand quantization, fp32 accum).
    ref_probs, ref_value = reference_forward(state, params, hidden_dims,
                                             matmul_dtype=jnp.bfloat16)
    assert jnp.allclose(probs, ref_probs, atol=5e-3, rtol=5e-3)
    assert jnp.allclose(value, ref_value, atol=5e-3, rtol=5e-3)

    # Full-fp32 PyTorch-semantics reference (looser tolerance for bf16 MXU ops).
    f32_probs, f32_value = reference_forward(state, params, hidden_dims,
                                             matmul_dtype=jnp.float32)
    assert jnp.allclose(probs, f32_probs, atol=5e-2, rtol=5e-2)
    assert jnp.allclose(value, f32_value, atol=5e-2, rtol=5e-2)

    assert jnp.allclose(jnp.sum(probs, axis=-1), 1.0, atol=5e-3)

    print("KERNEL_OK")
</pallas_src>

<mosaic_0001>
module attributes {stable_mosaic.version = 11 : i64} {
  func.func @_actor_critic_kernel(%arg0: i32, %arg1: memref<256x32xf32, #tpu.memory_space<vmem>>, %arg2: memref<32x128xbf16, #tpu.memory_space<vmem>>, %arg3: memref<3x128xf32, #tpu.memory_space<vmem>>, %arg4: memref<128x64xbf16, #tpu.memory_space<vmem>>, %arg5: memref<3x64xf32, #tpu.memory_space<vmem>>, %arg6: memref<64x128xbf16, #tpu.memory_space<vmem>>, %arg7: memref<1x128xf32, #tpu.memory_space<vmem>>, %arg8: memref<256x128xf32, #tpu.memory_space<vmem>>) attributes {dimension_semantics = [#tpu.dimension_semantics<parallel>], iteration_bounds = array<i64: 1>, scalar_prefetch = 0 : i64, scratch_operands = 0 : i64, tpu.core_type = #tpu.core_type<tc>, window_params = [{transform_indices = @transform_0, window_bounds = array<i64: 256, 32>}, {pipeline_mode = #tpu.pipeline_mode<synchronous>, transform_indices = @transform_1, window_bounds = array<i64: 32, 128>}, {pipeline_mode = #tpu.pipeline_mode<synchronous>, transform_indices = @transform_2, window_bounds = array<i64: 3, 128>}, {pipeline_mode = #tpu.pipeline_mode<synchronous>, transform_indices = @transform_3, window_bounds = array<i64: 128, 64>}, {pipeline_mode = #tpu.pipeline_mode<synchronous>, transform_indices = @transform_4, window_bounds = array<i64: 3, 64>}, {pipeline_mode = #tpu.pipeline_mode<synchronous>, transform_indices = @transform_5, window_bounds = array<i64: 64, 128>}, {pipeline_mode = #tpu.pipeline_mode<synchronous>, transform_indices = @transform_6, window_bounds = array<i64: 1, 128>}, {transform_indices = @transform_7, window_bounds = array<i64: 256, 128>}]} {
    %c0 = arith.constant 0 : index
    %c0_0 = arith.constant 0 : index
    %0 = vector.load %arg1[%c0, %c0_0] : memref<256x32xf32, #tpu.memory_space<vmem>>, vector<256x32xf32>
    %c0_1 = arith.constant 0 : index
    %c0_2 = arith.constant 0 : index
    %1 = vector.load %arg3[%c0_1, %c0_2] : memref<3x128xf32, #tpu.memory_space<vmem>>, vector<3x128xf32>
    %2 = arith.truncf %0 : vector<256x32xf32> to vector<256x32xbf16>
    %c0_3 = arith.constant 0 : index
    %c0_4 = arith.constant 0 : index
    %3 = vector.load %arg2[%c0_3, %c0_4] : memref<32x128xbf16, #tpu.memory_space<vmem>>, vector<32x128xbf16>
    %cst = arith.constant dense<0.000000e+00> : vector<256x128xf32>
    %4 = tpu.matmul %2, %3, %cst {dimension_numbers = #tpu.dot_dimension_numbers<[1], [0], [0], [1], [0, 0, 1, 1], [], []>} : vector<256x32xbf16>, vector<32x128xbf16>, vector<256x128xf32> -> vector<256x128xf32>
    %5 = vector.extract_strided_slice %1 {offsets = [0, 0], sizes = [1, 128], strides = [1, 1]} : vector<3x128xf32> to vector<1x128xf32>
    %6 = vector.broadcast %5 : vector<1x128xf32> to vector<256x128xf32>
    %7 = arith.addf %4, %6 : vector<256x128xf32>
    %cst_5 = arith.constant dense<0.000000e+00> : vector<256xf32>
    %8 = vector.multi_reduction <add>, %7, %cst_5 [1] : vector<256x128xf32> to vector<256xf32>
    %9 = vector.shape_cast %8 : vector<256xf32> to vector<256x1xf32>
    %cst_6 = arith.constant 1.280000e+02 : f32
    %10 = vector.broadcast %cst_6 : f32 to vector<256x1xf32>
    %11 = arith.divf %9, %10 : vector<256x1xf32>
    %12 = arith.mulf %7, %7 : vector<256x128xf32>
    %cst_7 = arith.constant dense<0.000000e+00> : vector<256xf32>
    %13 = vector.multi_reduction <add>, %12, %cst_7 [1] : vector<256x128xf32> to vector<256xf32>
    %14 = vector.shape_cast %13 : vector<256xf32> to vector<256x1xf32>
    %cst_8 = arith.constant 1.280000e+02 : f32
    %15 = vector.broadcast %cst_8 : f32 to vector<256x1xf32>
    %16 = arith.divf %14, %15 : vector<256x1xf32>
    %17 = arith.mulf %11, %11 : vector<256x1xf32>
    %18 = arith.subf %16, %17 : vector<256x1xf32>
    %cst_9 = arith.constant 0.000000e+00 : f32
    %19 = vector.broadcast %cst_9 : f32 to vector<256x1xf32>
    %20 = arith.maximumf %18, %19 : vector<256x1xf32>
    %cst_10 = arith.constant 9.99999974E-6 : f32
    %21 = vector.broadcast %cst_10 : f32 to vector<256x1xf32>
    %22 = arith.addf %20, %21 : vector<256x1xf32>
    %23 = math.rsqrt %22 : vector<256x1xf32>
    %24 = vector.extract_strided_slice %1 {offsets = [1, 0], sizes = [1, 128], strides = [1, 1]} : vector<3x128xf32> to vector<1x128xf32>
    %25 = vector.broadcast %23 : vector<256x1xf32> to vector<256x128xf32>
    %26 = vector.broadcast %24 : vector<1x128xf32> to vector<256x128xf32>
    %27 = arith.mulf %25, %26 : vector<256x128xf32>
    %28 = vector.extract_strided_slice %1 {offsets = [2, 0], sizes = [1, 128], strides = [1, 1]} : vector<3x128xf32> to vector<1x128xf32>
    %29 = vector.broadcast %11 : vector<256x1xf32> to vector<256x128xf32>
    %30 = arith.mulf %29, %27 : vector<256x128xf32>
    %31 = vector.broadcast %28 : vector<1x128xf32> to vector<256x128xf32>
    %32 = arith.subf %31, %30 : vector<256x128xf32>
    %33 = arith.mulf %7, %27 : vector<256x128xf32>
    %34 = arith.addf %33, %32 : vector<256x128xf32>
    %cst_11 = arith.constant 0.000000e+00 : f32
    %35 = vector.broadcast %cst_11 : f32 to vector<256x128xf32>
    %36 = arith.maximumf %34, %35 : vector<256x128xf32>
    %c0_12 = arith.constant 0 : index
    %c0_13 = arith.constant 0 : index
    %37 = vector.load %arg5[%c0_12, %c0_13] : memref<3x64xf32, #tpu.memory_space<vmem>>, vector<3x64xf32>
    %38 = arith.truncf %36 : vector<256x128xf32> to vector<256x128xbf16>
    %c0_14 = arith.constant 0 : index
    %c0_15 = arith.constant 0 : index
    %39 = vector.load %arg4[%c0_14, %c0_15] : memref<128x64xbf16, #tpu.memory_space<vmem>>, vector<128x64xbf16>
    %cst_16 = arith.constant dense<0.000000e+00> : vector<256x64xf32>
    %40 = tpu.matmul %38, %39, %cst_16 {dimension_numbers = #tpu.dot_dimension_numbers<[1], [0], [0], [1], [0, 0, 1, 1], [], []>} : vector<256x128xbf16>, vector<128x64xbf16>, vector<256x64xf32> -> vector<256x64xf32>
    %41 = vector.extract_strided_slice %37 {offsets = [0, 0], sizes = [1, 64], strides = [1, 1]} : vector<3x64xf32> to vector<1x64xf32>
    %42 = vector.broadcast %41 : vector<1x64xf32> to vector<256x64xf32>
    %43 = arith.addf %40, %42 : vector<256x64xf32>
    %cst_17 = arith.constant dense<0.000000e+00> : vector<256xf32>
    %44 = vector.multi_reduction <add>, %43, %cst_17 [1] : vector<256x64xf32> to vector<256xf32>
    %45 = vector.shape_cast %44 : vector<256xf32> to vector<256x1xf32>
    %cst_18 = arith.constant 6.400000e+01 : f32
    %46 = vector.broadcast %cst_18 : f32 to vector<256x1xf32>
    %47 = arith.divf %45, %46 : vector<256x1xf32>
    %48 = arith.mulf %43, %43 : vector<256x64xf32>
    %cst_19 = arith.constant dense<0.000000e+00> : vector<256xf32>
    %49 = vector.multi_reduction <add>, %48, %cst_19 [1] : vector<256x64xf32> to vector<256xf32>
    %50 = vector.shape_cast %49 : vector<256xf32> to vector<256x1xf32>
    %cst_20 = arith.constant 6.400000e+01 : f32
    %51 = vector.broadcast %cst_20 : f32 to vector<256x1xf32>
    %52 = arith.divf %50, %51 : vector<256x1xf32>
    %53 = arith.mulf %47, %47 : vector<256x1xf32>
    %54 = arith.subf %52, %53 : vector<256x1xf32>
    %cst_21 = arith.constant 0.000000e+00 : f32
    %55 = vector.broadcast %cst_21 : f32 to vector<256x1xf32>
    %56 = arith.maximumf %54, %55 : vector<256x1xf32>
    %cst_22 = arith.constant 9.99999974E-6 : f32
    %57 = vector.broadcast %cst_22 : f32 to vector<256x1xf32>
    %58 = arith.addf %56, %57 : vector<256x1xf32>
    %59 = math.rsqrt %58 : vector<256x1xf32>
    %60 = vector.extract_strided_slice %37 {offsets = [1, 0], sizes = [1, 64], strides = [1, 1]} : vector<3x64xf32> to vector<1x64xf32>
    %61 = vector.broadcast %59 : vector<256x1xf32> to vector<256x64xf32>
    %62 = vector.broadcast %60 : vector<1x64xf32> to vector<256x64xf32>
    %63 = arith.mulf %61, %62 : vector<256x64xf32>
    %64 = vector.extract_strided_slice %37 {offsets = [2, 0], sizes = [1, 64], strides = [1, 1]} : vector<3x64xf32> to vector<1x64xf32>
    %65 = vector.broadcast %47 : vector<256x1xf32> to vector<256x64xf32>
    %66 = arith.mulf %65, %63 : vector<256x64xf32>
    %67 = vector.broadcast %64 : vector<1x64xf32> to vector<256x64xf32>
    %68 = arith.subf %67, %66 : vector<256x64xf32>
    %69 = arith.mulf %43, %63 : vector<256x64xf32>
    %70 = arith.addf %69, %68 : vector<256x64xf32>
    %cst_23 = arith.constant 0.000000e+00 : f32
    %71 = vector.broadcast %cst_23 : f32 to vector<256x64xf32>
    %72 = arith.maximumf %70, %71 : vector<256x64xf32>
    %73 = arith.truncf %72 : vector<256x64xf32> to vector<256x64xbf16>
    %c0_24 = arith.constant 0 : index
    %c0_25 = arith.constant 0 : index
    %74 = vector.load %arg6[%c0_24, %c0_25] : memref<64x128xbf16, #tpu.memory_space<vmem>>, vector<64x128xbf16>
    %cst_26 = arith.constant dense<0.000000e+00> : vector<256x128xf32>
    %75 = tpu.matmul %73, %74, %cst_26 {dimension_numbers = #tpu.dot_dimension_numbers<[1], [0], [0], [1], [0, 0, 1, 1], [], []>} : vector<256x64xbf16>, vector<64x128xbf16>, vector<256x128xf32> -> vector<256x128xf32>
    %c0_27 = arith.constant 0 : index
    %c0_28 = arith.constant 0 : index
    %76 = vector.load %arg7[%c0_27, %c0_28] : memref<1x128xf32, #tpu.memory_space<vmem>>, vector<1x128xf32>
    %77 = vector.broadcast %76 : vector<1x128xf32> to vector<256x128xf32>
    %78 = arith.addf %75, %77 : vector<256x128xf32>
    %79 = tpu.iota {dimensions = array<i32: 1>} : vector<256x128xi32>
    %c4_i32 = arith.constant 4 : i32
    %80 = vector.broadcast %c4_i32 : i32 to vector<256x128xi32>
    %81 = arith.cmpi slt, %79, %80 : vector<256x128xi32>
    %cst_29 = arith.constant 0xFF800000 : f32
    %82 = vector.broadcast %cst_29 : f32 to vector<256x128xf32>
    %83 = arith.select %81, %78, %82 : vector<256x128xi1>, vector<256x128xf32>
    %cst_30 = arith.constant dense<0xFF800000> : vector<256xf32>
    %84 = vector.multi_reduction <maximumf>, %83, %cst_30 [1] : vector<256x128xf32> to vector<256xf32>
    %85 = vector.shape_cast %84 : vector<256xf32> to vector<256x1xf32>
    %86 = vector.broadcast %85 : vector<256x1xf32> to vector<256x128xf32>
    %87 = arith.subf %83, %86 : vector<256x128xf32>
    %88 = math.exp %87 : vector<256x128xf32>
    %cst_31 = arith.constant dense<0.000000e+00> : vector<256xf32>
    %89 = vector.multi_reduction <add>, %88, %cst_31 [1] : vector<256x128xf32> to vector<256xf32>
    %90 = vector.shape_cast %89 : vector<256xf32> to vector<256x1xf32>
    %91 = tpu.reciprocal %90 {approx = true} : vector<256x1xf32> -> vector<256x1xf32>
    %92 = vector.broadcast %91 : vector<256x1xf32> to vector<256x128xf32>
    %93 = arith.mulf %88, %92 : vector<256x128xf32>
    %c4_i32_32 = arith.constant 4 : i32
    %94 = vector.broadcast %c4_i32_32 : i32 to vector<256x128xi32>
    %95 = arith.cmpi eq, %79, %94 : vector<256x128xi32>
    %96 = arith.select %95, %78, %93 : vector<256x128xi1>, vector<256x128xf32>
    %c0_33 = arith.constant 0 : index
    %c0_34 = arith.constant 0 : index
    %97 = vector.load %arg8[%c0_33, %c0_34] : memref<256x128xf32, #tpu.memory_space<vmem>>, vector<256x128xf32>
    tpu.vector_store %arg8[%c0_33, %c0_34], %96 {strides = array<i32>} : memref<256x128xf32, #tpu.memory_space<vmem>>, vector<256x128xf32>,
    return
  }
  func.func @transform_0(%arg0: i32) -> (i32, i32) {
    %c0_i32 = arith.constant 0 : i32
    %c0_i32_0 = arith.constant 0 : i32
    return %arg0, %c0_i32 : i32, i32
  }
  func.func @transform_1(%arg0: i32) -> (i32, i32) {
    %c0_i32 = arith.constant 0 : i32
    %c0_i32_0 = arith.constant 0 : i32
    %c0_i32_1 = arith.constant 0 : i32
    return %c0_i32, %c0_i32_0 : i32, i32
  }
  func.func @transform_2(%arg0: i32) -> (i32, i32) {
    %c0_i32 = arith.constant 0 : i32
    %c0_i32_0 = arith.constant 0 : i32
    %c0_i32_1 = arith.constant 0 : i32
    return %c0_i32, %c0_i32_0 : i32, i32
  }
  func.func @transform_3(%arg0: i32) -> (i32, i32) {
    %c0_i32 = arith.constant 0 : i32
    %c0_i32_0 = arith.constant 0 : i32
    %c0_i32_1 = arith.constant 0 : i32
    return %c0_i32, %c0_i32_0 : i32, i32
  }
  func.func @transform_4(%arg0: i32) -> (i32, i32) {
    %c0_i32 = arith.constant 0 : i32
    %c0_i32_0 = arith.constant 0 : i32
    %c0_i32_1 = arith.constant 0 : i32
    return %c0_i32, %c0_i32_0 : i32, i32
  }
  func.func @transform_5(%arg0: i32) -> (i32, i32) {
    %c0_i32 = arith.constant 0 : i32
    %c0_i32_0 = arith.constant 0 : i32
    %c0_i32_1 = arith.constant 0 : i32
    return %c0_i32, %c0_i32_0 : i32, i32
  }
  func.func @transform_6(%arg0: i32) -> (i32, i32) {
    %c0_i32 = arith.constant 0 : i32
    %c0_i32_0 = arith.constant 0 : i32
    %c0_i32_1 = arith.constant 0 : i32
    return %c0_i32, %c0_i32_0 : i32, i32
  }
  func.func @transform_7(%arg0: i32) -> (i32, i32) {
    %c0_i32 = arith.constant 0 : i32
    %c0_i32_0 = arith.constant 0 : i32
    return %arg0, %c0_i32 : i32, i32
  }
}

module attributes {stable_mosaic.version = 11 : i64} {
  func.func @_actor_critic_kernel(%arg0: i32, %arg1: memref<256x32xf32, #tpu.memory_space<vmem>>, %arg2: memref<32x128xbf16, #tpu.memory_space<vmem>>, %arg3: memref<3x128xf32, #tpu.memory_space<vmem>>, %arg4: memref<128x64xbf16, #tpu.memory_space<vmem>>, %arg5: memref<3x64xf32, #tpu.memory_space<vmem>>, %arg6: memref<64x128xbf16, #tpu.memory_space<vmem>>, %arg7: memref<1x128xf32, #tpu.memory_space<vmem>>, %arg8: memref<256x128xf32, #tpu.memory_space<vmem>>) attributes {dimension_semantics = [#tpu.dimension_semantics<parallel>], iteration_bounds = array<i64: 1>, scalar_prefetch = 0 : i64, scratch_operands = 0 : i64, tpu.core_type = #tpu.core_type<tc>, window_params = [{transform_indices = @transform_0, window_bounds = array<i64: 256, 32>}, {pipeline_mode = #tpu.pipeline_mode<synchronous>, transform_indices = @transform_1, window_bounds = array<i64: 32, 128>}, {pipeline_mode = #tpu.pipeline_mode<synchronous>, transform_indices = @transform_2, window_bounds = array<i64: 3, 128>}, {pipeline_mode = #tpu.pipeline_mode<synchronous>, transform_indices = @transform_3, window_bounds = array<i64: 128, 64>}, {pipeline_mode = #tpu.pipeline_mode<synchronous>, transform_indices = @transform_4, window_bounds = array<i64: 3, 64>}, {pipeline_mode = #tpu.pipeline_mode<synchronous>, transform_indices = @transform_5, window_bounds = array<i64: 64, 128>}, {pipeline_mode = #tpu.pipeline_mode<synchronous>, transform_indices = @transform_6, window_bounds = array<i64: 1, 128>}, {transform_indices = @transform_7, window_bounds = array<i64: 256, 128>}]} {
    %c0 = arith.constant 0 : index
    %c0_0 = arith.constant 0 : index
    %0 = vector.load %arg1[%c0, %c0_0] : memref<256x32xf32, #tpu.memory_space<vmem>>, vector<256x32xf32>
    %c0_1 = arith.constant 0 : index
    %c0_2 = arith.constant 0 : index
    %1 = vector.load %arg3[%c0_1, %c0_2] : memref<3x128xf32, #tpu.memory_space<vmem>>, vector<3x128xf32>
    %2 = arith.truncf %0 : vector<256x32xf32> to vector<256x32xbf16>
    %c0_3 = arith.constant 0 : index
    %c0_4 = arith.constant 0 : index
    %3 = vector.load %arg2[%c0_3, %c0_4] : memref<32x128xbf16, #tpu.memory_space<vmem>>, vector<32x128xbf16>
    %cst = arith.constant dense<0.000000e+00> : vector<256x128xf32>
    %4 = tpu.matmul %2, %3, %cst {dimension_numbers = #tpu.dot_dimension_numbers<[1], [0], [0], [1], [0, 0, 1, 1], [], []>} : vector<256x32xbf16>, vector<32x128xbf16>, vector<256x128xf32> -> vector<256x128xf32>
    %5 = vector.extract_strided_slice %1 {offsets = [0, 0], sizes = [1, 128], strides = [1, 1]} : vector<3x128xf32> to vector<1x128xf32>
    %6 = vector.broadcast %5 : vector<1x128xf32> to vector<256x128xf32>
    %7 = arith.addf %4, %6 : vector<256x128xf32>
    %cst_5 = arith.constant dense<0.000000e+00> : vector<256xf32>
    %8 = vector.multi_reduction <add>, %7, %cst_5 [1] : vector<256x128xf32> to vector<256xf32>
    %9 = vector.shape_cast %8 : vector<256xf32> to vector<256x1xf32>
    %cst_6 = arith.constant 1.280000e+02 : f32
    %10 = vector.broadcast %cst_6 : f32 to vector<256x1xf32>
    %11 = arith.divf %9, %10 : vector<256x1xf32>
    %12 = arith.mulf %7, %7 : vector<256x128xf32>
    %cst_7 = arith.constant dense<0.000000e+00> : vector<256xf32>
    %13 = vector.multi_reduction <add>, %12, %cst_7 [1] : vector<256x128xf32> to vector<256xf32>
    %14 = vector.shape_cast %13 : vector<256xf32> to vector<256x1xf32>
    %cst_8 = arith.constant 1.280000e+02 : f32
    %15 = vector.broadcast %cst_8 : f32 to vector<256x1xf32>
    %16 = arith.divf %14, %15 : vector<256x1xf32>
    %17 = arith.mulf %11, %11 : vector<256x1xf32>
    %18 = arith.subf %16, %17 : vector<256x1xf32>
    %cst_9 = arith.constant 0.000000e+00 : f32
    %19 = vector.broadcast %cst_9 : f32 to vector<256x1xf32>
    %20 = arith.maximumf %18, %19 : vector<256x1xf32>
    %cst_10 = arith.constant 9.99999974E-6 : f32
    %21 = vector.broadcast %cst_10 : f32 to vector<256x1xf32>
    %22 = arith.addf %20, %21 : vector<256x1xf32>
    %23 = math.rsqrt %22 : vector<256x1xf32>
    %24 = vector.extract_strided_slice %1 {offsets = [1, 0], sizes = [1, 128], strides = [1, 1]} : vector<3x128xf32> to vector<1x128xf32>
    %25 = vector.broadcast %23 : vector<256x1xf32> to vector<256x128xf32>
    %26 = vector.broadcast %24 : vector<1x128xf32> to vector<256x128xf32>
    %27 = arith.mulf %25, %26 : vector<256x128xf32>
    %28 = vector.extract_strided_slice %1 {offsets = [2, 0], sizes = [1, 128], strides = [1, 1]} : vector<3x128xf32> to vector<1x128xf32>
    %29 = vector.broadcast %11 : vector<256x1xf32> to vector<256x128xf32>
    %30 = arith.mulf %29, %27 : vector<256x128xf32>
    %31 = vector.broadcast %28 : vector<1x128xf32> to vector<256x128xf32>
    %32 = arith.subf %31, %30 : vector<256x128xf32>
    %33 = arith.mulf %7, %27 : vector<256x128xf32>
    %34 = arith.addf %33, %32 : vector<256x128xf32>
    %cst_11 = arith.constant 0.000000e+00 : f32
    %35 = vector.broadcast %cst_11 : f32 to vector<256x128xf32>
    %36 = arith.maximumf %34, %35 : vector<256x128xf32>
    %c0_12 = arith.constant 0 : index
    %c0_13 = arith.constant 0 : index
    %37 = vector.load %arg5[%c0_12, %c0_13] : memref<3x64xf32, #tpu.memory_space<vmem>>, vector<3x64xf32>
    %38 = arith.truncf %36 : vector<256x128xf32> to vector<256x128xbf16>
    %c0_14 = arith.constant 0 : index
    %c0_15 = arith.constant 0 : index
    %39 = vector.load %arg4[%c0_14, %c0_15] : memref<128x64xbf16, #tpu.memory_space<vmem>>, vector<128x64xbf16>
    %cst_16 = arith.constant dense<0.000000e+00> : vector<256x64xf32>
    %40 = tpu.matmul %38, %39, %cst_16 {dimension_numbers = #tpu.dot_dimension_numbers<[1], [0], [0], [1], [0, 0, 1, 1], [], []>} : vector<256x128xbf16>, vector<128x64xbf16>, vector<256x64xf32> -> vector<256x64xf32>
    %41 = vector.extract_strided_slice %37 {offsets = [0, 0], sizes = [1, 64], strides = [1, 1]} : vector<3x64xf32> to vector<1x64xf32>
    %42 = vector.broadcast %41 : vector<1x64xf32> to vector<256x64xf32>
    %43 = arith.addf %40, %42 : vector<256x64xf32>
    %cst_17 = arith.constant dense<0.000000e+00> : vector<256xf32>
    %44 = vector.multi_reduction <add>, %43, %cst_17 [1] : vector<256x64xf32> to vector<256xf32>
    %45 = vector.shape_cast %44 : vector<256xf32> to vector<256x1xf32>
    %cst_18 = arith.constant 6.400000e+01 : f32
    %46 = vector.broadcast %cst_18 : f32 to vector<256x1xf32>
    %47 = arith.divf %45, %46 : vector<256x1xf32>
    %48 = arith.mulf %43, %43 : vector<256x64xf32>
    %cst_19 = arith.constant dense<0.000000e+00> : vector<256xf32>
    %49 = vector.multi_reduction <add>, %48, %cst_19 [1] : vector<256x64xf32> to vector<256xf32>
    %50 = vector.shape_cast %49 : vector<256xf32> to vector<256x1xf32>
    %cst_20 = arith.constant 6.400000e+01 : f32
    %51 = vector.broadcast %cst_20 : f32 to vector<256x1xf32>
    %52 = arith.divf %50, %51 : vector<256x1xf32>
    %53 = arith.mulf %47, %47 : vector<256x1xf32>
    %54 = arith.subf %52, %53 : vector<256x1xf32>
    %cst_21 = arith.constant 0.000000e+00 : f32
    %55 = vector.broadcast %cst_21 : f32 to vector<256x1xf32>
    %56 = arith.maximumf %54, %55 : vector<256x1xf32>
    %cst_22 = arith.constant 9.99999974E-6 : f32
    %57 = vector.broadcast %cst_22 : f32 to vector<256x1xf32>
    %58 = arith.addf %56, %57 : vector<256x1xf32>
    %59 = math.rsqrt %58 : vector<256x1xf32>
    %60 = vector.extract_strided_slice %37 {offsets = [1, 0], sizes = [1, 64], strides = [1, 1]} : vector<3x64xf32> to vector<1x64xf32>
    %61 = vector.broadcast %59 : vector<256x1xf32> to vector<256x64xf32>
    %62 = vector.broadcast %60 : vector<1x64xf32> to vector<256x64xf32>
    %63 = arith.mulf %61, %62 : vector<256x64xf32>
    %64 = vector.extract_strided_slice %37 {offsets = [2, 0], sizes = [1, 64], strides = [1, 1]} : vector<3x64xf32> to vector<1x64xf32>
    %65 = vector.broadcast %47 : vector<256x1xf32> to vector<256x64xf32>
    %66 = arith.mulf %65, %63 : vector<256x64xf32>
    %67 = vector.broadcast %64 : vector<1x64xf32> to vector<256x64xf32>
    %68 = arith.subf %67, %66 : vector<256x64xf32>
    %69 = arith.mulf %43, %63 : vector<256x64xf32>
    %70 = arith.addf %69, %68 : vector<256x64xf32>
    %cst_23 = arith.constant 0.000000e+00 : f32
    %71 = vector.broadcast %cst_23 : f32 to vector<256x64xf32>
    %72 = arith.maximumf %70, %71 : vector<256x64xf32>
    %73 = arith.truncf %72 : vector<256x64xf32> to vector<256x64xbf16>
    %c0_24 = arith.constant 0 : index
    %c0_25 = arith.constant 0 : index
    %74 = vector.load %arg6[%c0_24, %c0_25] : memref<64x128xbf16, #tpu.memory_space<vmem>>, vector<64x128xbf16>
    %cst_26 = arith.constant dense<0.000000e+00> : vector<256x128xf32>
    %75 = tpu.matmul %73, %74, %cst_26 {dimension_numbers = #tpu.dot_dimension_numbers<[1], [0], [0], [1], [0, 0, 1, 1], [], []>} : vector<256x64xbf16>, vector<64x128xbf16>, vector<256x128xf32> -> vector<256x128xf32>
    %c0_27 = arith.constant 0 : index
    %c0_28 = arith.constant 0 : index
    %76 = vector.load %arg7[%c0_27, %c0_28] : memref<1x128xf32, #tpu.memory_space<vmem>>, vector<1x128xf32>
    %77 = vector.broadcast %76 : vector<1x128xf32> to vector<256x128xf32>
    %78 = arith.addf %75, %77 : vector<256x128xf32>
    %79 = tpu.iota {dimensions = array<i32: 1>} : vector<256x128xi32>
    %c4_i32 = arith.constant 4 : i32
    %80 = vector.broadcast %c4_i32 : i32 to vector<256x128xi32>
    %81 = arith.cmpi slt, %79, %80 : vector<256x128xi32>
    %cst_29 = arith.constant 0xFF800000 : f32
    %82 = vector.broadcast %cst_29 : f32 to vector<256x128xf32>
    %83 = arith.select %81, %78, %82 : vector<256x128xi1>, vector<256x128xf32>
    %cst_30 = arith.constant dense<0xFF800000> : vector<256xf32>
    %84 = vector.multi_reduction <maximumf>, %83, %cst_30 [1] : vector<256x128xf32> to vector<256xf32>
    %85 = vector.shape_cast %84 : vector<256xf32> to vector<256x1xf32>
    %86 = vector.broadcast %85 : vector<256x1xf32> to vector<256x128xf32>
    %87 = arith.subf %83, %86 : vector<256x128xf32>
    %88 = math.exp %87 : vector<256x128xf32>
    %cst_31 = arith.constant dense<0.000000e+00> : vector<256xf32>
    %89 = vector.multi_reduction <add>, %88, %cst_31 [1] : vector<256x128xf32> to vector<256xf32>
    %90 = vector.shape_cast %89 : vector<256xf32> to vector<256x1xf32>
    %91 = tpu.reciprocal %90 {approx = true} : vector<256x1xf32> -> vector<256x1xf32>
    %92 = vector.broadcast %91 : vector<256x1xf32> to vector<256x128xf32>
    %93 = arith.mulf %88, %92 : vector<256x128xf32>
    %c4_i32_32 = arith.constant 4 : i32
    %94 = vector.broadcast %c4_i32_32 : i32 to vector<256x128xi32>
    %95 = arith.cmpi eq, %79, %94 : vector<256x128xi32>
    %96 = arith.select %95, %78, %93 : vector<256x128xi1>, vector<256x128xf32>
    %c0_33 = arith.constant 0 : index
    %c0_34 = arith.constant 0 : index
    %97 = vector.load %arg8[%c0_33, %c0_34] : memref<256x128xf32, #tpu.memory_space<vmem>>, vector<256x128xf32>
    tpu.vector_store %arg8[%c0_33, %c0_34], %96 {strides = array<i32>} : memref<256x128xf32, #tpu.memory_space<vmem>>, vector<256x128xf32>,
    return
  }
  func.func @transform_0(%arg0: i32) -> (i32, i32) {
    %c0_i32 = arith.constant 0 : i32
    %c0_i32_0 = arith.constant 0 : i32
    return %arg0, %c0_i32 : i32, i32
  }
  func.func @transform_1(%arg0: i32) -> (i32, i32) {
    %c0_i32 = arith.constant 0 : i32
    %c0_i32_0 = arith.constant 0 : i32
    %c0_i32_1 = arith.constant 0 : i32
    return %c0_i32, %c0_i32_0 : i32, i32
  }
  func.func @transform_2(%arg0: i32) -> (i32, i32) {
    %c0_i32 = arith.constant 0 : i32
    %c0_i32_0 = arith.constant 0 : i32
    %c0_i32_1 = arith.constant 0 : i32
    return %c0_i32, %c0_i32_0 : i32, i32
  }
  func.func @transform_3(%arg0: i32) -> (i32, i32) {
    %c0_i32 = arith.constant 0 : i32
    %c0_i32_0 = arith.constant 0 : i32
    %c0_i32_1 = arith.constant 0 : i32
    return %c0_i32, %c0_i32_0 : i32, i32
  }
  func.func @transform_4(%arg0: i32) -> (i32, i32) {
    %c0_i32 = arith.constant 0 : i32
    %c0_i32_0 = arith.constant 0 : i32
    %c0_i32_1 = arith.constant 0 : i32
    return %c0_i32, %c0_i32_0 : i32, i32
  }
  func.func @transform_5(%arg0: i32) -> (i32, i32) {
    %c0_i32 = arith.constant 0 : i32
    %c0_i32_0 = arith.constant 0 : i32
    %c0_i32_1 = arith.constant 0 : i32
    return %c0_i32, %c0_i32_0 : i32, i32
  }
  func.func @transform_6(%arg0: i32) -> (i32, i32) {
    %c0_i32 = arith.constant 0 : i32
    %c0_i32_0 = arith.constant 0 : i32
    %c0_i32_1 = arith.constant 0 : i32
    return %c0_i32, %c0_i32_0 : i32, i32
  }
  func.func @transform_7(%arg0: i32) -> (i32, i32) {
    %c0_i32 = arith.constant 0 : i32
    %c0_i32_0 = arith.constant 0 : i32
    return %arg0, %c0_i32 : i32, i32
  }
}

</mosaic_0001>

<llo_original>
// kernel: tpu_custom_call.1
$region0: #{tpu_custom_call.1}
  #allocation0 [shape = 'u32[]', space=smem, size = 0x4, offset = 0x4, fixed_abs, tag = 'smem constant byte address 0x4 - core index']
  #allocation1 [shape = 'u32[144,128]{1,0:T(1,128)}', space=vmem, size = 0x12000, scoped, tag = 'internal scratch']
  %s0 = inlined_call_operand.vmem [shape: f32[256,32], index: 0, kind: input, shape index: {}]
  %s1 = inlined_call_operand.vmem [shape: bf16[32,128], index: 1, kind: input, shape index: {}]
  %s2 = inlined_call_operand.vmem [shape: f32[3,128], index: 2, kind: input, shape index: {}]
  %s3 = inlined_call_operand.vmem [shape: bf16[128,64], index: 3, kind: input, shape index: {}]
  %s4 = inlined_call_operand.vmem [shape: f32[3,64], index: 4, kind: input, shape index: {}]
  %s5 = inlined_call_operand.vmem [shape: bf16[64,128], index: 5, kind: input, shape index: {}]
  %s6 = inlined_call_operand.vmem [shape: f32[1,128], index: 6, kind: input, shape index: {}]
  %s7 = inlined_call_operand.hbm [shape: f32[256,128], index: 7, kind: output, shape index: {}]
  %s8 = sld [smem:[#allocation0]]
  $region38: #{tpu_custom_call.1} parent=0
    _
  %s10 = ssub.s32 1, %s8
  %s11 = scalar_select 0, %s10, %s8
  $region1: #{tpu_custom_call.1} parent=0
    #allocation2 [shape = 'u8[131072]{0}', space=vmem, size = 0x20000, scoped, tag = 'output window, operand 0, single buffered']
    #allocation3 [shape = 's32[1]{0}', space=sflag, size = 0x4, scoped, tag = 'scoped memory for tpu_custom_call.1']
    %12 = vsyncpa [#allocation3], 0
    // Predicated region
    $region2: #{tpu_custom_call.1} parent=1 // pred_check
      _
    $region3: #{tpu_custom_call.1} parent=1 // pred_check_branch
      %14 = sbr.rel (0) target = $region5
    $region4: #{tpu_custom_call.1} parent=1 // pred_region
      _
    $region5: #{tpu_custom_call.1} parent=1 // pred_fallthru
      _
    // Predicated region
    $region6: #{tpu_custom_call.1} parent=1 // pred_check
      _
    $region7: #{tpu_custom_call.1} parent=1 // pred_check_branch
      %16 = sbr.rel (0) target = $region9
    $region8: #{tpu_custom_call.1} parent=1 // pred_region
      _
    $region9: #{tpu_custom_call.1} parent=1 // pred_fallthru
      _
    // Predicated region
    $region10: #{tpu_custom_call.1} parent=1 // pred_check
      _
    $region11: #{tpu_custom_call.1} parent=1 // pred_check_branch
      %18 = sbr.rel (0) target = $region13
    $region12: #{tpu_custom_call.1} parent=1 // pred_region
      _
    $region13: #{tpu_custom_call.1} parent=1 // pred_fallthru
      _
    // Predicated region
    $region14: #{tpu_custom_call.1} parent=1 // pred_check
      _
    $region15: #{tpu_custom_call.1} parent=1 // pred_check_branch
      %20 = sbr.rel (0) target = $region17
    $region16: #{tpu_custom_call.1} parent=1 // pred_region
      _
    $region17: #{tpu_custom_call.1} parent=1 // pred_fallthru
      _
    // Predicated region
    $region18: #{tpu_custom_call.1} parent=1 // pred_check
      _
    $region19: #{tpu_custom_call.1} parent=1 // pred_check_branch
      %22 = sbr.rel (0) target = $region21
    $region20: #{tpu_custom_call.1} parent=1 // pred_region
      _
    $region21: #{tpu_custom_call.1} parent=1 // pred_fallthru
      _
    // Predicated region
    $region22: #{tpu_custom_call.1} parent=1 // pred_check
      _
    $region23: #{tpu_custom_call.1} parent=1 // pred_check_branch
      %24 = sbr.rel (0) target = $region25
    $region24: #{tpu_custom_call.1} parent=1 // pred_region
      _
    $region25: #{tpu_custom_call.1} parent=1 // pred_fallthru
      _
    // Predicated region
    $region26: #{tpu_custom_call.1} parent=1 // pred_check
      _
    $region27: #{tpu_custom_call.1} parent=1 // pred_check_branch
      %26 = sbr.rel (0) target = $region29
    $region28: #{tpu_custom_call.1} parent=1 // pred_region
      _
    $region29: #{tpu_custom_call.1} parent=1 // pred_fallthru
      _
    %v28 = vld [vmem:[%s0] sm:$0xff]
    %v29 = vld [vmem:[%s0 + $0x8] sm:$0xff]
    %v30 = vld [vmem:[%s0 + $0x10] sm:$0xff]
    %v31 = vld [vmem:[%s0 + $0x18] sm:$0xff]
    %v32 = vld [vmem:[%s0 + $0x20] sm:$0xff]
    %v33 = vld [vmem:[%s0 + $0x28] sm:$0xff]
    %v34 = vld [vmem:[%s0 + $0x30] sm:$0xff]
    %v35 = vld [vmem:[%s0 + $0x38] sm:$0xff]
    %v36 = vld [vmem:[%s0 + $0x40] sm:$0xff]
    %v37 = vld [vmem:[%s0 + $0x48] sm:$0xff]
    %v38 = vld [vmem:[%s0 + $0x50] sm:$0xff]
    %v39 = vld [vmem:[%s0 + $0x58] sm:$0xff]
    %v40 = vld [vmem:[%s0 + $0x60] sm:$0xff]
    %v41 = vld [vmem:[%s0 + $0x68] sm:$0xff]
    %v42 = vld [vmem:[%s0 + $0x70] sm:$0xff]
    %v43 = vld [vmem:[%s0 + $0x78] sm:$0xff]
    %v44 = vld [vmem:[%s0 + $0x80] sm:$0xff]
    %v45 = vld [vmem:[%s0 + $0x88] sm:$0xff]
    %v46 = vld [vmem:[%s0 + $0x90] sm:$0xff]
    %v47 = vld [vmem:[%s0 + $0x98] sm:$0xff]
    %v48 = vld [vmem:[%s0 + $0xa0] sm:$0xff]
    %v49 = vld [vmem:[%s0 + $0xa8] sm:$0xff]
    %v50 = vld [vmem:[%s0 + $0xb0] sm:$0xff]
    %v51 = vld [vmem:[%s0 + $0xb8] sm:$0xff]
    %v52 = vld [vmem:[%s0 + $0xc0] sm:$0xff]
    %v53 = vld [vmem:[%s0 + $0xc8] sm:$0xff]
    %v54 = vld [vmem:[%s0 + $0xd0] sm:$0xff]
    %v55 = vld [vmem:[%s0 + $0xd8] sm:$0xff]
    %v56 = vld [vmem:[%s0 + $0xe0] sm:$0xff]
    %v57 = vld [vmem:[%s0 + $0xe8] sm:$0xff]
    %v58 = vld [vmem:[%s0 + $0xf0] sm:$0xff]
    %v59 = vld [vmem:[%s0 + $0xf8] sm:$0xff]
    %v60 = vld [vmem:[%s2] sm:$0x7]
    %v61 = vpack.c.bf16 %v29, %v28
    %v62 = vpack.c.bf16 %v31, %v30
    %v63 = vpack.c.bf16 %v33, %v32
    %v64 = vpack.c.bf16 %v35, %v34
    %v65 = vpack.c.bf16 %v37, %v36
    %v66 = vpack.c.bf16 %v39, %v38
    %v67 = vpack.c.bf16 %v41, %v40
    %v68 = vpack.c.bf16 %v43, %v42
    %v69 = vpack.c.bf16 %v45, %v44
    %v70 = vpack.c.bf16 %v47, %v46
    %v71 = vpack.c.bf16 %v49, %v48
    %v72 = vpack.c.bf16 %v51, %v50
    %v73 = vpack.c.bf16 %v53, %v52
    %v74 = vpack.c.bf16 %v55, %v54
    %v75 = vpack.c.bf16 %v57, %v56
    %v76 = vpack.c.bf16 %v59, %v58
    %v77 = vld [vmem:[%s1] sm:$0xf]
    %v78 = vld [vmem:[%s1 + $0x4] sm:$0xf]
    %v79 = vld [vmem:[%s1 + $0x8] sm:$0xf]
    %v80 = vld [vmem:[%s1 + $0xc] sm:$0xf]
    %v81 = vlaneseq
    %v82 = vshrl.u32 %v81, 7
    %v83 = vsub.s32 0, %v82
    %v84 = vrot.slane %v60, %v83
    %v89 = vunpack.c.l.b16 %v77
    %v90 = vunpack.c.l.b16 %v78
    %v91 = vunpack.c.l.b16 %v79
    %v92 = vunpack.c.l.b16 %v80
    %v93 = vpack.c.b16 %v90, %v89
    %v94 = vpack.c.b16 %v92, %v91
    %vm97 = vcmask 261120
    %v99 = vsel %vm97, %v61, 0
    %v102 = vsel %vm97, %v62, 0
    %v105 = vsel %vm97, %v63, 0
    %v108 = vsel %vm97, %v64, 0
    %v111 = vsel %vm97, %v65, 0
    %v114 = vsel %vm97, %v66, 0
    %v117 = vsel %vm97, %v67, 0
    %v120 = vsel %vm97, %v68, 0
    %v123 = vsel %vm97, %v69, 0
    %v126 = vsel %vm97, %v70, 0
    %v129 = vsel %vm97, %v71, 0
    %v132 = vsel %vm97, %v72, 0
    %v135 = vsel %vm97, %v73, 0
    %v138 = vsel %vm97, %v74, 0
    %v141 = vsel %vm97, %v75, 0
    %v144 = vsel %vm97, %v76, 0
    %146 = vmatprep.subr.bf16.mxu0 0
    %147 = vmatpush1.bf16.msra.mxu0 %v93
    %148 = vmatprep.subr.bf16.mxu0 0
    %149 = vmatpush1.bf16.msra.mxu0 %v94
    %150 = vmatprep.subr.bf16.mxu0 0
    %151 = vmatpush1.bf16.msra.mxu0 0
    %152 = vmatprep.subr.bf16.mxu0 0
    %153 = vmatpush1.bf16.msra.mxu0 0
    %154 = vmatprep.subr.bf16.mxu0 0
    %155 = vmatpush1.bf16.msra.mxu0 0
    %156 = vmatprep.subr.bf16.mxu0 0
    %157 = vmatpush1.bf16.msra.mxu0 0
    %158 = vmatprep.subr.bf16.mxu0 0
    %159 = vmatpush1.bf16.msra.mxu0 0
    %160 = vmatprep.subr.bf16.mxu0 0
    %161 = vmatpush1.bf16.msra.mxu0 0
    %162 = vmatprep.subr.bf16.mxu0 0
    %163 = vmatpush1.bf16.msra.mxu0 0
    %164 = vmatprep.subr.bf16.mxu0 0
    %165 = vmatpush1.bf16.msra.mxu0 0
    %166 = vmatprep.subr.bf16.mxu0 0
    %167 = vmatpush1.bf16.msra.mxu0 0
    %168 = vmatprep.subr.bf16.mxu0 0
    %169 = vmatpush1.bf16.msra.mxu0 0
    %170 = vmatprep.subr.bf16.mxu0 0
    %171 = vmatpush1.bf16.msra.mxu0 0
    %172 = vmatprep.subr.bf16.mxu0 0
    %173 = vmatpush1.bf16.msra.mxu0 0
    %174 = vmatprep.subr.bf16.mxu0 0
    %175 = vmatpush1.bf16.msra.mxu0 0
    %176 = vmatprep.subr.bf16.mxu0 0
    %177 = vmatpush1.bf16.msra.mxu0 0
    %178 = vmatprep.mubr.bf16.mxu0 0
    %179 = vmatmul.mubr.bf16.gmra.mrb[0].mxu0 %v99
    %v180 = vpop.f32.mrb[0].mxu0
    %v181 = vadd.f32 %v84, %v180
    %v182 = vpop.f32.mrb[0].mxu0
    %v183 = vpop.f32.mrb[0].mxu0
    %v184 = vadd.f32 %v84, %v183
    %v185 = vpop.f32.mrb[0].mxu0
    %186 = vmatprep.mubr.bf16.mxu0 0
    %187 = vmatmul.mubr.bf16.gmra.mrb[0].mxu0 %v102
    %v188 = vpop.f32.mrb[0].mxu0
    %v189 = vadd.f32 %v84, %v188
    %v190 = vpop.f32.mrb[0].mxu0
    %v191 = vpop.f32.mrb[0].mxu0
    %v192 = vadd.f32 %v84, %v191
    %v193 = vpop.f32.mrb[0].mxu0
    %194 = vmatprep.mubr.bf16.mxu0 0
    %195 = vmatmul.mubr.bf16.gmra.mrb[0].mxu0 %v105
    %v196 = vpop.f32.mrb[0].mxu0
    %v197 = vadd.f32 %v84, %v196
    %v198 = vpop.f32.mrb[0].mxu0
    %v199 = vpop.f32.mrb[0].mxu0
    %v200 = vadd.f32 %v84, %v199
    %v201 = vpop.f32.mrb[0].mxu0
    %202 = vmatprep.mubr.bf16.mxu0 0
    %203 = vmatmul.mubr.bf16.gmra.mrb[0].mxu0 %v108
    %v204 = vpop.f32.mrb[0].mxu0
    %v205 = vadd.f32 %v84, %v204
    %v206 = vpop.f32.mrb[0].mxu0
    %v207 = vpop.f32.mrb[0].mxu0
    %v208 = vadd.f32 %v84, %v207
    %v209 = vpop.f32.mrb[0].mxu0
    %210 = vmatprep.mubr.bf16.mxu0 0
    %211 = vmatmul.mubr.bf16.gmra.mrb[0].mxu0 %v111
    %v212 = vpop.f32.mrb[0].mxu0
    %v213 = vadd.f32 %v84, %v212
    %v214 = vpop.f32.mrb[0].mxu0
    %v215 = vpop.f32.mrb[0].mxu0
    %v216 = vadd.f32 %v84, %v215
    %v217 = vpop.f32.mrb[0].mxu0
    %218 = vmatprep.mubr.bf16.mxu0 0
    %219 = vmatmul.mubr.bf16.gmra.mrb[0].mxu0 %v114
    %v220 = vpop.f32.mrb[0].mxu0
    %v221 = vadd.f32 %v84, %v220
    %v222 = vpop.f32.mrb[0].mxu0
    %v223 = vpop.f32.mrb[0].mxu0
    %v224 = vadd.f32 %v84, %v223
    %v225 = vpop.f32.mrb[0].mxu0
    %226 = vmatprep.mubr.bf16.mxu0 0
    %227 = vmatmul.mubr.bf16.gmra.mrb[0].mxu0 %v117
    %v228 = vpop.f32.mrb[0].mxu0
    %v229 = vadd.f32 %v84, %v228
    %v230 = vpop.f32.mrb[0].mxu0
    %v231 = vpop.f32.mrb[0].mxu0
    %v232 = vadd.f32 %v84, %v231
    %v233 = vpop.f32.mrb[0].mxu0
    %234 = vmatprep.mubr.bf16.mxu0 0
    %235 = vmatmul.mubr.bf16.gmra.mrb[0].mxu0 %v120
    %v236 = vpop.f32.mrb[0].mxu0
    %v237 = vadd.f32 %v84, %v236
    %v238 = vpop.f32.mrb[0].mxu0
    %v239 = vpop.f32.mrb[0].mxu0
    %v240 = vadd.f32 %v84, %v239
    %v241 = vpop.f32.mrb[0].mxu0
    %242 = vmatprep.mubr.bf16.mxu0 0
    %243 = vmatmul.mubr.bf16.gmra.mrb[0].mxu0 %v123
    %v244 = vpop.f32.mrb[0].mxu0
    %v245 = vadd.f32 %v84, %v244
    %v246 = vpop.f32.mrb[0].mxu0
    %v247 = vpop.f32.mrb[0].mxu0
    %v248 = vadd.f32 %v84, %v247
    %v249 = vpop.f32.mrb[0].mxu0
    %250 = vmatprep.mubr.bf16.mxu0 0
    %251 = vmatmul.mubr.bf16.gmra.mrb[0].mxu0 %v126
    %v252 = vpop.f32.mrb[0].mxu0
    %v253 = vadd.f32 %v84, %v252
    %v254 = vpop.f32.mrb[0].mxu0
    %v255 = vpop.f32.mrb[0].mxu0
    %v256 = vadd.f32 %v84, %v255
    %v257 = vpop.f32.mrb[0].mxu0
    %258 = vmatprep.mubr.bf16.mxu0 0
    %259 = vmatmul.mubr.bf16.gmra.mrb[0].mxu0 %v129
    %v260 = vpop.f32.mrb[0].mxu0
    %v261 = vadd.f32 %v84, %v260
    %v262 = vpop.f32.mrb[0].mxu0
    %v263 = vpop.f32.mrb[0].mxu0
    %v264 = vadd.f32 %v84, %v263
    %v265 = vpop.f32.mrb[0].mxu0
    %266 = vmatprep.mubr.bf16.mxu0 0
    %267 = vmatmul.mubr.bf16.gmra.mrb[0].mxu0 %v132
    %v268 = vpop.f32.mrb[0].mxu0
    %v269 = vadd.f32 %v84, %v268
    %v270 = vpop.f32.mrb[0].mxu0
    %v271 = vpop.f32.mrb[0].mxu0
    %v272 = vadd.f32 %v84, %v271
    %v273 = vpop.f32.mrb[0].mxu0
    %274 = vmatprep.mubr.bf16.mxu0 0
    %275 = vmatmul.mubr.bf16.gmra.mrb[0].mxu0 %v135
    %v276 = vpop.f32.mrb[0].mxu0
    %v277 = vadd.f32 %v84, %v276
    %v278 = vpop.f32.mrb[0].mxu0
    %v279 = vpop.f32.mrb[0].mxu0
    %v280 = vadd.f32 %v84, %v279
    %v281 = vpop.f32.mrb[0].mxu0
    %282 = vmatprep.mubr.bf16.mxu0 0
    %283 = vmatmul.mubr.bf16.gmra.mrb[0].mxu0 %v138
    %v284 = vpop.f32.mrb[0].mxu0
    %v285 = vadd.f32 %v84, %v284
    %v286 = vpop.f32.mrb[0].mxu0
    %v287 = vpop.f32.mrb[0].mxu0
    %v288 = vadd.f32 %v84, %v287
    %v289 = vpop.f32.mrb[0].mxu0
    %290 = vmatprep.mubr.bf16.mxu0 0
    %291 = vmatmul.mubr.bf16.gmra.mrb[0].mxu0 %v141
    %v292 = vpop.f32.mrb[0].mxu0
    %v293 = vadd.f32 %v84, %v292
    %v294 = vpop.f32.mrb[0].mxu0
    %v295 = vpop.f32.mrb[0].mxu0
    %v296 = vadd.f32 %v84, %v295
    %v297 = vpop.f32.mrb[0].mxu0
    %298 = vmatprep.mubr.bf16.mxu0 0
    %299 = vmatmul.mubr.bf16.gmra.mrb[0].mxu0 %v144
    %v300 = vpop.f32.mrb[0].mxu0
    %v301 = vadd.f32 %v84, %v300
    %v302 = vpop.f32.mrb[0].mxu0
    %v303 = vpop.f32.mrb[0].mxu0
    %v304 = vadd.f32 %v84, %v303
    %v305 = vpop.f32.mrb[0].mxu0
    %306 = vdwg.mxu0
    %307 = vadd.xlane.f32.xlu0 %v181
    %v308 = vpop.xlane.xlu0 %307
    %309 = vadd.xlane.f32.xlu0 %v184
    %v310 = vpop.xlane.xlu0 %309
    %311 = vadd.xlane.f32.xlu0 %v189
    %v312 = vpop.xlane.xlu0 %311
    %313 = vadd.xlane.f32.xlu0 %v192
    %v314 = vpop.xlane.xlu0 %313
    %315 = vadd.xlane.f32.xlu0 %v197
    %v316 = vpop.xlane.xlu0 %315
    %317 = vadd.xlane.f32.xlu0 %v200
    %v318 = vpop.xlane.xlu0 %317
    %319 = vadd.xlane.f32.xlu0 %v205
    %v320 = vpop.xlane.xlu0 %319
    %321 = vadd.xlane.f32.xlu0 %v208
    %v322 = vpop.xlane.xlu0 %321
    %323 = vadd.xlane.f32.xlu0 %v213
    %v324 = vpop.xlane.xlu0 %323
    %325 = vadd.xlane.f32.xlu0 %v216
    %v326 = vpop.xlane.xlu0 %325
    %327 = vadd.xlane.f32.xlu0 %v221
    %v328 = vpop.xlane.xlu0 %327
    %329 = vadd.xlane.f32.xlu0 %v224
    %v330 = vpop.xlane.xlu0 %329
    %331 = vadd.xlane.f32.xlu0 %v229
    %v332 = vpop.xlane.xlu0 %331
    %333 = vadd.xlane.f32.xlu0 %v232
    %v334 = vpop.xlane.xlu0 %333
    %335 = vadd.xlane.f32.xlu0 %v237
    %v336 = vpop.xlane.xlu0 %335
    %337 = vadd.xlane.f32.xlu0 %v240
    %v338 = vpop.xlane.xlu0 %337
    %339 = vadd.xlane.f32.xlu0 %v245
    %v340 = vpop.xlane.xlu0 %339
    %341 = vadd.xlane.f32.xlu0 %v248
    %v342 = vpop.xlane.xlu0 %341
    %343 = vadd.xlane.f32.xlu0 %v253
    %v344 = vpop.xlane.xlu0 %343
    %345 = vadd.xlane.f32.xlu0 %v256
    %v346 = vpop.xlane.xlu0 %345
    %347 = vadd.xlane.f32.xlu0 %v261
    %v348 = vpop.xlane.xlu0 %347
    %349 = vadd.xlane.f32.xlu0 %v264
    %v350 = vpop.xlane.xlu0 %349
    %351 = vadd.xlane.f32.xlu0 %v269
    %v352 = vpop.xlane.xlu0 %351
    %353 = vadd.xlane.f32.xlu0 %v272
    %v354 = vpop.xlane.xlu0 %353
    %355 = vadd.xlane.f32.xlu0 %v277
    %v356 = vpop.xlane.xlu0 %355
    %357 = vadd.xlane.f32.xlu0 %v280
    %v358 = vpop.xlane.xlu0 %357
    %359 = vadd.xlane.f32.xlu0 %v285
    %v360 = vpop.xlane.xlu0 %359
    %361 = vadd.xlane.f32.xlu0 %v288
    %v362 = vpop.xlane.xlu0 %361
    %363 = vadd.xlane.f32.xlu0 %v293
    %v364 = vpop.xlane.xlu0 %363
    %365 = vadd.xlane.f32.xlu0 %v296
    %v366 = vpop.xlane.xlu0 %365
    %367 = vadd.xlane.f32.xlu0 %v301
    %v368 = vpop.xlane.xlu0 %367
    %369 = vadd.xlane.f32.xlu0 %v304
    %v370 = vpop.xlane.xlu0 %369
    %v371 = vrcp.pop 128.0
    %v372 = vmul.f32 %v308, %v371
    %v373 = vmul.f32 %v310, %v371
    %v374 = vmul.f32 %v312, %v371
    %v375 = vmul.f32 %v314, %v371
    %v376 = vmul.f32 %v316, %v371
    %v377 = vmul.f32 %v318, %v371
    %v378 = vmul.f32 %v320, %v371
    %v379 = vmul.f32 %v322, %v371
    %v380 = vmul.f32 %v324, %v371
    %v381 = vmul.f32 %v326, %v371
    %v382 = vmul.f32 %v328, %v371
    %v383 = vmul.f32 %v330, %v371
    %v384 = vmul.f32 %v332, %v371
    %v385 = vmul.f32 %v334, %v371
    %v386 = vmul.f32 %v336, %v371
    %v387 = vmul.f32 %v338, %v371
    %v388 = vmul.f32 %v340, %v371
    %v389 = vmul.f32 %v342, %v371
    %v390 = vmul.f32 %v344, %v371
    %v391 = vmul.f32 %v346, %v371
    %v392 = vmul.f32 %v348, %v371
    %v393 = vmul.f32 %v350, %v371
    %v394 = vmul.f32 %v352, %v371
    %v395 = vmul.f32 %v354, %v371
    %v396 = vmul.f32 %v356, %v371
    %v397 = vmul.f32 %v358, %v371
    %v398 = vmul.f32 %v360, %v371
    %v399 = vmul.f32 %v362, %v371
    %v400 = vmul.f32 %v364, %v371
    %v401 = vmul.f32 %v366, %v371
    %v402 = vmul.f32 %v368, %v371
    %v403 = vmul.f32 %v370, %v371
    %v404 = vmul.f32 %v181, %v181
    %v405 = vmul.f32 %v184, %v184
    %v406 = vmul.f32 %v189, %v189
    %v407 = vmul.f32 %v192, %v192
    %v408 = vmul.f32 %v197, %v197
    %v409 = vmul.f32 %v200, %v200
    %v410 = vmul.f32 %v205, %v205
    %v411 = vmul.f32 %v208, %v208
    %v412 = vmul.f32 %v213, %v213
    %v413 = vmul.f32 %v216, %v216
    %v414 = vmul.f32 %v221, %v221
    %v415 = vmul.f32 %v224, %v224
    %v416 = vmul.f32 %v229, %v229
    %v417 = vmul.f32 %v232, %v232
    %v418 = vmul.f32 %v237, %v237
    %v419 = vmul.f32 %v240, %v240
    %v420 = vmul.f32 %v245, %v245
    %v421 = vmul.f32 %v248, %v248
    %v422 = vmul.f32 %v253, %v253
    %v423 = vmul.f32 %v256, %v256
    %v424 = vmul.f32 %v261, %v261
    %v425 = vmul.f32 %v264, %v264
    %v426 = vmul.f32 %v269, %v269
    %v427 = vmul.f32 %v272, %v272
    %v428 = vmul.f32 %v277, %v277
    %v429 = vmul.f32 %v280, %v280
    %v430 = vmul.f32 %v285, %v285
    %v431 = vmul.f32 %v288, %v288
    %v432 = vmul.f32 %v293, %v293
    %v433 = vmul.f32 %v296, %v296
    %v434 = vmul.f32 %v301, %v301
    %v435 = vmul.f32 %v304, %v304
    %436 = vadd.xlane.f32.xlu0 %v404
    %v437 = vpop.xlane.xlu0 %436
    %438 = vadd.xlane.f32.xlu0 %v405
    %v439 = vpop.xlane.xlu0 %438
    %440 = vadd.xlane.f32.xlu0 %v406
    %v441 = vpop.xlane.xlu0 %440
    %442 = vadd.xlane.f32.xlu0 %v407
    %v443 = vpop.xlane.xlu0 %442
    %444 = vadd.xlane.f32.xlu0 %v408
    %v445 = vpop.xlane.xlu0 %444
    %446 = vadd.xlane.f32.xlu0 %v409
    %v447 = vpop.xlane.xlu0 %446
    %448 = vadd.xlane.f32.xlu0 %v410
    %v449 = vpop.xlane.xlu0 %448
    %450 = vadd.xlane.f32.xlu0 %v411
    %v451 = vpop.xlane.xlu0 %450
    %452 = vadd.xlane.f32.xlu0 %v412
    %v453 = vpop.xlane.xlu0 %452
    %454 = vadd.xlane.f32.xlu0 %v413
    %v455 = vpop.xlane.xlu0 %454
    %456 = vadd.xlane.f32.xlu0 %v414
    %v457 = vpop.xlane.xlu0 %456
    %458 = vadd.xlane.f32.xlu0 %v415
    %v459 = vpop.xlane.xlu0 %458
    %460 = vadd.xlane.f32.xlu0 %v416
    %v461 = vpop.xlane.xlu0 %460
    %462 = vadd.xlane.f32.xlu0 %v417
    %v463 = vpop.xlane.xlu0 %462
    %464 = vadd.xlane.f32.xlu0 %v418
    %v465 = vpop.xlane.xlu0 %464
    %466 = vadd.xlane.f32.xlu0 %v419
    %v467 = vpop.xlane.xlu0 %466
    %468 = vadd.xlane.f32.xlu0 %v420
    %v469 = vpop.xlane.xlu0 %468
    %470 = vadd.xlane.f32.xlu0 %v421
    %v471 = vpop.xlane.xlu0 %470
    %472 = vadd.xlane.f32.xlu0 %v422
    %v473 = vpop.xlane.xlu0 %472
    %474 = vadd.xlane.f32.xlu0 %v423
    %v475 = vpop.xlane.xlu0 %474
    %476 = vadd.xlane.f32.xlu0 %v424
    %v477 = vpop.xlane.xlu0 %476
    %478 = vadd.xlane.f32.xlu0 %v425
    %v479 = vpop.xlane.xlu0 %478
    %480 = vadd.xlane.f32.xlu0 %v426
    %v481 = vpop.xlane.xlu0 %480
    %482 = vadd.xlane.f32.xlu0 %v427
    %v483 = vpop.xlane.xlu0 %482
    %484 = vadd.xlane.f32.xlu0 %v428
    %v485 = vpop.xlane.xlu0 %484
    %486 = vadd.xlane.f32.xlu0 %v429
    %v487 = vpop.xlane.xlu0 %486
    %488 = vadd.xlane.f32.xlu0 %v430
    %v489 = vpop.xlane.xlu0 %488
    %490 = vadd.xlane.f32.xlu0 %v431
    %v491 = vpop.xlane.xlu0 %490
    %492 = vadd.xlane.f32.xlu0 %v432
    %v493 = vpop.xlane.xlu0 %492
    %494 = vadd.xlane.f32.xlu0 %v433
    %v495 = vpop.xlane.xlu0 %494
    %496 = vadd.xlane.f32.xlu0 %v434
    %v497 = vpop.xlane.xlu0 %496
    %498 = vadd.xlane.f32.xlu0 %v435
    %v499 = vpop.xlane.xlu0 %498
    %v500 = vmul.f32 %v437, %v371
    %v501 = vmul.f32 %v439, %v371
    %v502 = vmul.f32 %v441, %v371
    %v503 = vmul.f32 %v443, %v371
    %v504 = vmul.f32 %v445, %v371
    %v505 = vmul.f32 %v447, %v371
    %v506 = vmul.f32 %v449, %v371
    %v507 = vmul.f32 %v451, %v371
    %v508 = vmul.f32 %v453, %v371
    %v509 = vmul.f32 %v455, %v371
    %v510 = vmul.f32 %v457, %v371
    %v511 = vmul.f32 %v459, %v371
    %v512 = vmul.f32 %v461, %v371
    %v513 = vmul.f32 %v463, %v371
    %v514 = vmul.f32 %v465, %v371
    %v515 = vmul.f32 %v467, %v371
    %v516 = vmul.f32 %v469, %v371
    %v517 = vmul.f32 %v471, %v371
    %v518 = vmul.f32 %v473, %v371
    %v519 = vmul.f32 %v475, %v371
    %v520 = vmul.f32 %v477, %v371
    %v521 = vmul.f32 %v479, %v371
    %v522 = vmul.f32 %v481, %v371
    %v523 = vmul.f32 %v483, %v371
    %v524 = vmul.f32 %v485, %v371
    %v525 = vmul.f32 %v487, %v371
    %v526 = vmul.f32 %v489, %v371
    %v527 = vmul.f32 %v491, %v371
    %v528 = vmul.f32 %v493, %v371
    %v529 = vmul.f32 %v495, %v371
    %v530 = vmul.f32 %v497, %v371
    %v531 = vmul.f32 %v499, %v371
    %v532 = vmul.f32 %v372, %v372
    %v533 = vmul.f32 %v373, %v373
    %v534 = vmul.f32 %v374, %v374
    %v535 = vmul.f32 %v375, %v375
    %v536 = vmul.f32 %v376, %v376
    %v537 = vmul.f32 %v377, %v377
    %v538 = vmul.f32 %v378, %v378
    %v539 = vmul.f32 %v379, %v379
    %v540 = vmul.f32 %v380, %v380
    %v541 = vmul.f32 %v381, %v381
    %v542 = vmul.f32 %v382, %v382
    %v543 = vmul.f32 %v383, %v383
    %v544 = vmul.f32 %v384, %v384
    %v545 = vmul.f32 %v385, %v385
    %v546 = vmul.f32 %v386, %v386
    %v547 = vmul.f32 %v387, %v387
    %v548 = vmul.f32 %v388, %v388
    %v549 = vmul.f32 %v389, %v389
    %v550 = vmul.f32 %v390, %v390
    %v551 = vmul.f32 %v391, %v391
    %v552 = vmul.f32 %v392, %v392
    %v553 = vmul.f32 %v393, %v393
    %v554 = vmul.f32 %v394, %v394
    %v555 = vmul.f32 %v395, %v395
    %v556 = vmul.f32 %v396, %v396
    %v557 = vmul.f32 %v397, %v397
    %v558 = vmul.f32 %v398, %v398
    %v559 = vmul.f32 %v399, %v399
    %v560 = vmul.f32 %v400, %v400
    %v561 = vmul.f32 %v401, %v401
    %v562 = vmul.f32 %v402, %v402
    %v563 = vmul.f32 %v403, %v403
    %v564 = vsub.f32 %v500, %v532
    %v565 = vsub.f32 %v501, %v533
    %v566 = vsub.f32 %v502, %v534
    %v567 = vsub.f32 %v503, %v535
    %v568 = vsub.f32 %v504, %v536
    %v569 = vsub.f32 %v505, %v537
    %v570 = vsub.f32 %v506, %v538
    %v571 = vsub.f32 %v507, %v539
    %v572 = vsub.f32 %v508, %v540
    %v573 = vsub.f32 %v509, %v541
    %v574 = vsub.f32 %v510, %v542
    %v575 = vsub.f32 %v511, %v543
    %v576 = vsub.f32 %v512, %v544
    %v577 = vsub.f32 %v513, %v545
    %v578 = vsub.f32 %v514, %v546
    %v579 = vsub.f32 %v515, %v547
    %v580 = vsub.f32 %v516, %v548
    %v581 = vsub.f32 %v517, %v549
    %v582 = vsub.f32 %v518, %v550
    %v583 = vsub.f32 %v519, %v551
    %v584 = vsub.f32 %v520, %v552
    %v585 = vsub.f32 %v521, %v553
    %v586 = vsub.f32 %v522, %v554
    %v587 = vsub.f32 %v523, %v555
    %v588 = vsub.f32 %v524, %v556
    %v589 = vsub.f32 %v525, %v557
    %v590 = vsub.f32 %v526, %v558
    %v591 = vsub.f32 %v527, %v559
    %v592 = vsub.f32 %v528, %v560
    %v593 = vsub.f32 %v529, %v561
    %v594 = vsub.f32 %v530, %v562
    %v595 = vsub.f32 %v531, %v563
    %v596 = vmax.f32 %v564, 0.0
    %v597 = vmax.f32 %v565, 0.0
    %v598 = vmax.f32 %v566, 0.0
    %v599 = vmax.f32 %v567, 0.0
    %v600 = vmax.f32 %v568, 0.0
    %v601 = vmax.f32 %v569, 0.0
    %v602 = vmax.f32 %v570, 0.0
    %v603 = vmax.f32 %v571, 0.0
    %v604 = vmax.f32 %v572, 0.0
    %v605 = vmax.f32 %v573, 0.0
    %v606 = vmax.f32 %v574, 0.0
    %v607 = vmax.f32 %v575, 0.0
    %v608 = vmax.f32 %v576, 0.0
    %v609 = vmax.f32 %v577, 0.0
    %v610 = vmax.f32 %v578, 0.0
    %v611 = vmax.f32 %v579, 0.0
    %v612 = vmax.f32 %v580, 0.0
    %v613 = vmax.f32 %v581, 0.0
    %v614 = vmax.f32 %v582, 0.0
    %v615 = vmax.f32 %v583, 0.0
    %v616 = vmax.f32 %v584, 0.0
    %v617 = vmax.f32 %v585, 0.0
    %v618 = vmax.f32 %v586, 0.0
    %v619 = vmax.f32 %v587, 0.0
    %v620 = vmax.f32 %v588, 0.0
    %v621 = vmax.f32 %v589, 0.0
    %v622 = vmax.f32 %v590, 0.0
    %v623 = vmax.f32 %v591, 0.0
    %v624 = vmax.f32 %v592, 0.0
    %v625 = vmax.f32 %v593, 0.0
    %v626 = vmax.f32 %v594, 0.0
    %v627 = vmax.f32 %v595, 0.0
    %v628 = vadd.f32 %v596, 1e-05
    %v629 = vadd.f32 %v597, 1e-05
    %v630 = vadd.f32 %v598, 1e-05
    %v631 = vadd.f32 %v599, 1e-05
    %v632 = vadd.f32 %v600, 1e-05
    %v633 = vadd.f32 %v601, 1e-05
    %v634 = vadd.f32 %v602, 1e-05
    %v635 = vadd.f32 %v603, 1e-05
    %v636 = vadd.f32 %v604, 1e-05
    %v637 = vadd.f32 %v605, 1e-05
    %v638 = vadd.f32 %v606, 1e-05
    %v639 = vadd.f32 %v607, 1e-05
    %v640 = vadd.f32 %v608, 1e-05
    %v641 = vadd.f32 %v609, 1e-05
    %v642 = vadd.f32 %v610, 1e-05
    %v643 = vadd.f32 %v611, 1e-05
    %v644 = vadd.f32 %v612, 1e-05
    %v645 = vadd.f32 %v613, 1e-05
    %v646 = vadd.f32 %v614, 1e-05
    %v647 = vadd.f32 %v615, 1e-05
    %v648 = vadd.f32 %v616, 1e-05
    %v649 = vadd.f32 %v617, 1e-05
    %v650 = vadd.f32 %v618, 1e-05
    %v651 = vadd.f32 %v619, 1e-05
    %v652 = vadd.f32 %v620, 1e-05
    %v653 = vadd.f32 %v621, 1e-05
    %v654 = vadd.f32 %v622, 1e-05
    %v655 = vadd.f32 %v623, 1e-05
    %v656 = vadd.f32 %v624, 1e-05
    %v657 = vadd.f32 %v625, 1e-05
    %v658 = vadd.f32 %v626, 1e-05
    %v659 = vadd.f32 %v627, 1e-05
    %v660 = vrsqrt.pop %v628
    %v661 = vrsqrt.pop %v629
    %v662 = vrsqrt.pop %v630
    %v663 = vrsqrt.pop %v631
    %v664 = vrsqrt.pop %v632
    %v665 = vrsqrt.pop %v633
    %v666 = vrsqrt.pop %v634
    %v667 = vrsqrt.pop %v635
    %v668 = vrsqrt.pop %v636
    %v669 = vrsqrt.pop %v637
    %v670 = vrsqrt.pop %v638
    %v671 = vrsqrt.pop %v639
    %v672 = vrsqrt.pop %v640
    %v673 = vrsqrt.pop %v641
    %v674 = vrsqrt.pop %v642
    %v675 = vrsqrt.pop %v643
    %v676 = vrsqrt.pop %v644
    %v677 = vrsqrt.pop %v645
    %v678 = vrsqrt.pop %v646
    %v679 = vrsqrt.pop %v647
    %v680 = vrsqrt.pop %v648
    %v681 = vrsqrt.pop %v649
    %v682 = vrsqrt.pop %v650
    %v683 = vrsqrt.pop %v651
    %v684 = vrsqrt.pop %v652
    %v685 = vrsqrt.pop %v653
    %v686 = vrsqrt.pop %v654
    %v687 = vrsqrt.pop %v655
    %v688 = vrsqrt.pop %v656
    %v689 = vrsqrt.pop %v657
    %v690 = vrsqrt.pop %v658
    %v691 = vrsqrt.pop %v659
    %v692 = vlaneseq
    %v693 = vshrl.u32 %v692, 7
    %v694 = vsub.s32 1, %v693
    %v695 = vrot.slane %v60, %v694
    %v696 = vmul.f32 %v660, %v695
    %v697 = vmul.f32 %v661, %v695
    %v698 = vmul.f32 %v662, %v695
    %v699 = vmul.f32 %v663, %v695
    %v700 = vmul.f32 %v664, %v695
    %v701 = vmul.f32 %v665, %v695
    %v702 = vmul.f32 %v666, %v695
    %v703 = vmul.f32 %v667, %v695
    %v704 = vmul.f32 %v668, %v695
    %v705 = vmul.f32 %v669, %v695
    %v706 = vmul.f32 %v670, %v695
    %v707 = vmul.f32 %v671, %v695
    %v708 = vmul.f32 %v672, %v695
    %v709 = vmul.f32 %v673, %v695
    %v710 = vmul.f32 %v674, %v695
    %v711 = vmul.f32 %v675, %v695
    %v712 = vmul.f32 %v676, %v695
    %v713 = vmul.f32 %v677, %v695
    %v714 = vmul.f32 %v678, %v695
    %v715 = vmul.f32 %v679, %v695
    %v716 = vmul.f32 %v680, %v695
    %v717 = vmul.f32 %v681, %v695
    %v718 = vmul.f32 %v682, %v695
    %v719 = vmul.f32 %v683, %v695
    %v720 = vmul.f32 %v684, %v695
    %v721 = vmul.f32 %v685, %v695
    %v722 = vmul.f32 %v686, %v695
    %v723 = vmul.f32 %v687, %v695
    %v724 = vmul.f32 %v688, %v695
    %v725 = vmul.f32 %v689, %v695
    %v726 = vmul.f32 %v690, %v695
    %v727 = vmul.f32 %v691, %v695
    %v728 = vmul.f32 %v372, %v696
    %v729 = vmul.f32 %v373, %v697
    %v730 = vmul.f32 %v374, %v698
    %v731 = vmul.f32 %v375, %v699
    %v732 = vmul.f32 %v376, %v700
    %v733 = vmul.f32 %v377, %v701
    %v734 = vmul.f32 %v378, %v702
    %v735 = vmul.f32 %v379, %v703
    %v736 = vmul.f32 %v380, %v704
    %v737 = vmul.f32 %v381, %v705
    %v738 = vmul.f32 %v382, %v706
    %v739 = vmul.f32 %v383, %v707
    %v740 = vmul.f32 %v384, %v708
    %v741 = vmul.f32 %v385, %v709
    %v742 = vmul.f32 %v386, %v710
    %v743 = vmul.f32 %v387, %v711
    %v744 = vmul.f32 %v388, %v712
    %v745 = vmul.f32 %v389, %v713
    %v746 = vmul.f32 %v390, %v714
    %v747 = vmul.f32 %v391, %v715
    %v748 = vmul.f32 %v392, %v716
    %v749 = vmul.f32 %v393, %v717
    %v750 = vmul.f32 %v394, %v718
    %v751 = vmul.f32 %v395, %v719
    %v752 = vmul.f32 %v396, %v720
    %v753 = vmul.f32 %v397, %v721
    %v754 = vmul.f32 %v398, %v722
    %v755 = vmul.f32 %v399, %v723
    %v756 = vmul.f32 %v400, %v724
    %v757 = vmul.f32 %v401, %v725
    %v758 = vmul.f32 %v402, %v726
    %v759 = vmul.f32 %v403, %v727
    %v760 = vlaneseq
    %v761 = vshrl.u32 %v760, 7
    %v762 = vsub.s32 2, %v761
    %v763 = vrot.slane %v60, %v762
    %v764 = vsub.f32 %v763, %v728
    %v765 = vsub.f32 %v763, %v729
    %v766 = vsub.f32 %v763, %v730
    %v767 = vsub.f32 %v763, %v731
    %v768 = vsub.f32 %v763, %v732
    %v769 = vsub.f32 %v763, %v733
    %v770 = vsub.f32 %v763, %v734
    %v771 = vsub.f32 %v763, %v735
    %v772 = vsub.f32 %v763, %v736
    %v773 = vsub.f32 %v763, %v737
    %v774 = vsub.f32 %v763, %v738
    %v775 = vsub.f32 %v763, %v739
    %v776 = vsub.f32 %v763, %v740
    %v777 = vsub.f32 %v763, %v741
    %v778 = vsub.f32 %v763, %v742
    %v779 = vsub.f32 %v763, %v743
    %v780 = vsub.f32 %v763, %v744
    %v781 = vsub.f32 %v763, %v745
    %v782 = vsub.f32 %v763, %v746
    %v783 = vsub.f32 %v763, %v747
    %v784 = vsub.f32 %v763, %v748
    %v785 = vsub.f32 %v763, %v749
    %v786 = vsub.f32 %v763, %v750
    %v787 = vsub.f32 %v763, %v751
    %v788 = vsub.f32 %v763, %v752
    %v789 = vsub.f32 %v763, %v753
    %v790 = vsub.f32 %v763, %v754
    %v791 = vsub.f32 %v763, %v755
    %v792 = vsub.f32 %v763, %v756
    %v793 = vsub.f32 %v763, %v757
    %v794 = vsub.f32 %v763, %v758
    %v795 = vsub.f32 %v763, %v759
    %v796 = vmul.f32 %v181, %v696
    %v797 = vmul.f32 %v184, %v697
    %v798 = vmul.f32 %v189, %v698
    %v799 = vmul.f32 %v192, %v699
    %v800 = vmul.f32 %v197, %v700
    %v801 = vmul.f32 %v200, %v701
    %v802 = vmul.f32 %v205, %v702
    %v803 = vmul.f32 %v208, %v703
    %v804 = vmul.f32 %v213, %v704
    %v805 = vmul.f32 %v216, %v705
    %v806 = vmul.f32 %v221, %v706
    %v807 = vmul.f32 %v224, %v707
    %v808 = vmul.f32 %v229, %v708
    %v809 = vmul.f32 %v232, %v709
    %v810 = vmul.f32 %v237, %v710
    %v811 = vmul.f32 %v240, %v711
    %v812 = vmul.f32 %v245, %v712
    %v813 = vmul.f32 %v248, %v713
    %v814 = vmul.f32 %v253, %v714
    %v815 = vmul.f32 %v256, %v715
    %v816 = vmul.f32 %v261, %v716
    %v817 = vmul.f32 %v264, %v717
    %v818 = vmul.f32 %v269, %v718
    %v819 = vmul.f32 %v272, %v719
    %v820 = vmul.f32 %v277, %v720
    %v821 = vmul.f32 %v280, %v721
    %v822 = vmul.f32 %v285, %v722
    %v823 = vmul.f32 %v288, %v723
    %v824 = vmul.f32 %v293, %v724
    %v825 = vmul.f32 %v296, %v725
    %v826 = vmul.f32 %v301, %v726
    %v827 = vmul.f32 %v304, %v727
    %v828 = vadd.f32 %v796, %v764
    %v829 = vadd.f32 %v797, %v765
    %v830 = vadd.f32 %v798, %v766
    %v831 = vadd.f32 %v799, %v767
    %v832 = vadd.f32 %v800, %v768
    %v833 = vadd.f32 %v801, %v769
    %v834 = vadd.f32 %v802, %v770
    %v835 = vadd.f32 %v803, %v771
    %v836 = vadd.f32 %v804, %v772
    %v837 = vadd.f32 %v805, %v773
    %v838 = vadd.f32 %v806, %v774
    %v839 = vadd.f32 %v807, %v775
    %v840 = vadd.f32 %v808, %v776
    %v841 = vadd.f32 %v809, %v777
    %v842 = vadd.f32 %v810, %v778
    %v843 = vadd.f32 %v811, %v779
    %v844 = vadd.f32 %v812, %v780
    %v845 = vadd.f32 %v813, %v781
    %v846 = vadd.f32 %v814, %v782
    %v847 = vadd.f32 %v815, %v783
    %v848 = vadd.f32 %v816, %v784
    %v849 = vadd.f32 %v817, %v785
    %v850 = vadd.f32 %v818, %v786
    %v851 = vadd.f32 %v819, %v787
    %v852 = vadd.f32 %v820, %v788
    %v853 = vadd.f32 %v821, %v789
    %v854 = vadd.f32 %v822, %v790
    %v855 = vadd.f32 %v823, %v791
    %v856 = vadd.f32 %v824, %v792
    %v857 = vadd.f32 %v825, %v793
    %v858 = vadd.f32 %v826, %v794
    %v859 = vadd.f32 %v827, %v795
    %v860 = vmax.f32 %v828, 0.0
    %v861 = vmax.f32 %v829, 0.0
    %v862 = vmax.f32 %v830, 0.0
    %v863 = vmax.f32 %v831, 0.0
    %v864 = vmax.f32 %v832, 0.0
    %v865 = vmax.f32 %v833, 0.0
    %v866 = vmax.f32 %v834, 0.0
    %v867 = vmax.f32 %v835, 0.0
    %v868 = vmax.f32 %v836, 0.0
    %v869 = vmax.f32 %v837, 0.0
    %v870 = vmax.f32 %v838, 0.0
    %v871 = vmax.f32 %v839, 0.0
    %v872 = vmax.f32 %v840, 0.0
    %v873 = vmax.f32 %v841, 0.0
    %v874 = vmax.f32 %v842, 0.0
    %v875 = vmax.f32 %v843, 0.0
    %v876 = vmax.f32 %v844, 0.0
    %v877 = vmax.f32 %v845, 0.0
    %v878 = vmax.f32 %v846, 0.0
    %v879 = vmax.f32 %v847, 0.0
    %v880 = vmax.f32 %v848, 0.0
    %v881 = vmax.f32 %v849, 0.0
    %v882 = vmax.f32 %v850, 0.0
    %v883 = vmax.f32 %v851, 0.0
    %v884 = vmax.f32 %v852, 0.0
    %v885 = vmax.f32 %v853, 0.0
    %v886 = vmax.f32 %v854, 0.0
    %v887 = vmax.f32 %v855, 0.0
    %v888 = vmax.f32 %v856, 0.0
    %v889 = vmax.f32 %v857, 0.0
    %v890 = vmax.f32 %v858, 0.0
    %v891 = vmax.f32 %v859, 0.0
    %v892 = vld [vmem:[%s4] sm:$0x7]
    %v893 = vpack.c.bf16 %v861, %v860
    %v894 = vpack.c.bf16 %v863, %v862
    %v895 = vpack.c.bf16 %v865, %v864
    %v896 = vpack.c.bf16 %v867, %v866
    %v897 = vpack.c.bf16 %v869, %v868
    %v898 = vpack.c.bf16 %v871, %v870
    %v899 = vpack.c.bf16 %v873, %v872
    %v900 = vpack.c.bf16 %v875, %v874
    %v901 = vpack.c.bf16 %v877, %v876
    %v902 = vpack.c.bf16 %v879, %v878
    %v903 = vpack.c.bf16 %v881, %v880
    %v904 = vpack.c.bf16 %v883, %v882
    %v905 = vpack.c.bf16 %v885, %v884
    %v906 = vpack.c.bf16 %v887, %v886
    %v907 = vpack.c.bf16 %v889, %v888
    %v908 = vpack.c.bf16 %v891, %v890
    %v909 = vld [vmem:[%s3] sm:$0xf]
    %v910 = vld [vmem:[%s3 + $0x4] sm:$0xf]
    %v911 = vld [vmem:[%s3 + $0x8] sm:$0xf]
    %v912 = vld [vmem:[%s3 + $0xc] sm:$0xf]
    %v913 = vld [vmem:[%s3 + $0x10] sm:$0xf]
    %v914 = vld [vmem:[%s3 + $0x14] sm:$0xf]
    %v915 = vld [vmem:[%s3 + $0x18] sm:$0xf]
    %v916 = vld [vmem:[%s3 + $0x1c] sm:$0xf]
    %v917 = vld [vmem:[%s3 + $0x20] sm:$0xf]
    %v918 = vld [vmem:[%s3 + $0x24] sm:$0xf]
    %v919 = vld [vmem:[%s3 + $0x28] sm:$0xf]
    %v920 = vld [vmem:[%s3 + $0x2c] sm:$0xf]
    %v921 = vld [vmem:[%s3 + $0x30] sm:$0xf]
    %v922 = vld [vmem:[%s3 + $0x34] sm:$0xf]
    %v923 = vld [vmem:[%s3 + $0x38] sm:$0xf]
    %v924 = vld [vmem:[%s3 + $0x3c] sm:$0xf]
    %v925 = vlaneseq
    %v926 = vshrl.u32 %v925, 7
    %v927 = vsub.s32 0, %v926
    %v928 = vrot.slane %v892, %v927
    %v945 = vunpack.c.l.b16 %v909
    %v946 = vunpack.c.l.b16 %v910
    %v947 = vunpack.c.l.b16 %v911
    %v948 = vunpack.c.l.b16 %v912
    %v949 = vunpack.c.l.b16 %v913
    %v950 = vunpack.c.l.b16 %v914
    %v951 = vunpack.c.l.b16 %v915
    %v952 = vunpack.c.l.b16 %v916
    %v953 = vunpack.c.l.b16 %v917
    %v954 = vunpack.c.l.b16 %v918
    %v955 = vunpack.c.l.b16 %v919
    %v956 = vunpack.c.l.b16 %v920
    %v957 = vunpack.c.l.b16 %v921
    %v958 = vunpack.c.l.b16 %v922
    %v959 = vunpack.c.l.b16 %v923
    %v960 = vunpack.c.l.b16 %v924
    %v961 = vpack.c.b16 %v946, %v945
    %v962 = vpack.c.b16 %v948, %v947
    %v963 = vpack.c.b16 %v950, %v949
    %v964 = vpack.c.b16 %v952, %v951
    %v965 = vpack.c.b16 %v954, %v953
    %v966 = vpack.c.b16 %v956, %v955
    %v967 = vpack.c.b16 %v958, %v957
    %v968 = vpack.c.b16 %v960, %v959
    %977 = vmatprep.subr.bf16.mxu0 0
    %978 = vmatpush1.bf16.msra.mxu0 %v961
    %979 = vmatprep.subr.bf16.mxu0 0
    %980 = vmatpush1.bf16.msra.mxu0 %v962
    %981 = vmatprep.subr.bf16.mxu0 0
    %982 = vmatpush1.bf16.msra.mxu0 %v963
    %983 = vmatprep.subr.bf16.mxu0 0
    %984 = vmatpush1.bf16.msra.mxu0 %v964
    %985 = vmatprep.subr.bf16.mxu0 0
    %986 = vmatpush1.bf16.msra.mxu0 %v965
    %987 = vmatprep.subr.bf16.mxu0 0
    %988 = vmatpush1.bf16.msra.mxu0 %v966
    %989 = vmatprep.subr.bf16.mxu0 0
    %990 = vmatpush1.bf16.msra.mxu0 %v967
    %991 = vmatprep.subr.bf16.mxu0 0
    %992 = vmatpush1.bf16.msra.mxu0 %v968
    %993 = vmatprep.subr.bf16.mxu0 0
    %994 = vmatpush1.bf16.msra.mxu0 0
    %995 = vmatprep.subr.bf16.mxu0 0
    %996 = vmatpush1.bf16.msra.mxu0 0
    %997 = vmatprep.subr.bf16.mxu0 0
    %998 = vmatpush1.bf16.msra.mxu0 0
    %999 = vmatprep.subr.bf16.mxu0 0
    %1000 = vmatpush1.bf16.msra.mxu0 0
    %1001 = vmatprep.subr.bf16.mxu0 0
    %1002 = vmatpush1.bf16.msra.mxu0 0
    %1003 = vmatprep.subr.bf16.mxu0 0
    %1004 = vmatpush1.bf16.msra.mxu0 0
    %1005 = vmatprep.subr.bf16.mxu0 0
    %1006 = vmatpush1.bf16.msra.mxu0 0
    %1007 = vmatprep.subr.bf16.mxu0 0
    %1008 = vmatpush1.bf16.msra.mxu0 0
    %1009 = vmatprep.mubr.bf16.mxu0 0
    %1010 = vmatmul.mubr.bf16.gmra.mrb[0].mxu0 %v893
    %v1011 = vpop.f32.mrb[0].mxu0
    %v1012 = vadd.f32 %v928, %v1011
    %v1013 = vpop.f32.mrb[0].mxu0
    %v1014 = vpop.f32.mrb[0].mxu0
    %v1015 = vadd.f32 %v928, %v1014
    %v1016 = vpop.f32.mrb[0].mxu0
    %1017 = vmatprep.mubr.bf16.mxu0 0
    %1018 = vmatmul.mubr.bf16.gmra.mrb[0].mxu0 %v894
    %v1019 = vpop.f32.mrb[0].mxu0
    %v1020 = vadd.f32 %v928, %v1019
    %v1021 = vpop.f32.mrb[0].mxu0
    %v1022 = vpop.f32.mrb[0].mxu0
    %v1023 = vadd.f32 %v928, %v1022
    %v1024 = vpop.f32.mrb[0].mxu0
    %1025 = vmatprep.mubr.bf16.mxu0 0
    %1026 = vmatmul.mubr.bf16.gmra.mrb[0].mxu0 %v895
    %v1027 = vpop.f32.mrb[0].mxu0
    %v1028 = vadd.f32 %v928, %v1027
    %v1029 = vpop.f32.mrb[0].mxu0
    %v1030 = vpop.f32.mrb[0].mxu0
    %v1031 = vadd.f32 %v928, %v1030
    %v1032 = vpop.f32.mrb[0].mxu0
    %1033 = vmatprep.mubr.bf16.mxu0 0
    %1034 = vmatmul.mubr.bf16.gmra.mrb[0].mxu0 %v896
    %v1035 = vpop.f32.mrb[0].mxu0
    %v1036 = vadd.f32 %v928, %v1035
    %v1037 = vpop.f32.mrb[0].mxu0
    %v1038 = vpop.f32.mrb[0].mxu0
    %v1039 = vadd.f32 %v928, %v1038
    %v1040 = vpop.f32.mrb[0].mxu0
    %1041 = vmatprep.mubr.bf16.mxu0 0
    %1042 = vmatmul.mubr.bf16.gmra.mrb[0].mxu0 %v897
    %v1043 = vpop.f32.mrb[0].mxu0
    %v1044 = vadd.f32 %v928, %v1043
    %v1045 = vpop.f32.mrb[0].mxu0
    %v1046 = vpop.f32.mrb[0].mxu0
    %v1047 = vadd.f32 %v928, %v1046
    %v1048 = vpop.f32.mrb[0].mxu0
    %1049 = vmatprep.mubr.bf16.mxu0 0
    %1050 = vmatmul.mubr.bf16.gmra.mrb[0].mxu0 %v898
    %v1051 = vpop.f32.mrb[0].mxu0
    %v1052 = vadd.f32 %v928, %v1051
    %v1053 = vpop.f32.mrb[0].mxu0
    %v1054 = vpop.f32.mrb[0].mxu0
    %v1055 = vadd.f32 %v928, %v1054
    %v1056 = vpop.f32.mrb[0].mxu0
    %1057 = vmatprep.mubr.bf16.mxu0 0
    %1058 = vmatmul.mubr.bf16.gmra.mrb[0].mxu0 %v899
    %v1059 = vpop.f32.mrb[0].mxu0
    %v1060 = vadd.f32 %v928, %v1059
    %v1061 = vpop.f32.mrb[0].mxu0
    %v1062 = vpop.f32.mrb[0].mxu0
    %v1063 = vadd.f32 %v928, %v1062
    %v1064 = vpop.f32.mrb[0].mxu0
    %1065 = vmatprep.mubr.bf16.mxu0 0
    %1066 = vmatmul.mubr.bf16.gmra.mrb[0].mxu0 %v900
    %v1067 = vpop.f32.mrb[0].mxu0
    %v1068 = vadd.f32 %v928, %v1067
    %v1069 = vpop.f32.mrb[0].mxu0
    %v1070 = vpop.f32.mrb[0].mxu0
    %v1071 = vadd.f32 %v928, %v1070
    %v1072 = vpop.f32.mrb[0].mxu0
    %1073 = vmatprep.mubr.bf16.mxu0 0
    %1074 = vmatmul.mubr.bf16.gmra.mrb[0].mxu0 %v901
    %v1075 = vpop.f32.mrb[0].mxu0
    %v1076 = vadd.f32 %v928, %v1075
    %v1077 = vpop.f32.mrb[0].mxu0
    %v1078 = vpop.f32.mrb[0].mxu0
    %v1079 = vadd.f32 %v928, %v1078
    %v1080 = vpop.f32.mrb[0].mxu0
    %1081 = vmatprep.mubr.bf16.mxu0 0
    %1082 = vmatmul.mubr.bf16.gmra.mrb[0].mxu0 %v902
    %v1083 = vpop.f32.mrb[0].mxu0
    %v1084 = vadd.f32 %v928, %v1083
    %v1085 = vpop.f32.mrb[0].mxu0
    %v1086 = vpop.f32.mrb[0].mxu0
    %v1087 = vadd.f32 %v928, %v1086
    %v1088 = vpop.f32.mrb[0].mxu0
    %1089 = vmatprep.mubr.bf16.mxu0 0
    %1090 = vmatmul.mubr.bf16.gmra.mrb[0].mxu0 %v903
    %v1091 = vpop.f32.mrb[0].mxu0
    %v1092 = vadd.f32 %v928, %v1091
    %v1093 = vpop.f32.mrb[0].mxu0
    %v1094 = vpop.f32.mrb[0].mxu0
    %v1095 = vadd.f32 %v928, %v1094
    %v1096 = vpop.f32.mrb[0].mxu0
    %1097 = vmatprep.mubr.bf16.mxu0 0
    %1098 = vmatmul.mubr.bf16.gmra.mrb[0].mxu0 %v904
    %v1099 = vpop.f32.mrb[0].mxu0
    %v1100 = vadd.f32 %v928, %v1099
    %v1101 = vpop.f32.mrb[0].mxu0
    %v1102 = vpop.f32.mrb[0].mxu0
    %v1103 = vadd.f32 %v928, %v1102
    %v1104 = vpop.f32.mrb[0].mxu0
    %1105 = vmatprep.mubr.bf16.mxu0 0
    %1106 = vmatmul.mubr.bf16.gmra.mrb[0].mxu0 %v905
    %v1107 = vpop.f32.mrb[0].mxu0
    %v1108 = vadd.f32 %v928, %v1107
    %v1109 = vpop.f32.mrb[0].mxu0
    %v1110 = vpop.f32.mrb[0].mxu0
    %v1111 = vadd.f32 %v928, %v1110
    %v1112 = vpop.f32.mrb[0].mxu0
    %1113 = vmatprep.mubr.bf16.mxu0 0
    %1114 = vmatmul.mubr.bf16.gmra.mrb[0].mxu0 %v906
    %v1115 = vpop.f32.mrb[0].mxu0
    %v1116 = vadd.f32 %v928, %v1115
    %v1117 = vpop.f32.mrb[0].mxu0
    %v1118 = vpop.f32.mrb[0].mxu0
    %v1119 = vadd.f32 %v928, %v1118
    %v1120 = vpop.f32.mrb[0].mxu0
    %1121 = vmatprep.mubr.bf16.mxu0 0
    %1122 = vmatmul.mubr.bf16.gmra.mrb[0].mxu0 %v907
    %v1123 = vpop.f32.mrb[0].mxu0
    %v1124 = vadd.f32 %v928, %v1123
    %v1125 = vpop.f32.mrb[0].mxu0
    %v1126 = vpop.f32.mrb[0].mxu0
    %v1127 = vadd.f32 %v928, %v1126
    %v1128 = vpop.f32.mrb[0].mxu0
    %1129 = vmatprep.mubr.bf16.mxu0 0
    %1130 = vmatmul.mubr.bf16.gmra.mrb[0].mxu0 %v908
    %v1131 = vpop.f32.mrb[0].mxu0
    %v1132 = vadd.f32 %v928, %v1131
    %v1133 = vpop.f32.mrb[0].mxu0
    %v1134 = vpop.f32.mrb[0].mxu0
    %v1135 = vadd.f32 %v928, %v1134
    %v1136 = vpop.f32.mrb[0].mxu0
    %1137 = vdwg.mxu0
    %vm1138 = vcmask 523264
    %v1139 = vsel %vm1138, %v1012, 0.0
    %1140 = vadd.xlane.f32.xlu0 %v1139
    %v1141 = vpop.xlane.xlu0 %1140
    %v1142 = vsel %vm1138, %v1015, 0.0
    %1143 = vadd.xlane.f32.xlu0 %v1142
    %v1144 = vpop.xlane.xlu0 %1143
    %v1145 = vsel %vm1138, %v1020, 0.0
    %1146 = vadd.xlane.f32.xlu0 %v1145
    %v1147 = vpop.xlane.xlu0 %1146
    %v1148 = vsel %vm1138, %v1023, 0.0
    %1149 = vadd.xlane.f32.xlu0 %v1148
    %v1150 = vpop.xlane.xlu0 %1149
    %v1151 = vsel %vm1138, %v1028, 0.0
    %1152 = vadd.xlane.f32.xlu0 %v1151
    %v1153 = vpop.xlane.xlu0 %1152
    %v1154 = vsel %vm1138, %v1031, 0.0
    %1155 = vadd.xlane.f32.xlu0 %v1154
    %v1156 = vpop.xlane.xlu0 %1155
    %v1157 = vsel %vm1138, %v1036, 0.0
    %1158 = vadd.xlane.f32.xlu0 %v1157
    %v1159 = vpop.xlane.xlu0 %1158
    %v1160 = vsel %vm1138, %v1039, 0.0
    %1161 = vadd.xlane.f32.xlu0 %v1160
    %v1162 = vpop.xlane.xlu0 %1161
    %v1163 = vsel %vm1138, %v1044, 0.0
    %1164 = vadd.xlane.f32.xlu0 %v1163
    %v1165 = vpop.xlane.xlu0 %1164
    %v1166 = vsel %vm1138, %v1047, 0.0
    %1167 = vadd.xlane.f32.xlu0 %v1166
    %v1168 = vpop.xlane.xlu0 %1167
    %v1169 = vsel %vm1138, %v1052, 0.0
    %1170 = vadd.xlane.f32.xlu0 %v1169
    %v1171 = vpop.xlane.xlu0 %1170
    %v1172 = vsel %vm1138, %v1055, 0.0
    %1173 = vadd.xlane.f32.xlu0 %v1172
    %v1174 = vpop.xlane.xlu0 %1173
    %v1175 = vsel %vm1138, %v1060, 0.0
    %1176 = vadd.xlane.f32.xlu0 %v1175
    %v1177 = vpop.xlane.xlu0 %1176
    %v1178 = vsel %vm1138, %v1063, 0.0
    %1179 = vadd.xlane.f32.xlu0 %v1178
    %v1180 = vpop.xlane.xlu0 %1179
    %v1181 = vsel %vm1138, %v1068, 0.0
    %1182 = vadd.xlane.f32.xlu0 %v1181
    %v1183 = vpop.xlane.xlu0 %1182
    %v1184 = vsel %vm1138, %v1071, 0.0
    %1185 = vadd.xlane.f32.xlu0 %v1184
    %v1186 = vpop.xlane.xlu0 %1185
    %v1187 = vsel %vm1138, %v1076, 0.0
    %1188 = vadd.xlane.f32.xlu0 %v1187
    %v1189 = vpop.xlane.xlu0 %1188
    %v1190 = vsel %vm1138, %v1079, 0.0
    %1191 = vadd.xlane.f32.xlu0 %v1190
    %v1192 = vpop.xlane.xlu0 %1191
    %v1193 = vsel %vm1138, %v1084, 0.0
    %1194 = vadd.xlane.f32.xlu0 %v1193
    %v1195 = vpop.xlane.xlu0 %1194
    %v1196 = vsel %vm1138, %v1087, 0.0
    %1197 = vadd.xlane.f32.xlu0 %v1196
    %v1198 = vpop.xlane.xlu0 %1197
    %v1199 = vsel %vm1138, %v1092, 0.0
    %1200 = vadd.xlane.f32.xlu0 %v1199
    %v1201 = vpop.xlane.xlu0 %1200
    %v1202 = vsel %vm1138, %v1095, 0.0
    %1203 = vadd.xlane.f32.xlu0 %v1202
    %v1204 = vpop.xlane.xlu0 %1203
    %v1205 = vsel %vm1138, %v1100, 0.0
    %1206 = vadd.xlane.f32.xlu0 %v1205
    %v1207 = vpop.xlane.xlu0 %1206
    %v1208 = vsel %vm1138, %v1103, 0.0
    %1209 = vadd.xlane.f32.xlu0 %v1208
    %v1210 = vpop.xlane.xlu0 %1209
    %v1211 = vsel %vm1138, %v1108, 0.0
    %1212 = vadd.xlane.f32.xlu0 %v1211
    %v1213 = vpop.xlane.xlu0 %1212
    %v1214 = vsel %vm1138, %v1111, 0.0
    %1215 = vadd.xlane.f32.xlu0 %v1214
    %v1216 = vpop.xlane.xlu0 %1215
    %v1217 = vsel %vm1138, %v1116, 0.0
    %1218 = vadd.xlane.f32.xlu0 %v1217
    %v1219 = vpop.xlane.xlu0 %1218
    %v1220 = vsel %vm1138, %v1119, 0.0
    %1221 = vadd.xlane.f32.xlu0 %v1220
    %v1222 = vpop.xlane.xlu0 %1221
    %v1223 = vsel %vm1138, %v1124, 0.0
    %1224 = vadd.xlane.f32.xlu0 %v1223
    %v1225 = vpop.xlane.xlu0 %1224
    %v1226 = vsel %vm1138, %v1127, 0.0
    %1227 = vadd.xlane.f32.xlu0 %v1226
    %v1228 = vpop.xlane.xlu0 %1227
    %v1229 = vsel %vm1138, %v1132, 0.0
    %1230 = vadd.xlane.f32.xlu0 %v1229
    %v1231 = vpop.xlane.xlu0 %1230
    %v1232 = vsel %vm1138, %v1135, 0.0
    %1233 = vadd.xlane.f32.xlu0 %v1232
    %v1234 = vpop.xlane.xlu0 %1233
    %v1235 = vrcp.pop 64.0
    %v1236 = vmul.f32 %v1141, %v1235
    %v1237 = vmul.f32 %v1144, %v1235
    %v1238 = vmul.f32 %v1147, %v1235
    %v1239 = vmul.f32 %v1150, %v1235
    %v1240 = vmul.f32 %v1153, %v1235
    %v1241 = vmul.f32 %v1156, %v1235
    %v1242 = vmul.f32 %v1159, %v1235
    %v1243 = vmul.f32 %v1162, %v1235
    %v1244 = vmul.f32 %v1165, %v1235
    %v1245 = vmul.f32 %v1168, %v1235
    %v1246 = vmul.f32 %v1171, %v1235
    %v1247 = vmul.f32 %v1174, %v1235
    %v1248 = vmul.f32 %v1177, %v1235
    %v1249 = vmul.f32 %v1180, %v1235
    %v1250 = vmul.f32 %v1183, %v1235
    %v1251 = vmul.f32 %v1186, %v1235
    %v1252 = vmul.f32 %v1189, %v1235
    %v1253 = vmul.f32 %v1192, %v1235
    %v1254 = vmul.f32 %v1195, %v1235
    %v1255 = vmul.f32 %v1198, %v1235
    %v1256 = vmul.f32 %v1201, %v1235
    %v1257 = vmul.f32 %v1204, %v1235
    %v1258 = vmul.f32 %v1207, %v1235
    %v1259 = vmul.f32 %v1210, %v1235
    %v1260 = vmul.f32 %v1213, %v1235
    %v1261 = vmul.f32 %v1216, %v1235
    %v1262 = vmul.f32 %v1219, %v1235
    %v1263 = vmul.f32 %v1222, %v1235
    %v1264 = vmul.f32 %v1225, %v1235
    %v1265 = vmul.f32 %v1228, %v1235
    %v1266 = vmul.f32 %v1231, %v1235
    %v1267 = vmul.f32 %v1234, %v1235
    %v1268 = vmul.f32 %v1012, %v1012
    %v1269 = vmul.f32 %v1015, %v1015
    %v1270 = vmul.f32 %v1020, %v1020
    %v1271 = vmul.f32 %v1023, %v1023
    %v1272 = vmul.f32 %v1028, %v1028
    %v1273 = vmul.f32 %v1031, %v1031
    %v1274 = vmul.f32 %v1036, %v1036
    %v1275 = vmul.f32 %v1039, %v1039
    %v1276 = vmul.f32 %v1044, %v1044
    %v1277 = vmul.f32 %v1047, %v1047
    %v1278 = vmul.f32 %v1052, %v1052
    %v1279 = vmul.f32 %v1055, %v1055
    %v1280 = vmul.f32 %v1060, %v1060
    %v1281 = vmul.f32 %v1063, %v1063
    %v1282 = vmul.f32 %v1068, %v1068
    %v1283 = vmul.f32 %v1071, %v1071
    %v1284 = vmul.f32 %v1076, %v1076
    %v1285 = vmul.f32 %v1079, %v1079
    %v1286 = vmul.f32 %v1084, %v1084
    %v1287 = vmul.f32 %v1087, %v1087
    %v1288 = vmul.f32 %v1092, %v1092
    %v1289 = vmul.f32 %v1095, %v1095
    %v1290 = vmul.f32 %v1100, %v1100
    %v1291 = vmul.f32 %v1103, %v1103
    %v1292 = vmul.f32 %v1108, %v1108
    %v1293 = vmul.f32 %v1111, %v1111
    %v1294 = vmul.f32 %v1116, %v1116
    %v1295 = vmul.f32 %v1119, %v1119
    %v1296 = vmul.f32 %v1124, %v1124
    %v1297 = vmul.f32 %v1127, %v1127
    %v1298 = vmul.f32 %v1132, %v1132
    %v1299 = vmul.f32 %v1135, %v1135
    %v1300 = vsel %vm1138, %v1268, 0.0
    %1301 = vadd.xlane.f32.xlu0 %v1300
    %v1302 = vpop.xlane.xlu0 %1301
    %v1303 = vsel %vm1138, %v1269, 0.0
    %1304 = vadd.xlane.f32.xlu0 %v1303
    %v1305 = vpop.xlane.xlu0 %1304
    %v1306 = vsel %vm1138, %v1270, 0.0
    %1307 = vadd.xlane.f32.xlu0 %v1306
    %v1308 = vpop.xlane.xlu0 %1307
    %v1309 = vsel %vm1138, %v1271, 0.0
    %1310 = vadd.xlane.f32.xlu0 %v1309
    %v1311 = vpop.xlane.xlu0 %1310
    %v1312 = vsel %vm1138, %v1272, 0.0
    %1313 = vadd.xlane.f32.xlu0 %v1312
    %v1314 = vpop.xlane.xlu0 %1313
    %v1315 = vsel %vm1138, %v1273, 0.0
    %1316 = vadd.xlane.f32.xlu0 %v1315
    %v1317 = vpop.xlane.xlu0 %1316
    %v1318 = vsel %vm1138, %v1274, 0.0
    %1319 = vadd.xlane.f32.xlu0 %v1318
    %v1320 = vpop.xlane.xlu0 %1319
    %v1321 = vsel %vm1138, %v1275, 0.0
    %1322 = vadd.xlane.f32.xlu0 %v1321
    %v1323 = vpop.xlane.xlu0 %1322
    %v1324 = vsel %vm1138, %v1276, 0.0
    %1325 = vadd.xlane.f32.xlu0 %v1324
    %v1326 = vpop.xlane.xlu0 %1325
    %v1327 = vsel %vm1138, %v1277, 0.0
    %1328 = vadd.xlane.f32.xlu0 %v1327
    %v1329 = vpop.xlane.xlu0 %1328
    %v1330 = vsel %vm1138, %v1278, 0.0
    %1331 = vadd.xlane.f32.xlu0 %v1330
    %v1332 = vpop.xlane.xlu0 %1331
    %v1333 = vsel %vm1138, %v1279, 0.0
    %1334 = vadd.xlane.f32.xlu0 %v1333
    %v1335 = vpop.xlane.xlu0 %1334
    %v1336 = vsel %vm1138, %v1280, 0.0
    %1337 = vadd.xlane.f32.xlu0 %v1336
    %v1338 = vpop.xlane.xlu0 %1337
    %v1339 = vsel %vm1138, %v1281, 0.0
    %1340 = vadd.xlane.f32.xlu0 %v1339
    %v1341 = vpop.xlane.xlu0 %1340
    %v1342 = vsel %vm1138, %v1282, 0.0
    %1343 = vadd.xlane.f32.xlu0 %v1342
    %v1344 = vpop.xlane.xlu0 %1343
    %v1345 = vsel %vm1138, %v1283, 0.0
    %1346 = vadd.xlane.f32.xlu0 %v1345
    %v1347 = vpop.xlane.xlu0 %1346
    %v1348 = vsel %vm1138, %v1284, 0.0
    %1349 = vadd.xlane.f32.xlu0 %v1348
    %v1350 = vpop.xlane.xlu0 %1349
    %v1351 = vsel %vm1138, %v1285, 0.0
    %1352 = vadd.xlane.f32.xlu0 %v1351
    %v1353 = vpop.xlane.xlu0 %1352
    %v1354 = vsel %vm1138, %v1286, 0.0
    %1355 = vadd.xlane.f32.xlu0 %v1354
    %v1356 = vpop.xlane.xlu0 %1355
    %v1357 = vsel %vm1138, %v1287, 0.0
    %1358 = vadd.xlane.f32.xlu0 %v1357
    %v1359 = vpop.xlane.xlu0 %1358
    %v1360 = vsel %vm1138, %v1288, 0.0
    %1361 = vadd.xlane.f32.xlu0 %v1360
    %v1362 = vpop.xlane.xlu0 %1361
    %v1363 = vsel %vm1138, %v1289, 0.0
    %1364 = vadd.xlane.f32.xlu0 %v1363
    %v1365 = vpop.xlane.xlu0 %1364
    %v1366 = vsel %vm1138, %v1290, 0.0
    %1367 = vadd.xlane.f32.xlu0 %v1366
    %v1368 = vpop.xlane.xlu0 %1367
    %v1369 = vsel %vm1138, %v1291, 0.0
    %1370 = vadd.xlane.f32.xlu0 %v1369
    %v1371 = vpop.xlane.xlu0 %1370
    %v1372 = vsel %vm1138, %v1292, 0.0
    %1373 = vadd.xlane.f32.xlu0 %v1372
    %v1374 = vpop.xlane.xlu0 %1373
    %v1375 = vsel %vm1138, %v1293, 0.0
    %1376 = vadd.xlane.f32.xlu0 %v1375
    %v1377 = vpop.xlane.xlu0 %1376
    %v1378 = vsel %vm1138, %v1294, 0.0
    %1379 = vadd.xlane.f32.xlu0 %v1378
    %v1380 = vpop.xlane.xlu0 %1379
    %v1381 = vsel %vm1138, %v1295, 0.0
    %1382 = vadd.xlane.f32.xlu0 %v1381
    %v1383 = vpop.xlane.xlu0 %1382
    %v1384 = vsel %vm1138, %v1296, 0.0
    %1385 = vadd.xlane.f32.xlu0 %v1384
    %v1386 = vpop.xlane.xlu0 %1385
    %v1387 = vsel %vm1138, %v1297, 0.0
    %1388 = vadd.xlane.f32.xlu0 %v1387
    %v1389 = vpop.xlane.xlu0 %1388
    %v1390 = vsel %vm1138, %v1298, 0.0
    %1391 = vadd.xlane.f32.xlu0 %v1390
    %v1392 = vpop.xlane.xlu0 %1391
    %v1393 = vsel %vm1138, %v1299, 0.0
    %1394 = vadd.xlane.f32.xlu0 %v1393
    %v1395 = vpop.xlane.xlu0 %1394
    %v1396 = vmul.f32 %v1302, %v1235
    %v1397 = vmul.f32 %v1305, %v1235
    %v1398 = vmul.f32 %v1308, %v1235
    %v1399 = vmul.f32 %v1311, %v1235
    %v1400 = vmul.f32 %v1314, %v1235
    %v1401 = vmul.f32 %v1317, %v1235
    %v1402 = vmul.f32 %v1320, %v1235
    %v1403 = vmul.f32 %v1323, %v1235
    %v1404 = vmul.f32 %v1326, %v1235
    %v1405 = vmul.f32 %v1329, %v1235
    %v1406 = vmul.f32 %v1332, %v1235
    %v1407 = vmul.f32 %v1335, %v1235
    %v1408 = vmul.f32 %v1338, %v1235
    %v1409 = vmul.f32 %v1341, %v1235
    %v1410 = vmul.f32 %v1344, %v1235
    %v1411 = vmul.f32 %v1347, %v1235
    %v1412 = vmul.f32 %v1350, %v1235
    %v1413 = vmul.f32 %v1353, %v1235
    %v1414 = vmul.f32 %v1356, %v1235
    %v1415 = vmul.f32 %v1359, %v1235
    %v1416 = vmul.f32 %v1362, %v1235
    %v1417 = vmul.f32 %v1365, %v1235
    %v1418 = vmul.f32 %v1368, %v1235
    %v1419 = vmul.f32 %v1371, %v1235
    %v1420 = vmul.f32 %v1374, %v1235
    %v1421 = vmul.f32 %v1377, %v1235
    %v1422 = vmul.f32 %v1380, %v1235
    %v1423 = vmul.f32 %v1383, %v1235
    %v1424 = vmul.f32 %v1386, %v1235
    %v1425 = vmul.f32 %v1389, %v1235
    %v1426 = vmul.f32 %v1392, %v1235
    %v1427 = vmul.f32 %v1395, %v1235
    %v1428 = vmul.f32 %v1236, %v1236
    %v1429 = vmul.f32 %v1237, %v1237
    %v1430 = vmul.f32 %v1238, %v1238
    %v1431 = vmul.f32 %v1239, %v1239
    %v1432 = vmul.f32 %v1240, %v1240
    %v1433 = vmul.f32 %v1241, %v1241
    %v1434 = vmul.f32 %v1242, %v1242
    %v1435 = vmul.f32 %v1243, %v1243
    %v1436 = vmul.f32 %v1244, %v1244
    %v1437 = vmul.f32 %v1245, %v1245
    %v1438 = vmul.f32 %v1246, %v1246
    %v1439 = vmul.f32 %v1247, %v1247
    %v1440 = vmul.f32 %v1248, %v1248
    %v1441 = vmul.f32 %v1249, %v1249
    %v1442 = vmul.f32 %v1250, %v1250
    %v1443 = vmul.f32 %v1251, %v1251
    %v1444 = vmul.f32 %v1252, %v1252
    %v1445 = vmul.f32 %v1253, %v1253
    %v1446 = vmul.f32 %v1254, %v1254
    %v1447 = vmul.f32 %v1255, %v1255
    %v1448 = vmul.f32 %v1256, %v1256
    %v1449 = vmul.f32 %v1257, %v1257
    %v1450 = vmul.f32 %v1258, %v1258
    %v1451 = vmul.f32 %v1259, %v1259
    %v1452 = vmul.f32 %v1260, %v1260
    %v1453 = vmul.f32 %v1261, %v1261
    %v1454 = vmul.f32 %v1262, %v1262
    %v1455 = vmul.f32 %v1263, %v1263
    %v1456 = vmul.f32 %v1264, %v1264
    %v1457 = vmul.f32 %v1265, %v1265
    %v1458 = vmul.f32 %v1266, %v1266
    %v1459 = vmul.f32 %v1267, %v1267
    %v1460 = vsub.f32 %v1396, %v1428
    %v1461 = vsub.f32 %v1397, %v1429
    %v1462 = vsub.f32 %v1398, %v1430
    %v1463 = vsub.f32 %v1399, %v1431
    %v1464 = vsub.f32 %v1400, %v1432
    %v1465 = vsub.f32 %v1401, %v1433
    %v1466 = vsub.f32 %v1402, %v1434
    %v1467 = vsub.f32 %v1403, %v1435
    %v1468 = vsub.f32 %v1404, %v1436
    %v1469 = vsub.f32 %v1405, %v1437
    %v1470 = vsub.f32 %v1406, %v1438
    %v1471 = vsub.f32 %v1407, %v1439
    %v1472 = vsub.f32 %v1408, %v1440
    %v1473 = vsub.f32 %v1409, %v1441
    %v1474 = vsub.f32 %v1410, %v1442
    %v1475 = vsub.f32 %v1411, %v1443
    %v1476 = vsub.f32 %v1412, %v1444
    %v1477 = vsub.f32 %v1413, %v1445
    %v1478 = vsub.f32 %v1414, %v1446
    %v1479 = vsub.f32 %v1415, %v1447
    %v1480 = vsub.f32 %v1416, %v1448
    %v1481 = vsub.f32 %v1417, %v1449
    %v1482 = vsub.f32 %v1418, %v1450
    %v1483 = vsub.f32 %v1419, %v1451
    %v1484 = vsub.f32 %v1420, %v1452
    %v1485 = vsub.f32 %v1421, %v1453
    %v1486 = vsub.f32 %v1422, %v1454
    %v1487 = vsub.f32 %v1423, %v1455
    %v1488 = vsub.f32 %v1424, %v1456
    %v1489 = vsub.f32 %v1425, %v1457
    %v1490 = vsub.f32 %v1426, %v1458
    %v1491 = vsub.f32 %v1427, %v1459
    %v1492 = vmax.f32 %v1460, 0.0
    %v1493 = vmax.f32 %v1461, 0.0
    %v1494 = vmax.f32 %v1462, 0.0
    %v1495 = vmax.f32 %v1463, 0.0
    %v1496 = vmax.f32 %v1464, 0.0
    %v1497 = vmax.f32 %v1465, 0.0
    %v1498 = vmax.f32 %v1466, 0.0
    %v1499 = vmax.f32 %v1467, 0.0
    %v1500 = vmax.f32 %v1468, 0.0
    %v1501 = vmax.f32 %v1469, 0.0
    %v1502 = vmax.f32 %v1470, 0.0
    %v1503 = vmax.f32 %v1471, 0.0
    %v1504 = vmax.f32 %v1472, 0.0
    %v1505 = vmax.f32 %v1473, 0.0
    %v1506 = vmax.f32 %v1474, 0.0
    %v1507 = vmax.f32 %v1475, 0.0
    %v1508 = vmax.f32 %v1476, 0.0
    %v1509 = vmax.f32 %v1477, 0.0
    %v1510 = vmax.f32 %v1478, 0.0
    %v1511 = vmax.f32 %v1479, 0.0
    %v1512 = vmax.f32 %v1480, 0.0
    %v1513 = vmax.f32 %v1481, 0.0
    %v1514 = vmax.f32 %v1482, 0.0
    %v1515 = vmax.f32 %v1483, 0.0
    %v1516 = vmax.f32 %v1484, 0.0
    %v1517 = vmax.f32 %v1485, 0.0
    %v1518 = vmax.f32 %v1486, 0.0
    %v1519 = vmax.f32 %v1487, 0.0
    %v1520 = vmax.f32 %v1488, 0.0
    %v1521 = vmax.f32 %v1489, 0.0
    %v1522 = vmax.f32 %v1490, 0.0
    %v1523 = vmax.f32 %v1491, 0.0
    %v1524 = vadd.f32 %v1492, 1e-05
    %v1525 = vadd.f32 %v1493, 1e-05
    %v1526 = vadd.f32 %v1494, 1e-05
    %v1527 = vadd.f32 %v1495, 1e-05
    %v1528 = vadd.f32 %v1496, 1e-05
    %v1529 = vadd.f32 %v1497, 1e-05
    %v1530 = vadd.f32 %v1498, 1e-05
    %v1531 = vadd.f32 %v1499, 1e-05
    %v1532 = vadd.f32 %v1500, 1e-05
    %v1533 = vadd.f32 %v1501, 1e-05
    %v1534 = vadd.f32 %v1502, 1e-05
    %v1535 = vadd.f32 %v1503, 1e-05
    %v1536 = vadd.f32 %v1504, 1e-05
    %v1537 = vadd.f32 %v1505, 1e-05
    %v1538 = vadd.f32 %v1506, 1e-05
    %v1539 = vadd.f32 %v1507, 1e-05
    %v1540 = vadd.f32 %v1508, 1e-05
    %v1541 = vadd.f32 %v1509, 1e-05
    %v1542 = vadd.f32 %v1510, 1e-05
    %v1543 = vadd.f32 %v1511, 1e-05
    %v1544 = vadd.f32 %v1512, 1e-05
    %v1545 = vadd.f32 %v1513, 1e-05
    %v1546 = vadd.f32 %v1514, 1e-05
    %v1547 = vadd.f32 %v1515, 1e-05
    %v1548 = vadd.f32 %v1516, 1e-05
    %v1549 = vadd.f32 %v1517, 1e-05
    %v1550 = vadd.f32 %v1518, 1e-05
    %v1551 = vadd.f32 %v1519, 1e-05
    %v1552 = vadd.f32 %v1520, 1e-05
    %v1553 = vadd.f32 %v1521, 1e-05
    %v1554 = vadd.f32 %v1522, 1e-05
    %v1555 = vadd.f32 %v1523, 1e-05
    %v1556 = vrsqrt.pop %v1524
    %v1557 = vrsqrt.pop %v1525
    %v1558 = vrsqrt.pop %v1526
    %v1559 = vrsqrt.pop %v1527
    %v1560 = vrsqrt.pop %v1528
    %v1561 = vrsqrt.pop %v1529
    %v1562 = vrsqrt.pop %v1530
    %v1563 = vrsqrt.pop %v1531
    %v1564 = vrsqrt.pop %v1532
    %v1565 = vrsqrt.pop %v1533
    %v1566 = vrsqrt.pop %v1534
    %v1567 = vrsqrt.pop %v1535
    %v1568 = vrsqrt.pop %v1536
    %v1569 = vrsqrt.pop %v1537
    %v1570 = vrsqrt.pop %v1538
    %v1571 = vrsqrt.pop %v1539
    %v1572 = vrsqrt.pop %v1540
    %v1573 = vrsqrt.pop %v1541
    %v1574 = vrsqrt.pop %v1542
    %v1575 = vrsqrt.pop %v1543
    %v1576 = vrsqrt.pop %v1544
    %v1577 = vrsqrt.pop %v1545
    %v1578 = vrsqrt.pop %v1546
    %v1579 = vrsqrt.pop %v1547
    %v1580 = vrsqrt.pop %v1548
    %v1581 = vrsqrt.pop %v1549
    %v1582 = vrsqrt.pop %v1550
    %v1583 = vrsqrt.pop %v1551
    %v1584 = vrsqrt.pop %v1552
    %v1585 = vrsqrt.pop %v1553
    %v1586 = vrsqrt.pop %v1554
    %v1587 = vrsqrt.pop %v1555
    %v1588 = vlaneseq
    %v1589 = vshrl.u32 %v1588, 7
    %v1590 = vsub.s32 1, %v1589
    %v1591 = vrot.slane %v892, %v1590
    %v1592 = vmul.f32 %v1556, %v1591
    %v1593 = vmul.f32 %v1557, %v1591
    %v1594 = vmul.f32 %v1558, %v1591
    %v1595 = vmul.f32 %v1559, %v1591
    %v1596 = vmul.f32 %v1560, %v1591
    %v1597 = vmul.f32 %v1561, %v1591
    %v1598 = vmul.f32 %v1562, %v1591
    %v1599 = vmul.f32 %v1563, %v1591
    %v1600 = vmul.f32 %v1564, %v1591
    %v1601 = vmul.f32 %v1565, %v1591
    %v1602 = vmul.f32 %v1566, %v1591
    %v1603 = vmul.f32 %v1567, %v1591
    %v1604 = vmul.f32 %v1568, %v1591
    %v1605 = vmul.f32 %v1569, %v1591
    %v1606 = vmul.f32 %v1570, %v1591
    %v1607 = vmul.f32 %v1571, %v1591
    %v1608 = vmul.f32 %v1572, %v1591
    %v1609 = vmul.f32 %v1573, %v1591
    %v1610 = vmul.f32 %v1574, %v1591
    %v1611 = vmul.f32 %v1575, %v1591
    %v1612 = vmul.f32 %v1576, %v1591
    %v1613 = vmul.f32 %v1577, %v1591
    %v1614 = vmul.f32 %v1578, %v1591
    %v1615 = vmul.f32 %v1579, %v1591
    %v1616 = vmul.f32 %v1580, %v1591
    %v1617 = vmul.f32 %v1581, %v1591
    %v1618 = vmul.f32 %v1582, %v1591
    %v1619 = vmul.f32 %v1583, %v1591
    %v1620 = vmul.f32 %v1584, %v1591
    %v1621 = vmul.f32 %v1585, %v1591
    %v1622 = vmul.f32 %v1586, %v1591
    %v1623 = vmul.f32 %v1587, %v1591
    %v1624 = vmul.f32 %v1236, %v1592
    %v1625 = vmul.f32 %v1237, %v1593
    %v1626 = vmul.f32 %v1238, %v1594
    %v1627 = vmul.f32 %v1239, %v1595
    %v1628 = vmul.f32 %v1240, %v1596
    %v1629 = vmul.f32 %v1241, %v1597
    %v1630 = vmul.f32 %v1242, %v1598
    %v1631 = vmul.f32 %v1243, %v1599
    %v1632 = vmul.f32 %v1244, %v1600
    %v1633 = vmul.f32 %v1245, %v1601
    %v1634 = vmul.f32 %v1246, %v1602
    %v1635 = vmul.f32 %v1247, %v1603
    %v1636 = vmul.f32 %v1248, %v1604
    %v1637 = vmul.f32 %v1249, %v1605
    %v1638 = vmul.f32 %v1250, %v1606
    %v1639 = vmul.f32 %v1251, %v1607
    %v1640 = vmul.f32 %v1252, %v1608
    %v1641 = vmul.f32 %v1253, %v1609
    %v1642 = vmul.f32 %v1254, %v1610
    %v1643 = vmul.f32 %v1255, %v1611
    %v1644 = vmul.f32 %v1256, %v1612
    %v1645 = vmul.f32 %v1257, %v1613
    %v1646 = vmul.f32 %v1258, %v1614
    %v1647 = vmul.f32 %v1259, %v1615
    %v1648 = vmul.f32 %v1260, %v1616
    %v1649 = vmul.f32 %v1261, %v1617
    %v1650 = vmul.f32 %v1262, %v1618
    %v1651 = vmul.f32 %v1263, %v1619
    %v1652 = vmul.f32 %v1264, %v1620
    %v1653 = vmul.f32 %v1265, %v1621
    %v1654 = vmul.f32 %v1266, %v1622
    %v1655 = vmul.f32 %v1267, %v1623
    %v1656 = vlaneseq
    %v1657 = vshrl.u32 %v1656, 7
    %v1658 = vsub.s32 2, %v1657
    %v1659 = vrot.slane %v892, %v1658
    %v1660 = vsub.f32 %v1659, %v1624
    %v1661 = vsub.f32 %v1659, %v1625
    %v1662 = vsub.f32 %v1659, %v1626
    %v1663 = vsub.f32 %v1659, %v1627
    %v1664 = vsub.f32 %v1659, %v1628
    %v1665 = vsub.f32 %v1659, %v1629
    %v1666 = vsub.f32 %v1659, %v1630
    %v1667 = vsub.f32 %v1659, %v1631
    %v1668 = vsub.f32 %v1659, %v1632
    %v1669 = vsub.f32 %v1659, %v1633
    %v1670 = vsub.f32 %v1659, %v1634
    %v1671 = vsub.f32 %v1659, %v1635
    %v1672 = vsub.f32 %v1659, %v1636
    %v1673 = vsub.f32 %v1659, %v1637
    %v1674 = vsub.f32 %v1659, %v1638
    %v1675 = vsub.f32 %v1659, %v1639
    %v1676 = vsub.f32 %v1659, %v1640
    %v1677 = vsub.f32 %v1659, %v1641
    %v1678 = vsub.f32 %v1659, %v1642
    %v1679 = vsub.f32 %v1659, %v1643
    %v1680 = vsub.f32 %v1659, %v1644
    %v1681 = vsub.f32 %v1659, %v1645
    %v1682 = vsub.f32 %v1659, %v1646
    %v1683 = vsub.f32 %v1659, %v1647
    %v1684 = vsub.f32 %v1659, %v1648
    %v1685 = vsub.f32 %v1659, %v1649
    %v1686 = vsub.f32 %v1659, %v1650
    %v1687 = vsub.f32 %v1659, %v1651
    %v1688 = vsub.f32 %v1659, %v1652
    %v1689 = vsub.f32 %v1659, %v1653
    %v1690 = vsub.f32 %v1659, %v1654
    %v1691 = vsub.f32 %v1659, %v1655
    %v1692 = vmul.f32 %v1012, %v1592
    %v1693 = vmul.f32 %v1015, %v1593
    %v1694 = vmul.f32 %v1020, %v1594
    %v1695 = vmul.f32 %v1023, %v1595
    %v1696 = vmul.f32 %v1028, %v1596
    %v1697 = vmul.f32 %v1031, %v1597
    %v1698 = vmul.f32 %v1036, %v1598
    %v1699 = vmul.f32 %v1039, %v1599
    %v1700 = vmul.f32 %v1044, %v1600
    %v1701 = vmul.f32 %v1047, %v1601
    %v1702 = vmul.f32 %v1052, %v1602
    %v1703 = vmul.f32 %v1055, %v1603
    %v1704 = vmul.f32 %v1060, %v1604
    %v1705 = vmul.f32 %v1063, %v1605
    %v1706 = vmul.f32 %v1068, %v1606
    %v1707 = vmul.f32 %v1071, %v1607
    %v1708 = vmul.f32 %v1076, %v1608
    %v1709 = vmul.f32 %v1079, %v1609
    %v1710 = vmul.f32 %v1084, %v1610
    %v1711 = vmul.f32 %v1087, %v1611
    %v1712 = vmul.f32 %v1092, %v1612
    %v1713 = vmul.f32 %v1095, %v1613
    %v1714 = vmul.f32 %v1100, %v1614
    %v1715 = vmul.f32 %v1103, %v1615
    %v1716 = vmul.f32 %v1108, %v1616
    %v1717 = vmul.f32 %v1111, %v1617
    %v1718 = vmul.f32 %v1116, %v1618
    %v1719 = vmul.f32 %v1119, %v1619
    %v1720 = vmul.f32 %v1124, %v1620
    %v1721 = vmul.f32 %v1127, %v1621
    %v1722 = vmul.f32 %v1132, %v1622
    %v1723 = vmul.f32 %v1135, %v1623
    %v1724 = vadd.f32 %v1692, %v1660
    %v1725 = vadd.f32 %v1693, %v1661
    %v1726 = vadd.f32 %v1694, %v1662
    %v1727 = vadd.f32 %v1695, %v1663
    %v1728 = vadd.f32 %v1696, %v1664
    %v1729 = vadd.f32 %v1697, %v1665
    %v1730 = vadd.f32 %v1698, %v1666
    %v1731 = vadd.f32 %v1699, %v1667
    %v1732 = vadd.f32 %v1700, %v1668
    %v1733 = vadd.f32 %v1701, %v1669
    %v1734 = vadd.f32 %v1702, %v1670
    %v1735 = vadd.f32 %v1703, %v1671
    %v1736 = vadd.f32 %v1704, %v1672
    %v1737 = vadd.f32 %v1705, %v1673
    %v1738 = vadd.f32 %v1706, %v1674
    %v1739 = vadd.f32 %v1707, %v1675
    %v1740 = vadd.f32 %v1708, %v1676
    %v1741 = vadd.f32 %v1709, %v1677
    %v1742 = vadd.f32 %v1710, %v1678
    %v1743 = vadd.f32 %v1711, %v1679
    %v1744 = vadd.f32 %v1712, %v1680
    %v1745 = vadd.f32 %v1713, %v1681
    %v1746 = vadd.f32 %v1714, %v1682
    %v1747 = vadd.f32 %v1715, %v1683
    %v1748 = vadd.f32 %v1716, %v1684
    %v1749 = vadd.f32 %v1717, %v1685
    %v1750 = vadd.f32 %v1718, %v1686
    %v1751 = vadd.f32 %v1719, %v1687
    %v1752 = vadd.f32 %v1720, %v1688
    %v1753 = vadd.f32 %v1721, %v1689
    %v1754 = vadd.f32 %v1722, %v1690
    %v1755 = vadd.f32 %v1723, %v1691
    %v1756 = vmax.f32 %v1724, 0.0
    %v1757 = vmax.f32 %v1725, 0.0
    %v1758 = vmax.f32 %v1726, 0.0
    %v1759 = vmax.f32 %v1727, 0.0
    %v1760 = vmax.f32 %v1728, 0.0
    %v1761 = vmax.f32 %v1729, 0.0
    %v1762 = vmax.f32 %v1730, 0.0
    %v1763 = vmax.f32 %v1731, 0.0
    %v1764 = vmax.f32 %v1732, 0.0
    %v1765 = vmax.f32 %v1733, 0.0
    %v1766 = vmax.f32 %v1734, 0.0
    %v1767 = vmax.f32 %v1735, 0.0
    %v1768 = vmax.f32 %v1736, 0.0
    %v1769 = vmax.f32 %v1737, 0.0
    %v1770 = vmax.f32 %v1738, 0.0
    %v1771 = vmax.f32 %v1739, 0.0
    %v1772 = vmax.f32 %v1740, 0.0
    %v1773 = vmax.f32 %v1741, 0.0
    %v1774 = vmax.f32 %v1742, 0.0
    %v1775 = vmax.f32 %v1743, 0.0
    %v1776 = vmax.f32 %v1744, 0.0
    %v1777 = vmax.f32 %v1745, 0.0
    %v1778 = vmax.f32 %v1746, 0.0
    %v1779 = vmax.f32 %v1747, 0.0
    %v1780 = vmax.f32 %v1748, 0.0
    %v1781 = vmax.f32 %v1749, 0.0
    %v1782 = vmax.f32 %v1750, 0.0
    %v1783 = vmax.f32 %v1751, 0.0
    %v1784 = vmax.f32 %v1752, 0.0
    %v1785 = vmax.f32 %v1753, 0.0
    %v1786 = vmax.f32 %v1754, 0.0
    %v1787 = vmax.f32 %v1755, 0.0
    %v1788 = vpack.c.bf16 %v1757, %v1756
    %v1789 = vpack.c.bf16 %v1759, %v1758
    %v1790 = vpack.c.bf16 %v1761, %v1760
    %v1791 = vpack.c.bf16 %v1763, %v1762
    %v1792 = vpack.c.bf16 %v1765, %v1764
    %v1793 = vpack.c.bf16 %v1767, %v1766
    %v1794 = vpack.c.bf16 %v1769, %v1768
    %v1795 = vpack.c.bf16 %v1771, %v1770
    %v1796 = vpack.c.bf16 %v1773, %v1772
    %v1797 = vpack.c.bf16 %v1775, %v1774
    %v1798 = vpack.c.bf16 %v1777, %v1776
    %v1799 = vpack.c.bf16 %v1779, %v1778
    %v1800 = vpack.c.bf16 %v1781, %v1780
    %v1801 = vpack.c.bf16 %v1783, %v1782
    %v1802 = vpack.c.bf16 %v1785, %v1784
    %v1803 = vpack.c.bf16 %v1787, %v1786
    %v1804 = vld [vmem:[%s5] sm:$0xf]
    %v1805 = vld [vmem:[%s5 + $0x4] sm:$0xf]
    %v1806 = vld [vmem:[%s5 + $0x8] sm:$0xf]
    %v1807 = vld [vmem:[%s5 + $0xc] sm:$0xf]
    %v1808 = vld [vmem:[%s5 + $0x10] sm:$0xf]
    %v1809 = vld [vmem:[%s5 + $0x14] sm:$0xf]
    %v1810 = vld [vmem:[%s5 + $0x18] sm:$0xf]
    %v1811 = vld [vmem:[%s5 + $0x1c] sm:$0xf]
    %v1812 = vld [vmem:[%s6] sm:$0x1]
    %v1814 = vlaneseq
    %v1815 = vshrl.u32 %v1814, 7
    %v1816 = vsub.s32 0, %v1815
    %v1817 = vrot.slane %v1812, %v1816
    %v1827 = vunpack.c.l.b16 %v1804
    %v1828 = vunpack.c.l.b16 %v1805
    %v1829 = vunpack.c.l.b16 %v1806
    %v1830 = vunpack.c.l.b16 %v1807
    %v1831 = vunpack.c.l.b16 %v1808
    %v1832 = vunpack.c.l.b16 %v1809
    %v1833 = vunpack.c.l.b16 %v1810
    %v1834 = vunpack.c.l.b16 %v1811
    %v1835 = vpack.c.b16 %v1828, %v1827
    %v1836 = vpack.c.b16 %v1830, %v1829
    %v1837 = vpack.c.b16 %v1832, %v1831
    %v1838 = vpack.c.b16 %v1834, %v1833
    %v1844 = vsel %vm1138, %v1788, 0
    %v1847 = vsel %vm1138, %v1789, 0
    %v1850 = vsel %vm1138, %v1790, 0
    %v1853 = vsel %vm1138, %v1791, 0
    %v1856 = vsel %vm1138, %v1792, 0
    %v1859 = vsel %vm1138, %v1793, 0
    %v1862 = vsel %vm1138, %v1794, 0
    %v1865 = vsel %vm1138, %v1795, 0
    %v1868 = vsel %vm1138, %v1796, 0
    %v1871 = vsel %vm1138, %v1797, 0
    %v1874 = vsel %vm1138, %v1798, 0
    %v1877 = vsel %vm1138, %v1799, 0
    %v1880 = vsel %vm1138, %v1800, 0
    %v1883 = vsel %vm1138, %v1801, 0
    %v1886 = vsel %vm1138, %v1802, 0
    %v1889 = vsel %vm1138, %v1803, 0
    %1891 = vmatprep.subr.bf16.mxu0 0
    %1892 = vmatpush1.bf16.msra.mxu0 %v1835
    %1893 = vmatprep.subr.bf16.mxu0 0
    %1894 = vmatpush1.bf16.msra.mxu0 %v1836
    %1895 = vmatprep.subr.bf16.mxu0 0
    %1896 = vmatpush1.bf16.msra.mxu0 %v1837
    %1897 = vmatprep.subr.bf16.mxu0 0
    %1898 = vmatpush1.bf16.msra.mxu0 %v1838
    %1899 = vmatprep.subr.bf16.mxu0 0
    %1900 = vmatpush1.bf16.msra.mxu0 0
    %1901 = vmatprep.subr.bf16.mxu0 0
    %1902 = vmatpush1.bf16.msra.mxu0 0
    %1903 = vmatprep.subr.bf16.mxu0 0
    %1904 = vmatpush1.bf16.msra.mxu0 0
    %1905 = vmatprep.subr.bf16.mxu0 0
    %1906 = vmatpush1.bf16.msra.mxu0 0
    %1907 = vmatprep.subr.bf16.mxu0 0
    %1908 = vmatpush1.bf16.msra.mxu0 0
    %1909 = vmatprep.subr.bf16.mxu0 0
    %1910 = vmatpush1.bf16.msra.mxu0 0
    %1911 = vmatprep.subr.bf16.mxu0 0
    %1912 = vmatpush1.bf16.msra.mxu0 0
    %1913 = vmatprep.subr.bf16.mxu0 0
    %1914 = vmatpush1.bf16.msra.mxu0 0
    %1915 = vmatprep.subr.bf16.mxu0 0
    %1916 = vmatpush1.bf16.msra.mxu0 0
    %1917 = vmatprep.subr.bf16.mxu0 0
    %1918 = vmatpush1.bf16.msra.mxu0 0
    %1919 = vmatprep.subr.bf16.mxu0 0
    %1920 = vmatpush1.bf16.msra.mxu0 0
    %1921 = vmatprep.subr.bf16.mxu0 0
    %1922 = vmatpush1.bf16.msra.mxu0 0
    %1923 = vmatprep.mubr.bf16.mxu0 0
    %1924 = vmatmul.mubr.bf16.gmra.mrb[0].mxu0 %v1844
    %v1925 = vpop.f32.mrb[0].mxu0
    %v1926 = vadd.f32 %v1817, %v1925
    %v1927 = vpop.f32.mrb[0].mxu0
    %v1928 = vpop.f32.mrb[0].mxu0
    %v1929 = vadd.f32 %v1817, %v1928
    %v1930 = vpop.f32.mrb[0].mxu0
    %1931 = vmatprep.mubr.bf16.mxu0 0
    %1932 = vmatmul.mubr.bf16.gmra.mrb[0].mxu0 %v1847
    %v1933 = vpop.f32.mrb[0].mxu0
    %v1934 = vadd.f32 %v1817, %v1933
    %v1935 = vpop.f32.mrb[0].mxu0
    %v1936 = vpop.f32.mrb[0].mxu0
    %v1937 = vadd.f32 %v1817, %v1936
    %v1938 = vpop.f32.mrb[0].mxu0
    %1939 = vmatprep.mubr.bf16.mxu0 0
    %1940 = vmatmul.mubr.bf16.gmra.mrb[0].mxu0 %v1850
    %v1941 = vpop.f32.mrb[0].mxu0
    %v1942 = vadd.f32 %v1817, %v1941
    %v1943 = vpop.f32.mrb[0].mxu0
    %v1944 = vpop.f32.mrb[0].mxu0
    %v1945 = vadd.f32 %v1817, %v1944
    %v1946 = vpop.f32.mrb[0].mxu0
    %1947 = vmatprep.mubr.bf16.mxu0 0
    %1948 = vmatmul.mubr.bf16.gmra.mrb[0].mxu0 %v1853
    %v1949 = vpop.f32.mrb[0].mxu0
    %v1950 = vadd.f32 %v1817, %v1949
    %v1951 = vpop.f32.mrb[0].mxu0
    %v1952 = vpop.f32.mrb[0].mxu0
    %v1953 = vadd.f32 %v1817, %v1952
    %v1954 = vpop.f32.mrb[0].mxu0
    %1955 = vmatprep.mubr.bf16.mxu0 0
    %1956 = vmatmul.mubr.bf16.gmra.mrb[0].mxu0 %v1856
    %v1957 = vpop.f32.mrb[0].mxu0
    %v1958 = vadd.f32 %v1817, %v1957
    %v1959 = vpop.f32.mrb[0].mxu0
    %v1960 = vpop.f32.mrb[0].mxu0
    %v1961 = vadd.f32 %v1817, %v1960
    %v1962 = vpop.f32.mrb[0].mxu0
    %1963 = vmatprep.mubr.bf16.mxu0 0
    %1964 = vmatmul.mubr.bf16.gmra.mrb[0].mxu0 %v1859
    %v1965 = vpop.f32.mrb[0].mxu0
    %v1966 = vadd.f32 %v1817, %v1965
    %v1967 = vpop.f32.mrb[0].mxu0
    %v1968 = vpop.f32.mrb[0].mxu0
    %v1969 = vadd.f32 %v1817, %v1968
    %v1970 = vpop.f32.mrb[0].mxu0
    %1971 = vmatprep.mubr.bf16.mxu0 0
    %1972 = vmatmul.mubr.bf16.gmra.mrb[0].mxu0 %v1862
    %v1973 = vpop.f32.mrb[0].mxu0
    %v1974 = vadd.f32 %v1817, %v1973
    %v1975 = vpop.f32.mrb[0].mxu0
    %v1976 = vpop.f32.mrb[0].mxu0
    %v1977 = vadd.f32 %v1817, %v1976
    %v1978 = vpop.f32.mrb[0].mxu0
    %1979 = vmatprep.mubr.bf16.mxu0 0
    %1980 = vmatmul.mubr.bf16.gmra.mrb[0].mxu0 %v1865
    %v1981 = vpop.f32.mrb[0].mxu0
    %v1982 = vadd.f32 %v1817, %v1981
    %v1983 = vpop.f32.mrb[0].mxu0
    %v1984 = vpop.f32.mrb[0].mxu0
    %v1985 = vadd.f32 %v1817, %v1984
    %v1986 = vpop.f32.mrb[0].mxu0
    %1987 = vmatprep.mubr.bf16.mxu0 0
    %1988 = vmatmul.mubr.bf16.gmra.mrb[0].mxu0 %v1868
    %v1989 = vpop.f32.mrb[0].mxu0
    %v1990 = vadd.f32 %v1817, %v1989
    %v1991 = vpop.f32.mrb[0].mxu0
    %v1992 = vpop.f32.mrb[0].mxu0
    %v1993 = vadd.f32 %v1817, %v1992
    %v1994 = vpop.f32.mrb[0].mxu0
    %1995 = vmatprep.mubr.bf16.mxu0 0
    %1996 = vmatmul.mubr.bf16.gmra.mrb[0].mxu0 %v1871
    %v1997 = vpop.f32.mrb[0].mxu0
    %v1998 = vadd.f32 %v1817, %v1997
    %v1999 = vpop.f32.mrb[0].mxu0
    %v2000 = vpop.f32.mrb[0].mxu0
    %v2001 = vadd.f32 %v1817, %v2000
    %v2002 = vpop.f32.mrb[0].mxu0
    %2003 = vmatprep.mubr.bf16.mxu0 0
    %2004 = vmatmul.mubr.bf16.gmra.mrb[0].mxu0 %v1874
    %v2005 = vpop.f32.mrb[0].mxu0
    %v2006 = vadd.f32 %v1817, %v2005
    %v2007 = vpop.f32.mrb[0].mxu0
    %v2008 = vpop.f32.mrb[0].mxu0
    %v2009 = vadd.f32 %v1817, %v2008
    %v2010 = vpop.f32.mrb[0].mxu0
    %2011 = vmatprep.mubr.bf16.mxu0 0
    %2012 = vmatmul.mubr.bf16.gmra.mrb[0].mxu0 %v1877
    %v2013 = vpop.f32.mrb[0].mxu0
    %v2014 = vadd.f32 %v1817, %v2013
    %v2015 = vpop.f32.mrb[0].mxu0
    %v2016 = vpop.f32.mrb[0].mxu0
    %v2017 = vadd.f32 %v1817, %v2016
    %v2018 = vpop.f32.mrb[0].mxu0
    %2019 = vmatprep.mubr.bf16.mxu0 0
    %2020 = vmatmul.mubr.bf16.gmra.mrb[0].mxu0 %v1880
    %v2021 = vpop.f32.mrb[0].mxu0
    %v2022 = vadd.f32 %v1817, %v2021
    %v2023 = vpop.f32.mrb[0].mxu0
    %v2024 = vpop.f32.mrb[0].mxu0
    %v2025 = vadd.f32 %v1817, %v2024
    %v2026 = vpop.f32.mrb[0].mxu0
    %2027 = vmatprep.mubr.bf16.mxu0 0
    %2028 = vmatmul.mubr.bf16.gmra.mrb[0].mxu0 %v1883
    %v2029 = vpop.f32.mrb[0].mxu0
    %v2030 = vadd.f32 %v1817, %v2029
    %v2031 = vpop.f32.mrb[0].mxu0
    %v2032 = vpop.f32.mrb[0].mxu0
    %v2033 = vadd.f32 %v1817, %v2032
    %v2034 = vpop.f32.mrb[0].mxu0
    %2035 = vmatprep.mubr.bf16.mxu0 0
    %2036 = vmatmul.mubr.bf16.gmra.mrb[0].mxu0 %v1886
    %v2037 = vpop.f32.mrb[0].mxu0
    %v2038 = vadd.f32 %v1817, %v2037
    %v2039 = vpop.f32.mrb[0].mxu0
    %v2040 = vpop.f32.mrb[0].mxu0
    %v2041 = vadd.f32 %v1817, %v2040
    %v2042 = vpop.f32.mrb[0].mxu0
    %2043 = vmatprep.mubr.bf16.mxu0 0
    %2044 = vmatmul.mubr.bf16.gmra.mrb[0].mxu0 %v1889
    %v2045 = vpop.f32.mrb[0].mxu0
    %v2046 = vadd.f32 %v1817, %v2045
    %v2047 = vpop.f32.mrb[0].mxu0
    %v2048 = vpop.f32.mrb[0].mxu0
    %v2049 = vadd.f32 %v1817, %v2048
    %v2050 = vpop.f32.mrb[0].mxu0
    %2051 = vdwg.mxu0
    %v2052 = vlaneseq
    %v2053 = vand.u32 %v2052, 127
    %vm2054 = vcmp.lt.s32.totalorder %v2053, 4
    %v2055 = vsel %vm2054, %v1926, -inf
    %v2056 = vsel %vm2054, %v1929, -inf
    %v2057 = vsel %vm2054, %v1934, -inf
    %v2058 = vsel %vm2054, %v1937, -inf
    %v2059 = vsel %vm2054, %v1942, -inf
    %v2060 = vsel %vm2054, %v1945, -inf
    %v2061 = vsel %vm2054, %v1950, -inf
    %v2062 = vsel %vm2054, %v1953, -inf
    %v2063 = vsel %vm2054, %v1958, -inf
    %v2064 = vsel %vm2054, %v1961, -inf
    %v2065 = vsel %vm2054, %v1966, -inf
    %v2066 = vsel %vm2054, %v1969, -inf
    %v2067 = vsel %vm2054, %v1974, -inf
    %v2068 = vsel %vm2054, %v1977, -inf
    %v2069 = vsel %vm2054, %v1982, -inf
    %v2070 = vsel %vm2054, %v1985, -inf
    %v2071 = vsel %vm2054, %v1990, -inf
    %v2072 = vsel %vm2054, %v1993, -inf
    %v2073 = vsel %vm2054, %v1998, -inf
    %v2074 = vsel %vm2054, %v2001, -inf
    %v2075 = vsel %vm2054, %v2006, -inf
    %v2076 = vsel %vm2054, %v2009, -inf
    %v2077 = vsel %vm2054, %v2014, -inf
    %v2078 = vsel %vm2054, %v2017, -inf
    %v2079 = vsel %vm2054, %v2022, -inf
    %v2080 = vsel %vm2054, %v2025, -inf
    %v2081 = vsel %vm2054, %v2030, -inf
    %v2082 = vsel %vm2054, %v2033, -inf
    %v2083 = vsel %vm2054, %v2038, -inf
    %v2084 = vsel %vm2054, %v2041, -inf
    %v2085 = vsel %vm2054, %v2046, -inf
    %v2086 = vsel %vm2054, %v2049, -inf
    %2087 = vmax.xlane.f32.xlu0 %v2055
    %v2088 = vpop.xlane.xlu0 %2087
    %2089 = vmax.xlane.f32.xlu0 %v2056
    %v2090 = vpop.xlane.xlu0 %2089
    %2091 = vmax.xlane.f32.xlu0 %v2057
    %v2092 = vpop.xlane.xlu0 %2091
    %2093 = vmax.xlane.f32.xlu0 %v2058
    %v2094 = vpop.xlane.xlu0 %2093
    %2095 = vmax.xlane.f32.xlu0 %v2059
    %v2096 = vpop.xlane.xlu0 %2095
    %2097 = vmax.xlane.f32.xlu0 %v2060
    %v2098 = vpop.xlane.xlu0 %2097
    %2099 = vmax.xlane.f32.xlu0 %v2061
    %v2100 = vpop.xlane.xlu0 %2099
    %2101 = vmax.xlane.f32.xlu0 %v2062
    %v2102 = vpop.xlane.xlu0 %2101
    %2103 = vmax.xlane.f32.xlu0 %v2063
    %v2104 = vpop.xlane.xlu0 %2103
    %2105 = vmax.xlane.f32.xlu0 %v2064
    %v2106 = vpop.xlane.xlu0 %2105
    %2107 = vmax.xlane.f32.xlu0 %v2065
    %v2108 = vpop.xlane.xlu0 %2107
    %2109 = vmax.xlane.f32.xlu0 %v2066
    %v2110 = vpop.xlane.xlu0 %2109
    %2111 = vmax.xlane.f32.xlu0 %v2067
    %v2112 = vpop.xlane.xlu0 %2111
    %2113 = vmax.xlane.f32.xlu0 %v2068
    %v2114 = vpop.xlane.xlu0 %2113
    %2115 = vmax.xlane.f32.xlu0 %v2069
    %v2116 = vpop.xlane.xlu0 %2115
    %2117 = vmax.xlane.f32.xlu0 %v2070
    %v2118 = vpop.xlane.xlu0 %2117
    %2119 = vmax.xlane.f32.xlu0 %v2071
    %v2120 = vpop.xlane.xlu0 %2119
    %2121 = vmax.xlane.f32.xlu0 %v2072
    %v2122 = vpop.xlane.xlu0 %2121
    %2123 = vmax.xlane.f32.xlu0 %v2073
    %v2124 = vpop.xlane.xlu0 %2123
    %2125 = vmax.xlane.f32.xlu0 %v2074
    %v2126 = vpop.xlane.xlu0 %2125
    %2127 = vmax.xlane.f32.xlu0 %v2075
    %v2128 = vpop.xlane.xlu0 %2127
    %2129 = vmax.xlane.f32.xlu0 %v2076
    %v2130 = vpop.xlane.xlu0 %2129
    %2131 = vmax.xlane.f32.xlu0 %v2077
    %v2132 = vpop.xlane.xlu0 %2131
    %2133 = vmax.xlane.f32.xlu0 %v2078
    %v2134 = vpop.xlane.xlu0 %2133
    %2135 = vmax.xlane.f32.xlu0 %v2079
    %v2136 = vpop.xlane.xlu0 %2135
    %2137 = vmax.xlane.f32.xlu0 %v2080
    %v2138 = vpop.xlane.xlu0 %2137
    %2139 = vmax.xlane.f32.xlu0 %v2081
    %v2140 = vpop.xlane.xlu0 %2139
    %2141 = vmax.xlane.f32.xlu0 %v2082
    %v2142 = vpop.xlane.xlu0 %2141
    %2143 = vmax.xlane.f32.xlu0 %v2083
    %v2144 = vpop.xlane.xlu0 %2143
    %2145 = vmax.xlane.f32.xlu0 %v2084
    %v2146 = vpop.xlane.xlu0 %2145
    %2147 = vmax.xlane.f32.xlu0 %v2085
    %v2148 = vpop.xlane.xlu0 %2147
    %2149 = vmax.xlane.f32.xlu0 %v2086
    %v2150 = vpop.xlane.xlu0 %2149
    %v2151 = vsub.f32 %v2055, %v2088
    %v2152 = vsub.f32 %v2056, %v2090
    %v2153 = vsub.f32 %v2057, %v2092
    %v2154 = vsub.f32 %v2058, %v2094
    %v2155 = vsub.f32 %v2059, %v2096
    %v2156 = vsub.f32 %v2060, %v2098
    %v2157 = vsub.f32 %v2061, %v2100
    %v2158 = vsub.f32 %v2062, %v2102
    %v2159 = vsub.f32 %v2063, %v2104
    %v2160 = vsub.f32 %v2064, %v2106
    %v2161 = vsub.f32 %v2065, %v2108
    %v2162 = vsub.f32 %v2066, %v2110
    %v2163 = vsub.f32 %v2067, %v2112
    %v2164 = vsub.f32 %v2068, %v2114
    %v2165 = vsub.f32 %v2069, %v2116
    %v2166 = vsub.f32 %v2070, %v2118
    %v2167 = vsub.f32 %v2071, %v2120
    %v2168 = vsub.f32 %v2072, %v2122
    %v2169 = vsub.f32 %v2073, %v2124
    %v2170 = vsub.f32 %v2074, %v2126
    %v2171 = vsub.f32 %v2075, %v2128
    %v2172 = vsub.f32 %v2076, %v2130
    %v2173 = vsub.f32 %v2077, %v2132
    %v2174 = vsub.f32 %v2078, %v2134
    %v2175 = vsub.f32 %v2079, %v2136
    %v2176 = vsub.f32 %v2080, %v2138
    %v2177 = vsub.f32 %v2081, %v2140
    %v2178 = vsub.f32 %v2082, %v2142
    %v2179 = vsub.f32 %v2083, %v2144
    %v2180 = vsub.f32 %v2084, %v2146
    %v2181 = vsub.f32 %v2085, %v2148
    %v2182 = vsub.f32 %v2086, %v2150
    %v2183 = vmul.f32 %v2151, 1.442695
    %v2184 = vpow.pop %v2183
    %v2185 = vmul.f32 %v2152, 1.442695
    %v2186 = vpow.pop %v2185
    %v2187 = vmul.f32 %v2153, 1.442695
    %v2188 = vpow.pop %v2187
    %v2189 = vmul.f32 %v2154, 1.442695
    %v2190 = vpow.pop %v2189
    %v2191 = vmul.f32 %v2155, 1.442695
    %v2192 = vpow.pop %v2191
    %v2193 = vmul.f32 %v2156, 1.442695
    %v2194 = vpow.pop %v2193
    %v2195 = vmul.f32 %v2157, 1.442695
    %v2196 = vpow.pop %v2195
    %v2197 = vmul.f32 %v2158, 1.442695
    %v2198 = vpow.pop %v2197
    %v2199 = vmul.f32 %v2159, 1.442695
    %v2200 = vpow.pop %v2199
    %v2201 = vmul.f32 %v2160, 1.442695
    %v2202 = vpow.pop %v2201
    %v2203 = vmul.f32 %v2161, 1.442695
    %v2204 = vpow.pop %v2203
    %v2205 = vmul.f32 %v2162, 1.442695
    %v2206 = vpow.pop %v2205
    %v2207 = vmul.f32 %v2163, 1.442695
    %v2208 = vpow.pop %v2207
    %v2209 = vmul.f32 %v2164, 1.442695
    %v2210 = vpow.pop %v2209
    %v2211 = vmul.f32 %v2165, 1.442695
    %v2212 = vpow.pop %v2211
    %v2213 = vmul.f32 %v2166, 1.442695
    %v2214 = vpow.pop %v2213
    %v2215 = vmul.f32 %v2167, 1.442695
    %v2216 = vpow.pop %v2215
    %v2217 = vmul.f32 %v2168, 1.442695
    %v2218 = vpow.pop %v2217
    %v2219 = vmul.f32 %v2169, 1.442695
    %v2220 = vpow.pop %v2219
    %v2221 = vmul.f32 %v2170, 1.442695
    %v2222 = vpow.pop %v2221
    %v2223 = vmul.f32 %v2171, 1.442695
    %v2224 = vpow.pop %v2223
    %v2225 = vmul.f32 %v2172, 1.442695
    %v2226 = vpow.pop %v2225
    %v2227 = vmul.f32 %v2173, 1.442695
    %v2228 = vpow.pop %v2227
    %v2229 = vmul.f32 %v2174, 1.442695
    %v2230 = vpow.pop %v2229
    %v2231 = vmul.f32 %v2175, 1.442695
    %v2232 = vpow.pop %v2231
    %v2233 = vmul.f32 %v2176, 1.442695
    %v2234 = vpow.pop %v2233
    %v2235 = vmul.f32 %v2177, 1.442695
    %v2236 = vpow.pop %v2235
    %v2237 = vmul.f32 %v2178, 1.442695
    %v2238 = vpow.pop %v2237
    %v2239 = vmul.f32 %v2179, 1.442695
    %v2240 = vpow.pop %v2239
    %v2241 = vmul.f32 %v2180, 1.442695
    %v2242 = vpow.pop %v2241
    %v2243 = vmul.f32 %v2181, 1.442695
    %v2244 = vpow.pop %v2243
    %v2245 = vmul.f32 %v2182, 1.442695
    %v2246 = vpow.pop %v2245
    %2247 = vadd.xlane.f32.xlu0 %v2184
    %v2248 = vpop.xlane.xlu0 %2247
    %2249 = vadd.xlane.f32.xlu0 %v2186
    %v2250 = vpop.xlane.xlu0 %2249
    %2251 = vadd.xlane.f32.xlu0 %v2188
    %v2252 = vpop.xlane.xlu0 %2251
    %2253 = vadd.xlane.f32.xlu0 %v2190
    %v2254 = vpop.xlane.xlu0 %2253
    %2255 = vadd.xlane.f32.xlu0 %v2192
    %v2256 = vpop.xlane.xlu0 %2255
    %2257 = vadd.xlane.f32.xlu0 %v2194
    %v2258 = vpop.xlane.xlu0 %2257
    %2259 = vadd.xlane.f32.xlu0 %v2196
    %v2260 = vpop.xlane.xlu0 %2259
    %2261 = vadd.xlane.f32.xlu0 %v2198
    %v2262 = vpop.xlane.xlu0 %2261
    %2263 = vadd.xlane.f32.xlu0 %v2200
    %v2264 = vpop.xlane.xlu0 %2263
    %2265 = vadd.xlane.f32.xlu0 %v2202
    %v2266 = vpop.xlane.xlu0 %2265
    %2267 = vadd.xlane.f32.xlu0 %v2204
    %v2268 = vpop.xlane.xlu0 %2267
    %2269 = vadd.xlane.f32.xlu0 %v2206
    %v2270 = vpop.xlane.xlu0 %2269
    %2271 = vadd.xlane.f32.xlu0 %v2208
    %v2272 = vpop.xlane.xlu0 %2271
    %2273 = vadd.xlane.f32.xlu0 %v2210
    %v2274 = vpop.xlane.xlu0 %2273
    %2275 = vadd.xlane.f32.xlu0 %v2212
    %v2276 = vpop.xlane.xlu0 %2275
    %2277 = vadd.xlane.f32.xlu0 %v2214
    %v2278 = vpop.xlane.xlu0 %2277
    %2279 = vadd.xlane.f32.xlu0 %v2216
    %v2280 = vpop.xlane.xlu0 %2279
    %2281 = vadd.xlane.f32.xlu0 %v2218
    %v2282 = vpop.xlane.xlu0 %2281
    %2283 = vadd.xlane.f32.xlu0 %v2220
    %v2284 = vpop.xlane.xlu0 %2283
    %2285 = vadd.xlane.f32.xlu0 %v2222
    %v2286 = vpop.xlane.xlu0 %2285
    %2287 = vadd.xlane.f32.xlu0 %v2224
    %v2288 = vpop.xlane.xlu0 %2287
    %2289 = vadd.xlane.f32.xlu0 %v2226
    %v2290 = vpop.xlane.xlu0 %2289
    %2291 = vadd.xlane.f32.xlu0 %v2228
    %v2292 = vpop.xlane.xlu0 %2291
    %2293 = vadd.xlane.f32.xlu0 %v2230
    %v2294 = vpop.xlane.xlu0 %2293
    %2295 = vadd.xlane.f32.xlu0 %v2232
    %v2296 = vpop.xlane.xlu0 %2295
    %2297 = vadd.xlane.f32.xlu0 %v2234
    %v2298 = vpop.xlane.xlu0 %2297
    %2299 = vadd.xlane.f32.xlu0 %v2236
    %v2300 = vpop.xlane.xlu0 %2299
    %2301 = vadd.xlane.f32.xlu0 %v2238
    %v2302 = vpop.xlane.xlu0 %2301
    %2303 = vadd.xlane.f32.xlu0 %v2240
    %v2304 = vpop.xlane.xlu0 %2303
    %2305 = vadd.xlane.f32.xlu0 %v2242
    %v2306 = vpop.xlane.xlu0 %2305
    %2307 = vadd.xlane.f32.xlu0 %v2244
    %v2308 = vpop.xlane.xlu0 %2307
    %2309 = vadd.xlane.f32.xlu0 %v2246
    %v2310 = vpop.xlane.xlu0 %2309
    %v2311 = vrcp.pop %v2248
    %v2312 = vrcp.pop %v2250
    %v2313 = vrcp.pop %v2252
    %v2314 = vrcp.pop %v2254
    %v2315 = vrcp.pop %v2256
    %v2316 = vrcp.pop %v2258
    %v2317 = vrcp.pop %v2260
    %v2318 = vrcp.pop %v2262
    %v2319 = vrcp.pop %v2264
    %v2320 = vrcp.pop %v2266
    %v2321 = vrcp.pop %v2268
    %v2322 = vrcp.pop %v2270
    %v2323 = vrcp.pop %v2272
    %v2324 = vrcp.pop %v2274
    %v2325 = vrcp.pop %v2276
    %v2326 = vrcp.pop %v2278
    %v2327 = vrcp.pop %v2280
    %v2328 = vrcp.pop %v2282
    %v2329 = vrcp.pop %v2284
    %v2330 = vrcp.pop %v2286
    %v2331 = vrcp.pop %v2288
    %v2332 = vrcp.pop %v2290
    %v2333 = vrcp.pop %v2292
    %v2334 = vrcp.pop %v2294
    %v2335 = vrcp.pop %v2296
    %v2336 = vrcp.pop %v2298
    %v2337 = vrcp.pop %v2300
    %v2338 = vrcp.pop %v2302
    %v2339 = vrcp.pop %v2304
    %v2340 = vrcp.pop %v2306
    %v2341 = vrcp.pop %v2308
    %v2342 = vrcp.pop %v2310
    %v2343 = vmul.f32 %v2184, %v2311
    %v2344 = vmul.f32 %v2186, %v2312
    %v2345 = vmul.f32 %v2188, %v2313
    %v2346 = vmul.f32 %v2190, %v2314
    %v2347 = vmul.f32 %v2192, %v2315
    %v2348 = vmul.f32 %v2194, %v2316
    %v2349 = vmul.f32 %v2196, %v2317
    %v2350 = vmul.f32 %v2198, %v2318
    %v2351 = vmul.f32 %v2200, %v2319
    %v2352 = vmul.f32 %v2202, %v2320
    %v2353 = vmul.f32 %v2204, %v2321
    %v2354 = vmul.f32 %v2206, %v2322
    %v2355 = vmul.f32 %v2208, %v2323
    %v2356 = vmul.f32 %v2210, %v2324
    %v2357 = vmul.f32 %v2212, %v2325
    %v2358 = vmul.f32 %v2214, %v2326
    %v2359 = vmul.f32 %v2216, %v2327
    %v2360 = vmul.f32 %v2218, %v2328
    %v2361 = vmul.f32 %v2220, %v2329
    %v2362 = vmul.f32 %v2222, %v2330
    %v2363 = vmul.f32 %v2224, %v2331
    %v2364 = vmul.f32 %v2226, %v2332
    %v2365 = vmul.f32 %v2228, %v2333
    %v2366 = vmul.f32 %v2230, %v2334
    %v2367 = vmul.f32 %v2232, %v2335
    %v2368 = vmul.f32 %v2234, %v2336
    %v2369 = vmul.f32 %v2236, %v2337
    %v2370 = vmul.f32 %v2238, %v2338
    %v2371 = vmul.f32 %v2240, %v2339
    %v2372 = vmul.f32 %v2242, %v2340
    %v2373 = vmul.f32 %v2244, %v2341
    %v2374 = vmul.f32 %v2246, %v2342
    %vm2375 = vcmp.eq.s32.totalorder %v2053, 4
    %v2376 = vsel %vm2375, %v1926, %v2343
    %v2377 = vsel %vm2375, %v1929, %v2344
    %v2378 = vsel %vm2375, %v1934, %v2345
    %v2379 = vsel %vm2375, %v1937, %v2346
    %v2380 = vsel %vm2375, %v1942, %v2347
    %v2381 = vsel %vm2375, %v1945, %v2348
    %v2382 = vsel %vm2375, %v1950, %v2349
    %v2383 = vsel %vm2375, %v1953, %v2350
    %v2384 = vsel %vm2375, %v1958, %v2351
    %v2385 = vsel %vm2375, %v1961, %v2352
    %v2386 = vsel %vm2375, %v1966, %v2353
    %v2387 = vsel %vm2375, %v1969, %v2354
    %v2388 = vsel %vm2375, %v1974, %v2355
    %v2389 = vsel %vm2375, %v1977, %v2356
    %v2390 = vsel %vm2375, %v1982, %v2357
    %v2391 = vsel %vm2375, %v1985, %v2358
    %v2392 = vsel %vm2375, %v1990, %v2359
    %v2393 = vsel %vm2375, %v1993, %v2360
    %v2394 = vsel %vm2375, %v1998, %v2361
    %v2395 = vsel %vm2375, %v2001, %v2362
    %v2396 = vsel %vm2375, %v2006, %v2363
    %v2397 = vsel %vm2375, %v2009, %v2364
    %v2398 = vsel %vm2375, %v2014, %v2365
    %v2399 = vsel %vm2375, %v2017, %v2366
    %v2400 = vsel %vm2375, %v2022, %v2367
    %v2401 = vsel %vm2375, %v2025, %v2368
    %v2402 = vsel %vm2375, %v2030, %v2369
    %v2403 = vsel %vm2375, %v2033, %v2370
    %v2404 = vsel %vm2375, %v2038, %v2371
    %v2405 = vsel %vm2375, %v2041, %v2372
    %v2406 = vsel %vm2375, %v2046, %v2373
    %v2407 = vsel %vm2375, %v2049, %v2374
    %2408 = vst [vmem:[#allocation2] sm:$0xff] %v2376
    %2409 = vst [vmem:[#allocation2 + $0x8] sm:$0xff] %v2377
    %2410 = vst [vmem:[#allocation2 + $0x10] sm:$0xff] %v2378
    %2411 = vst [vmem:[#allocation2 + $0x18] sm:$0xff] %v2379
    %2412 = vst [vmem:[#allocation2 + $0x20] sm:$0xff] %v2380
    %2413 = vst [vmem:[#allocation2 + $0x28] sm:$0xff] %v2381
    %2414 = vst [vmem:[#allocation2 + $0x30] sm:$0xff] %v2382
    %2415 = vst [vmem:[#allocation2 + $0x38] sm:$0xff] %v2383
    %2416 = vst [vmem:[#allocation2 + $0x40] sm:$0xff] %v2384
    %2417 = vst [vmem:[#allocation2 + $0x48] sm:$0xff] %v2385
    %2418 = vst [vmem:[#allocation2 + $0x50] sm:$0xff] %v2386
    %2419 = vst [vmem:[#allocation2 + $0x58] sm:$0xff] %v2387
    %2420 = vst [vmem:[#allocation2 + $0x60] sm:$0xff] %v2388
    %2421 = vst [vmem:[#allocation2 + $0x68] sm:$0xff] %v2389
    %2422 = vst [vmem:[#allocation2 + $0x70] sm:$0xff] %v2390
    %2423 = vst [vmem:[#allocation2 + $0x78] sm:$0xff] %v2391
    %2424 = vst [vmem:[#allocation2 + $0x80] sm:$0xff] %v2392
    %2425 = vst [vmem:[#allocation2 + $0x88] sm:$0xff] %v2393
    %2426 = vst [vmem:[#allocation2 + $0x90] sm:$0xff] %v2394
    %2427 = vst [vmem:[#allocation2 + $0x98] sm:$0xff] %v2395
    %2428 = vst [vmem:[#allocation2 + $0xa0] sm:$0xff] %v2396
    %2429 = vst [vmem:[#allocation2 + $0xa8] sm:$0xff] %v2397
    %2430 = vst [vmem:[#allocation2 + $0xb0] sm:$0xff] %v2398
    %2431 = vst [vmem:[#allocation2 + $0xb8] sm:$0xff] %v2399
    %2432 = vst [vmem:[#allocation2 + $0xc0] sm:$0xff] %v2400
    %2433 = vst [vmem:[#allocation2 + $0xc8] sm:$0xff] %v2401
    %2434 = vst [vmem:[#allocation2 + $0xd0] sm:$0xff] %v2402
    %2435 = vst [vmem:[#allocation2 + $0xd8] sm:$0xff] %v2403
    %2436 = vst [vmem:[#allocation2 + $0xe0] sm:$0xff] %v2404
    %2437 = vst [vmem:[#allocation2 + $0xe8] sm:$0xff] %v2405
    %2438 = vst [vmem:[#allocation2 + $0xf0] sm:$0xff] %v2406
    %2439 = vst [vmem:[#allocation2 + $0xf8] sm:$0xff] %v2407
    // Predicated region
    $region30: #{tpu_custom_call.1} parent=1 // pred_check
      _
    $region31: #{tpu_custom_call.1} parent=1 // pred_check_branch
      %2441 = sbr.rel (0) target = $region33
    $region32: #{tpu_custom_call.1} parent=1 // pred_region
      %s2443 = ssub.s32 4096, 4096
      %2444 = vsyncadd [#allocation3], %s2443
      %s2445 = sshll.u32 [#allocation2], 4
      %s2446 = int_to_ptr.vmem [resolvable:$true] %s2445
      %2451 = dma.vmem_to_hbm [thread:$0]  %s2446, 4096, %s7, [#allocation3], 128, 128, 8
    $region33: #{tpu_custom_call.1} parent=1 // pred_fallthru
      _
    // Predicated region
    $region34: #{tpu_custom_call.1} parent=1 // pred_check
      _
    $region35: #{tpu_custom_call.1} parent=1 // pred_check_branch
      %2453 = sbr.rel (0) target = $region37
    $region36: #{tpu_custom_call.1} parent=1 // pred_region
      %2454 = dma.done [#allocation3], 4096
    $region37: #{tpu_custom_call.1} parent=1 // pred_fallthru
      _
    %2455 = vsyncpa [#allocation3], 1

// kernel: tpu_custom_call.1
$region0: #{tpu_custom_call.1}
  #allocation0 [shape = 'u32[]', space=smem, size = 0x4, offset = 0x4, fixed_abs, tag = 'smem constant byte address 0x4 - core index']
  #allocation1 [shape = 'u32[144,128]{1,0:T(1,128)}', space=vmem, size = 0x12000, scoped, tag = 'internal scratch']
  %s0 = inlined_call_operand.vmem [shape: f32[256,32], index: 0, kind: input, shape index: {}]
  %s1 = inlined_call_operand.vmem [shape: bf16[32,128], index: 1, kind: input, shape index: {}]
  %s2 = inlined_call_operand.vmem [shape: f32[3,128], index: 2, kind: input, shape index: {}]
  %s3 = inlined_call_operand.vmem [shape: bf16[128,64], index: 3, kind: input, shape index: {}]
  %s4 = inlined_call_operand.vmem [shape: f32[3,64], index: 4, kind: input, shape index: {}]
  %s5 = inlined_call_operand.vmem [shape: bf16[64,128], index: 5, kind: input, shape index: {}]
  %s6 = inlined_call_operand.vmem [shape: f32[1,128], index: 6, kind: input, shape index: {}]
  %s7 = inlined_call_operand.hbm [shape: f32[256,128], index: 7, kind: output, shape index: {}]
  %s8 = sld [smem:[#allocation0]]
  $region38: #{tpu_custom_call.1} parent=0
    _
  %s10 = ssub.s32 1, %s8
  %s11 = scalar_select 0, %s10, %s8
  $region1: #{tpu_custom_call.1} parent=0
    #allocation2 [shape = 'u8[131072]{0}', space=vmem, size = 0x20000, scoped, tag = 'output window, operand 0, single buffered']
    #allocation3 [shape = 's32[1]{0}', space=sflag, size = 0x4, scoped, tag = 'scoped memory for tpu_custom_call.1']
    %12 = vsyncpa [#allocation3], 0
    // Predicated region
    $region2: #{tpu_custom_call.1} parent=1 // pred_check
      _
    $region3: #{tpu_custom_call.1} parent=1 // pred_check_branch
      %14 = sbr.rel (0) target = $region5
    $region4: #{tpu_custom_call.1} parent=1 // pred_region
      _
    $region5: #{tpu_custom_call.1} parent=1 // pred_fallthru
      _
    // Predicated region
    $region6: #{tpu_custom_call.1} parent=1 // pred_check
      _
    $region7: #{tpu_custom_call.1} parent=1 // pred_check_branch
      %16 = sbr.rel (0) target = $region9
    $region8: #{tpu_custom_call.1} parent=1 // pred_region
      _
    $region9: #{tpu_custom_call.1} parent=1 // pred_fallthru
      _
    // Predicated region
    $region10: #{tpu_custom_call.1} parent=1 // pred_check
      _
    $region11: #{tpu_custom_call.1} parent=1 // pred_check_branch
      %18 = sbr.rel (0) target = $region13
    $region12: #{tpu_custom_call.1} parent=1 // pred_region
      _
    $region13: #{tpu_custom_call.1} parent=1 // pred_fallthru
      _
    // Predicated region
    $region14: #{tpu_custom_call.1} parent=1 // pred_check
      _
    $region15: #{tpu_custom_call.1} parent=1 // pred_check_branch
      %20 = sbr.rel (0) target = $region17
    $region16: #{tpu_custom_call.1} parent=1 // pred_region
      _
    $region17: #{tpu_custom_call.1} parent=1 // pred_fallthru
      _
    // Predicated region
    $region18: #{tpu_custom_call.1} parent=1 // pred_check
      _
    $region19: #{tpu_custom_call.1} parent=1 // pred_check_branch
      %22 = sbr.rel (0) target = $region21
    $region20: #{tpu_custom_call.1} parent=1 // pred_region
      _
    $region21: #{tpu_custom_call.1} parent=1 // pred_fallthru
      _
    // Predicated region
    $region22: #{tpu_custom_call.1} parent=1 // pred_check
      _
    $region23: #{tpu_custom_call.1} parent=1 // pred_check_branch
      %24 = sbr.rel (0) target = $region25
    $region24: #{tpu_custom_call.1} parent=1 // pred_region
      _
    $region25: #{tpu_custom_call.1} parent=1 // pred_fallthru
      _
    // Predicated region
    $region26: #{tpu_custom_call.1} parent=1 // pred_check
      _
    $region27: #{tpu_custom_call.1} parent=1 // pred_check_branch
      %26 = sbr.rel (0) target = $region29
    $region28: #{tpu_custom_call.1} parent=1 // pred_region
      _
    $region29: #{tpu_custom_call.1} parent=1 // pred_fallthru
      _
    %v28 = vld [vmem:[%s0] sm:$0xff]
    %v29 = vld [vmem:[%s0 + $0x8] sm:$0xff]
    %v30 = vld [vmem:[%s0 + $0x10] sm:$0xff]
    %v31 = vld [vmem:[%s0 + $0x18] sm:$0xff]
    %v32 = vld [vmem:[%s0 + $0x20] sm:$0xff]
    %v33 = vld [vmem:[%s0 + $0x28] sm:$0xff]
    %v34 = vld [vmem:[%s0 + $0x30] sm:$0xff]
    %v35 = vld [vmem:[%s0 + $0x38] sm:$0xff]
    %v36 = vld [vmem:[%s0 + $0x40] sm:$0xff]
    %v37 = vld [vmem:[%s0 + $0x48] sm:$0xff]
    %v38 = vld [vmem:[%s0 + $0x50] sm:$0xff]
    %v39 = vld [vmem:[%s0 + $0x58] sm:$0xff]
    %v40 = vld [vmem:[%s0 + $0x60] sm:$0xff]
    %v41 = vld [vmem:[%s0 + $0x68] sm:$0xff]
    %v42 = vld [vmem:[%s0 + $0x70] sm:$0xff]
    %v43 = vld [vmem:[%s0 + $0x78] sm:$0xff]
    %v44 = vld [vmem:[%s0 + $0x80] sm:$0xff]
    %v45 = vld [vmem:[%s0 + $0x88] sm:$0xff]
    %v46 = vld [vmem:[%s0 + $0x90] sm:$0xff]
    %v47 = vld [vmem:[%s0 + $0x98] sm:$0xff]
    %v48 = vld [vmem:[%s0 + $0xa0] sm:$0xff]
    %v49 = vld [vmem:[%s0 + $0xa8] sm:$0xff]
    %v50 = vld [vmem:[%s0 + $0xb0] sm:$0xff]
    %v51 = vld [vmem:[%s0 + $0xb8] sm:$0xff]
    %v52 = vld [vmem:[%s0 + $0xc0] sm:$0xff]
    %v53 = vld [vmem:[%s0 + $0xc8] sm:$0xff]
    %v54 = vld [vmem:[%s0 + $0xd0] sm:$0xff]
    %v55 = vld [vmem:[%s0 + $0xd8] sm:$0xff]
    %v56 = vld [vmem:[%s0 + $0xe0] sm:$0xff]
    %v57 = vld [vmem:[%s0 + $0xe8] sm:$0xff]
    %v58 = vld [vmem:[%s0 + $0xf0] sm:$0xff]
    %v59 = vld [vmem:[%s0 + $0xf8] sm:$0xff]
    %v60 = vld [vmem:[%s2] sm:$0x7]
    %v61 = vpack.c.bf16 %v29, %v28
    %v62 = vpack.c.bf16 %v31, %v30
    %v63 = vpack.c.bf16 %v33, %v32
    %v64 = vpack.c.bf16 %v35, %v34
    %v65 = vpack.c.bf16 %v37, %v36
    %v66 = vpack.c.bf16 %v39, %v38
    %v67 = vpack.c.bf16 %v41, %v40
    %v68 = vpack.c.bf16 %v43, %v42
    %v69 = vpack.c.bf16 %v45, %v44
    %v70 = vpack.c.bf16 %v47, %v46
    %v71 = vpack.c.bf16 %v49, %v48
    %v72 = vpack.c.bf16 %v51, %v50
    %v73 = vpack.c.bf16 %v53, %v52
    %v74 = vpack.c.bf16 %v55, %v54
    %v75 = vpack.c.bf16 %v57, %v56
    %v76 = vpack.c.bf16 %v59, %v58
    %v77 = vld [vmem:[%s1] sm:$0xf]
    %v78 = vld [vmem:[%s1 + $0x4] sm:$0xf]
    %v79 = vld [vmem:[%s1 + $0x8] sm:$0xf]
    %v80 = vld [vmem:[%s1 + $0xc] sm:$0xf]
    %v81 = vlaneseq
    %v82 = vshrl.u32 %v81, 7
    %v83 = vsub.s32 0, %v82
    %v84 = vrot.slane %v60, %v83
    %v89 = vunpack.c.l.b16 %v77
    %v90 = vunpack.c.l.b16 %v78
    %v91 = vunpack.c.l.b16 %v79
    %v92 = vunpack.c.l.b16 %v80
    %v93 = vpack.c.b16 %v90, %v89
    %v94 = vpack.c.b16 %v92, %v91
    %vm97 = vcmask 261120
    %v99 = vsel %vm97, %v61, 0
    %v102 = vsel %vm97, %v62, 0
    %v105 = vsel %vm97, %v63, 0
    %v108 = vsel %vm97, %v64, 0
    %v111 = vsel %vm97, %v65, 0
    %v114 = vsel %vm97, %v66, 0
    %v117 = vsel %vm97, %v67, 0
    %v120 = vsel %vm97, %v68, 0
    %v123 = vsel %vm97, %v69, 0
    %v126 = vsel %vm97, %v70, 0
    %v129 = vsel %vm97, %v71, 0
    %v132 = vsel %vm97, %v72, 0
    %v135 = vsel %vm97, %v73, 0
    %v138 = vsel %vm97, %v74, 0
    %v141 = vsel %vm97, %v75, 0
    %v144 = vsel %vm97, %v76, 0
    %146 = vmatprep.subr.bf16.mxu0 0
    %147 = vmatpush1.bf16.msra.mxu0 %v93
    %148 = vmatprep.subr.bf16.mxu0 0
    %149 = vmatpush1.bf16.msra.mxu0 %v94
    %150 = vmatprep.subr.bf16.mxu0 0
    %151 = vmatpush1.bf16.msra.mxu0 0
    %152 = vmatprep.subr.bf16.mxu0 0
    %153 = vmatpush1.bf16.msra.mxu0 0
    %154 = vmatprep.subr.bf16.mxu0 0
    %155 = vmatpush1.bf16.msra.mxu0 0
    %156 = vmatprep.subr.bf16.mxu0 0
    %157 = vmatpush1.bf16.msra.mxu0 0
    %158 = vmatprep.subr.bf16.mxu0 0
    %159 = vmatpush1.bf16.msra.mxu0 0
    %160 = vmatprep.subr.bf16.mxu0 0
    %161 = vmatpush1.bf16.msra.mxu0 0
    %162 = vmatprep.subr.bf16.mxu0 0
    %163 = vmatpush1.bf16.msra.mxu0 0
    %164 = vmatprep.subr.bf16.mxu0 0
    %165 = vmatpush1.bf16.msra.mxu0 0
    %166 = vmatprep.subr.bf16.mxu0 0
    %167 = vmatpush1.bf16.msra.mxu0 0
    %168 = vmatprep.subr.bf16.mxu0 0
    %169 = vmatpush1.bf16.msra.mxu0 0
    %170 = vmatprep.subr.bf16.mxu0 0
    %171 = vmatpush1.bf16.msra.mxu0 0
    %172 = vmatprep.subr.bf16.mxu0 0
    %173 = vmatpush1.bf16.msra.mxu0 0
    %174 = vmatprep.subr.bf16.mxu0 0
    %175 = vmatpush1.bf16.msra.mxu0 0
    %176 = vmatprep.subr.bf16.mxu0 0
    %177 = vmatpush1.bf16.msra.mxu0 0
    %178 = vmatprep.mubr.bf16.mxu0 0
    %179 = vmatmul.mubr.bf16.gmra.mrb[0].mxu0 %v99
    %v180 = vpop.f32.mrb[0].mxu0
    %v181 = vadd.f32 %v84, %v180
    %v182 = vpop.f32.mrb[0].mxu0
    %v183 = vpop.f32.mrb[0].mxu0
    %v184 = vadd.f32 %v84, %v183
    %v185 = vpop.f32.mrb[0].mxu0
    %186 = vmatprep.mubr.bf16.mxu0 0
    %187 = vmatmul.mubr.bf16.gmra.mrb[0].mxu0 %v102
    %v188 = vpop.f32.mrb[0].mxu0
    %v189 = vadd.f32 %v84, %v188
    %v190 = vpop.f32.mrb[0].mxu0
    %v191 = vpop.f32.mrb[0].mxu0
    %v192 = vadd.f32 %v84, %v191
    %v193 = vpop.f32.mrb[0].mxu0
    %194 = vmatprep.mubr.bf16.mxu0 0
    %195 = vmatmul.mubr.bf16.gmra.mrb[0].mxu0 %v105
    %v196 = vpop.f32.mrb[0].mxu0
    %v197 = vadd.f32 %v84, %v196
    %v198 = vpop.f32.mrb[0].mxu0
    %v199 = vpop.f32.mrb[0].mxu0
    %v200 = vadd.f32 %v84, %v199
    %v201 = vpop.f32.mrb[0].mxu0
    %202 = vmatprep.mubr.bf16.mxu0 0
    %203 = vmatmul.mubr.bf16.gmra.mrb[0].mxu0 %v108
    %v204 = vpop.f32.mrb[0].mxu0
    %v205 = vadd.f32 %v84, %v204
    %v206 = vpop.f32.mrb[0].mxu0
    %v207 = vpop.f32.mrb[0].mxu0
    %v208 = vadd.f32 %v84, %v207
    %v209 = vpop.f32.mrb[0].mxu0
    %210 = vmatprep.mubr.bf16.mxu0 0
    %211 = vmatmul.mubr.bf16.gmra.mrb[0].mxu0 %v111
    %v212 = vpop.f32.mrb[0].mxu0
    %v213 = vadd.f32 %v84, %v212
    %v214 = vpop.f32.mrb[0].mxu0
    %v215 = vpop.f32.mrb[0].mxu0
    %v216 = vadd.f32 %v84, %v215
    %v217 = vpop.f32.mrb[0].mxu0
    %218 = vmatprep.mubr.bf16.mxu0 0
    %219 = vmatmul.mubr.bf16.gmra.mrb[0].mxu0 %v114
    %v220 = vpop.f32.mrb[0].mxu0
    %v221 = vadd.f32 %v84, %v220
    %v222 = vpop.f32.mrb[0].mxu0
    %v223 = vpop.f32.mrb[0].mxu0
    %v224 = vadd.f32 %v84, %v223
    %v225 = vpop.f32.mrb[0].mxu0
    %226 = vmatprep.mubr.bf16.mxu0 0
    %227 = vmatmul.mubr.bf16.gmra.mrb[0].mxu0 %v117
    %v228 = vpop.f32.mrb[0].mxu0
    %v229 = vadd.f32 %v84, %v228
    %v230 = vpop.f32.mrb[0].mxu0
    %v231 = vpop.f32.mrb[0].mxu0
    %v232 = vadd.f32 %v84, %v231
    %v233 = vpop.f32.mrb[0].mxu0
    %234 = vmatprep.mubr.bf16.mxu0 0
    %235 = vmatmul.mubr.bf16.gmra.mrb[0].mxu0 %v120
    %v236 = vpop.f32.mrb[0].mxu0
    %v237 = vadd.f32 %v84, %v236
    %v238 = vpop.f32.mrb[0].mxu0
    %v239 = vpop.f32.mrb[0].mxu0
    %v240 = vadd.f32 %v84, %v239
    %v241 = vpop.f32.mrb[0].mxu0
    %242 = vmatprep.mubr.bf16.mxu0 0
    %243 = vmatmul.mubr.bf16.gmra.mrb[0].mxu0 %v123
    %v244 = vpop.f32.mrb[0].mxu0
    %v245 = vadd.f32 %v84, %v244
    %v246 = vpop.f32.mrb[0].mxu0
    %v247 = vpop.f32.mrb[0].mxu0
    %v248 = vadd.f32 %v84, %v247
    %v249 = vpop.f32.mrb[0].mxu0
    %250 = vmatprep.mubr.bf16.mxu0 0
    %251 = vmatmul.mubr.bf16.gmra.mrb[0].mxu0 %v126
    %v252 = vpop.f32.mrb[0].mxu0
    %v253 = vadd.f32 %v84, %v252
    %v254 = vpop.f32.mrb[0].mxu0
    %v255 = vpop.f32.mrb[0].mxu0
    %v256 = vadd.f32 %v84, %v255
    %v257 = vpop.f32.mrb[0].mxu0
    %258 = vmatprep.mubr.bf16.mxu0 0
    %259 = vmatmul.mubr.bf16.gmra.mrb[0].mxu0 %v129
    %v260 = vpop.f32.mrb[0].mxu0
    %v261 = vadd.f32 %v84, %v260
    %v262 = vpop.f32.mrb[0].mxu0
    %v263 = vpop.f32.mrb[0].mxu0
    %v264 = vadd.f32 %v84, %v263
    %v265 = vpop.f32.mrb[0].mxu0
    %266 = vmatprep.mubr.bf16.mxu0 0
    %267 = vmatmul.mubr.bf16.gmra.mrb[0].mxu0 %v132
    %v268 = vpop.f32.mrb[0].mxu0
    %v269 = vadd.f32 %v84, %v268
    %v270 = vpop.f32.mrb[0].mxu0
    %v271 = vpop.f32.mrb[0].mxu0
    %v272 = vadd.f32 %v84, %v271
    %v273 = vpop.f32.mrb[0].mxu0
    %274 = vmatprep.mubr.bf16.mxu0 0
    %275 = vmatmul.mubr.bf16.gmra.mrb[0].mxu0 %v135
    %v276 = vpop.f32.mrb[0].mxu0
    %v277 = vadd.f32 %v84, %v276
    %v278 = vpop.f32.mrb[0].mxu0
    %v279 = vpop.f32.mrb[0].mxu0
    %v280 = vadd.f32 %v84, %v279
    %v281 = vpop.f32.mrb[0].mxu0
    %282 = vmatprep.mubr.bf16.mxu0 0
    %283 = vmatmul.mubr.bf16.gmra.mrb[0].mxu0 %v138
    %v284 = vpop.f32.mrb[0].mxu0
    %v285 = vadd.f32 %v84, %v284
    %v286 = vpop.f32.mrb[0].mxu0
    %v287 = vpop.f32.mrb[0].mxu0
    %v288 = vadd.f32 %v84, %v287
    %v289 = vpop.f32.mrb[0].mxu0
    %290 = vmatprep.mubr.bf16.mxu0 0
    %291 = vmatmul.mubr.bf16.gmra.mrb[0].mxu0 %v141
    %v292 = vpop.f32.mrb[0].mxu0
    %v293 = vadd.f32 %v84, %v292
    %v294 = vpop.f32.mrb[0].mxu0
    %v295 = vpop.f32.mrb[0].mxu0
    %v296 = vadd.f32 %v84, %v295
    %v297 = vpop.f32.mrb[0].mxu0
    %298 = vmatprep.mubr.bf16.mxu0 0
    %299 = vmatmul.mubr.bf16.gmra.mrb[0].mxu0 %v144
    %v300 = vpop.f32.mrb[0].mxu0
    %v301 = vadd.f32 %v84, %v300
    %v302 = vpop.f32.mrb[0].mxu0
    %v303 = vpop.f32.mrb[0].mxu0
    %v304 = vadd.f32 %v84, %v303
    %v305 = vpop.f32.mrb[0].mxu0
    %306 = vdwg.mxu0
    %307 = vadd.xlane.f32.xlu0 %v181
    %v308 = vpop.xlane.xlu0 %307
    %309 = vadd.xlane.f32.xlu0 %v184
    %v310 = vpop.xlane.xlu0 %309
    %311 = vadd.xlane.f32.xlu0 %v189
    %v312 = vpop.xlane.xlu0 %311
    %313 = vadd.xlane.f32.xlu0 %v192
    %v314 = vpop.xlane.xlu0 %313
    %315 = vadd.xlane.f32.xlu0 %v197
    %v316 = vpop.xlane.xlu0 %315
    %317 = vadd.xlane.f32.xlu0 %v200
    %v318 = vpop.xlane.xlu0 %317
    %319 = vadd.xlane.f32.xlu0 %v205
    %v320 = vpop.xlane.xlu0 %319
    %321 = vadd.xlane.f32.xlu0 %v208
    %v322 = vpop.xlane.xlu0 %321
    %323 = vadd.xlane.f32.xlu0 %v213
    %v324 = vpop.xlane.xlu0 %323
    %325 = vadd.xlane.f32.xlu0 %v216
    %v326 = vpop.xlane.xlu0 %325
    %327 = vadd.xlane.f32.xlu0 %v221
    %v328 = vpop.xlane.xlu0 %327
    %329 = vadd.xlane.f32.xlu0 %v224
    %v330 = vpop.xlane.xlu0 %329
    %331 = vadd.xlane.f32.xlu0 %v229
    %v332 = vpop.xlane.xlu0 %331
    %333 = vadd.xlane.f32.xlu0 %v232
    %v334 = vpop.xlane.xlu0 %333
    %335 = vadd.xlane.f32.xlu0 %v237
    %v336 = vpop.xlane.xlu0 %335
    %337 = vadd.xlane.f32.xlu0 %v240
    %v338 = vpop.xlane.xlu0 %337
    %339 = vadd.xlane.f32.xlu0 %v245
    %v340 = vpop.xlane.xlu0 %339
    %341 = vadd.xlane.f32.xlu0 %v248
    %v342 = vpop.xlane.xlu0 %341
    %343 = vadd.xlane.f32.xlu0 %v253
    %v344 = vpop.xlane.xlu0 %343
    %345 = vadd.xlane.f32.xlu0 %v256
    %v346 = vpop.xlane.xlu0 %345
    %347 = vadd.xlane.f32.xlu0 %v261
    %v348 = vpop.xlane.xlu0 %347
    %349 = vadd.xlane.f32.xlu0 %v264
    %v350 = vpop.xlane.xlu0 %349
    %351 = vadd.xlane.f32.xlu0 %v269
    %v352 = vpop.xlane.xlu0 %351
    %353 = vadd.xlane.f32.xlu0 %v272
    %v354 = vpop.xlane.xlu0 %353
    %355 = vadd.xlane.f32.xlu0 %v277
    %v356 = vpop.xlane.xlu0 %355
    %357 = vadd.xlane.f32.xlu0 %v280
    %v358 = vpop.xlane.xlu0 %357
    %359 = vadd.xlane.f32.xlu0 %v285
    %v360 = vpop.xlane.xlu0 %359
    %361 = vadd.xlane.f32.xlu0 %v288
    %v362 = vpop.xlane.xlu0 %361
    %363 = vadd.xlane.f32.xlu0 %v293
    %v364 = vpop.xlane.xlu0 %363
    %365 = vadd.xlane.f32.xlu0 %v296
    %v366 = vpop.xlane.xlu0 %365
    %367 = vadd.xlane.f32.xlu0 %v301
    %v368 = vpop.xlane.xlu0 %367
    %369 = vadd.xlane.f32.xlu0 %v304
    %v370 = vpop.xlane.xlu0 %369
    %v371 = vrcp.pop 128.0
    %v372 = vmul.f32 %v308, %v371
    %v373 = vmul.f32 %v310, %v371
    %v374 = vmul.f32 %v312, %v371
    %v375 = vmul.f32 %v314, %v371
    %v376 = vmul.f32 %v316, %v371
    %v377 = vmul.f32 %v318, %v371
    %v378 = vmul.f32 %v320, %v371
    %v379 = vmul.f32 %v322, %v371
    %v380 = vmul.f32 %v324, %v371
    %v381 = vmul.f32 %v326, %v371
    %v382 = vmul.f32 %v328, %v371
    %v383 = vmul.f32 %v330, %v371
    %v384 = vmul.f32 %v332, %v371
    %v385 = vmul.f32 %v334, %v371
    %v386 = vmul.f32 %v336, %v371
    %v387 = vmul.f32 %v338, %v371
    %v388 = vmul.f32 %v340, %v371
    %v389 = vmul.f32 %v342, %v371
    %v390 = vmul.f32 %v344, %v371
    %v391 = vmul.f32 %v346, %v371
    %v392 = vmul.f32 %v348, %v371
    %v393 = vmul.f32 %v350, %v371
    %v394 = vmul.f32 %v352, %v371
    %v395 = vmul.f32 %v354, %v371
    %v396 = vmul.f32 %v356, %v371
    %v397 = vmul.f32 %v358, %v371
    %v398 = vmul.f32 %v360, %v371
    %v399 = vmul.f32 %v362, %v371
    %v400 = vmul.f32 %v364, %v371
    %v401 = vmul.f32 %v366, %v371
    %v402 = vmul.f32 %v368, %v371
    %v403 = vmul.f32 %v370, %v371
    %v404 = vmul.f32 %v181, %v181
    %v405 = vmul.f32 %v184, %v184
    %v406 = vmul.f32 %v189, %v189
    %v407 = vmul.f32 %v192, %v192
    %v408 = vmul.f32 %v197, %v197
    %v409 = vmul.f32 %v200, %v200
    %v410 = vmul.f32 %v205, %v205
    %v411 = vmul.f32 %v208, %v208
    %v412 = vmul.f32 %v213, %v213
    %v413 = vmul.f32 %v216, %v216
    %v414 = vmul.f32 %v221, %v221
    %v415 = vmul.f32 %v224, %v224
    %v416 = vmul.f32 %v229, %v229
    %v417 = vmul.f32 %v232, %v232
    %v418 = vmul.f32 %v237, %v237
    %v419 = vmul.f32 %v240, %v240
    %v420 = vmul.f32 %v245, %v245
    %v421 = vmul.f32 %v248, %v248
    %v422 = vmul.f32 %v253, %v253
    %v423 = vmul.f32 %v256, %v256
    %v424 = vmul.f32 %v261, %v261
    %v425 = vmul.f32 %v264, %v264
    %v426 = vmul.f32 %v269, %v269
    %v427 = vmul.f32 %v272, %v272
    %v428 = vmul.f32 %v277, %v277
    %v429 = vmul.f32 %v280, %v280
    %v430 = vmul.f32 %v285, %v285
    %v431 = vmul.f32 %v288, %v288
    %v432 = vmul.f32 %v293, %v293
    %v433 = vmul.f32 %v296, %v296
    %v434 = vmul.f32 %v301, %v301
    %v435 = vmul.f32 %v304, %v304
    %436 = vadd.xlane.f32.xlu0 %v404
    %v437 = vpop.xlane.xlu0 %436
    %438 = vadd.xlane.f32.xlu0 %v405
    %v439 = vpop.xlane.xlu0 %438
    %440 = vadd.xlane.f32.xlu0 %v406
    %v441 = vpop.xlane.xlu0 %440
    %442 = vadd.xlane.f32.xlu0 %v407
    %v443 = vpop.xlane.xlu0 %442
    %444 = vadd.xlane.f32.xlu0 %v408
    %v445 = vpop.xlane.xlu0 %444
    %446 = vadd.xlane.f32.xlu0 %v409
    %v447 = vpop.xlane.xlu0 %446
    %448 = vadd.xlane.f32.xlu0 %v410
    %v449 = vpop.xlane.xlu0 %448
    %450 = vadd.xlane.f32.xlu0 %v411
    %v451 = vpop.xlane.xlu0 %450
    %452 = vadd.xlane.f32.xlu0 %v412
    %v453 = vpop.xlane.xlu0 %452
    %454 = vadd.xlane.f32.xlu0 %v413
    %v455 = vpop.xlane.xlu0 %454
    %456 = vadd.xlane.f32.xlu0 %v414
    %v457 = vpop.xlane.xlu0 %456
    %458 = vadd.xlane.f32.xlu0 %v415
    %v459 = vpop.xlane.xlu0 %458
    %460 = vadd.xlane.f32.xlu0 %v416
    %v461 = vpop.xlane.xlu0 %460
    %462 = vadd.xlane.f32.xlu0 %v417
    %v463 = vpop.xlane.xlu0 %462
    %464 = vadd.xlane.f32.xlu0 %v418
    %v465 = vpop.xlane.xlu0 %464
    %466 = vadd.xlane.f32.xlu0 %v419
    %v467 = vpop.xlane.xlu0 %466
    %468 = vadd.xlane.f32.xlu0 %v420
    %v469 = vpop.xlane.xlu0 %468
    %470 = vadd.xlane.f32.xlu0 %v421
    %v471 = vpop.xlane.xlu0 %470
    %472 = vadd.xlane.f32.xlu0 %v422
    %v473 = vpop.xlane.xlu0 %472
    %474 = vadd.xlane.f32.xlu0 %v423
    %v475 = vpop.xlane.xlu0 %474
    %476 = vadd.xlane.f32.xlu0 %v424
    %v477 = vpop.xlane.xlu0 %476
    %478 = vadd.xlane.f32.xlu0 %v425
    %v479 = vpop.xlane.xlu0 %478
    %480 = vadd.xlane.f32.xlu0 %v426
    %v481 = vpop.xlane.xlu0 %480
    %482 = vadd.xlane.f32.xlu0 %v427
    %v483 = vpop.xlane.xlu0 %482
    %484 = vadd.xlane.f32.xlu0 %v428
    %v485 = vpop.xlane.xlu0 %484
    %486 = vadd.xlane.f32.xlu0 %v429
    %v487 = vpop.xlane.xlu0 %486
    %488 = vadd.xlane.f32.xlu0 %v430
    %v489 = vpop.xlane.xlu0 %488
    %490 = vadd.xlane.f32.xlu0 %v431
    %v491 = vpop.xlane.xlu0 %490
    %492 = vadd.xlane.f32.xlu0 %v432
    %v493 = vpop.xlane.xlu0 %492
    %494 = vadd.xlane.f32.xlu0 %v433
    %v495 = vpop.xlane.xlu0 %494
    %496 = vadd.xlane.f32.xlu0 %v434
    %v497 = vpop.xlane.xlu0 %496
    %498 = vadd.xlane.f32.xlu0 %v435
    %v499 = vpop.xlane.xlu0 %498
    %v500 = vmul.f32 %v437, %v371
    %v501 = vmul.f32 %v439, %v371
    %v502 = vmul.f32 %v441, %v371
    %v503 = vmul.f32 %v443, %v371
    %v504 = vmul.f32 %v445, %v371
    %v505 = vmul.f32 %v447, %v371
    %v506 = vmul.f32 %v449, %v371
    %v507 = vmul.f32 %v451, %v371
    %v508 = vmul.f32 %v453, %v371
    %v509 = vmul.f32 %v455, %v371
    %v510 = vmul.f32 %v457, %v371
    %v511 = vmul.f32 %v459, %v371
    %v512 = vmul.f32 %v461, %v371
    %v513 = vmul.f32 %v463, %v371
    %v514 = vmul.f32 %v465, %v371
    %v515 = vmul.f32 %v467, %v371
    %v516 = vmul.f32 %v469, %v371
    %v517 = vmul.f32 %v471, %v371
    %v518 = vmul.f32 %v473, %v371
    %v519 = vmul.f32 %v475, %v371
    %v520 = vmul.f32 %v477, %v371
    %v521 = vmul.f32 %v479, %v371
    %v522 = vmul.f32 %v481, %v371
    %v523 = vmul.f32 %v483, %v371
    %v524 = vmul.f32 %v485, %v371
    %v525 = vmul.f32 %v487, %v371
    %v526 = vmul.f32 %v489, %v371
    %v527 = vmul.f32 %v491, %v371
    %v528 = vmul.f32 %v493, %v371
    %v529 = vmul.f32 %v495, %v371
    %v530 = vmul.f32 %v497, %v371
    %v531 = vmul.f32 %v499, %v371
    %v532 = vmul.f32 %v372, %v372
    %v533 = vmul.f32 %v373, %v373
    %v534 = vmul.f32 %v374, %v374
    %v535 = vmul.f32 %v375, %v375
    %v536 = vmul.f32 %v376, %v376
    %v537 = vmul.f32 %v377, %v377
    %v538 = vmul.f32 %v378, %v378
    %v539 = vmul.f32 %v379, %v379
    %v540 = vmul.f32 %v380, %v380
    %v541 = vmul.f32 %v381, %v381
    %v542 = vmul.f32 %v382, %v382
    %v543 = vmul.f32 %v383, %v383
    %v544 = vmul.f32 %v384, %v384
    %v545 = vmul.f32 %v385, %v385
    %v546 = vmul.f32 %v386, %v386
    %v547 = vmul.f32 %v387, %v387
    %v548 = vmul.f32 %v388, %v388
    %v549 = vmul.f32 %v389, %v389
    %v550 = vmul.f32 %v390, %v390
    %v551 = vmul.f32 %v391, %v391
    %v552 = vmul.f32 %v392, %v392
    %v553 = vmul.f32 %v393, %v393
    %v554 = vmul.f32 %v394, %v394
    %v555 = vmul.f32 %v395, %v395
    %v556 = vmul.f32 %v396, %v396
    %v557 = vmul.f32 %v397, %v397
    %v558 = vmul.f32 %v398, %v398
    %v559 = vmul.f32 %v399, %v399
    %v560 = vmul.f32 %v400, %v400
    %v561 = vmul.f32 %v401, %v401
    %v562 = vmul.f32 %v402, %v402
    %v563 = vmul.f32 %v403, %v403
    %v564 = vsub.f32 %v500, %v532
    %v565 = vsub.f32 %v501, %v533
    %v566 = vsub.f32 %v502, %v534
    %v567 = vsub.f32 %v503, %v535
    %v568 = vsub.f32 %v504, %v536
    %v569 = vsub.f32 %v505, %v537
    %v570 = vsub.f32 %v506, %v538
    %v571 = vsub.f32 %v507, %v539
    %v572 = vsub.f32 %v508, %v540
    %v573 = vsub.f32 %v509, %v541
    %v574 = vsub.f32 %v510, %v542
    %v575 = vsub.f32 %v511, %v543
    %v576 = vsub.f32 %v512, %v544
    %v577 = vsub.f32 %v513, %v545
    %v578 = vsub.f32 %v514, %v546
    %v579 = vsub.f32 %v515, %v547
    %v580 = vsub.f32 %v516, %v548
    %v581 = vsub.f32 %v517, %v549
    %v582 = vsub.f32 %v518, %v550
    %v583 = vsub.f32 %v519, %v551
    %v584 = vsub.f32 %v520, %v552
    %v585 = vsub.f32 %v521, %v553
    %v586 = vsub.f32 %v522, %v554
    %v587 = vsub.f32 %v523, %v555
    %v588 = vsub.f32 %v524, %v556
    %v589 = vsub.f32 %v525, %v557
    %v590 = vsub.f32 %v526, %v558
    %v591 = vsub.f32 %v527, %v559
    %v592 = vsub.f32 %v528, %v560
    %v593 = vsub.f32 %v529, %v561
    %v594 = vsub.f32 %v530, %v562
    %v595 = vsub.f32 %v531, %v563
    %v596 = vmax.f32 %v564, 0.0
    %v597 = vmax.f32 %v565, 0.0
    %v598 = vmax.f32 %v566, 0.0
    %v599 = vmax.f32 %v567, 0.0
    %v600 = vmax.f32 %v568, 0.0
    %v601 = vmax.f32 %v569, 0.0
    %v602 = vmax.f32 %v570, 0.0
    %v603 = vmax.f32 %v571, 0.0
    %v604 = vmax.f32 %v572, 0.0
    %v605 = vmax.f32 %v573, 0.0
    %v606 = vmax.f32 %v574, 0.0
    %v607 = vmax.f32 %v575, 0.0
    %v608 = vmax.f32 %v576, 0.0
    %v609 = vmax.f32 %v577, 0.0
    %v610 = vmax.f32 %v578, 0.0
    %v611 = vmax.f32 %v579, 0.0
    %v612 = vmax.f32 %v580, 0.0
    %v613 = vmax.f32 %v581, 0.0
    %v614 = vmax.f32 %v582, 0.0
    %v615 = vmax.f32 %v583, 0.0
    %v616 = vmax.f32 %v584, 0.0
    %v617 = vmax.f32 %v585, 0.0
    %v618 = vmax.f32 %v586, 0.0
    %v619 = vmax.f32 %v587, 0.0
    %v620 = vmax.f32 %v588, 0.0
    %v621 = vmax.f32 %v589, 0.0
    %v622 = vmax.f32 %v590, 0.0
    %v623 = vmax.f32 %v591, 0.0
    %v624 = vmax.f32 %v592, 0.0
    %v625 = vmax.f32 %v593, 0.0
    %v626 = vmax.f32 %v594, 0.0
    %v627 = vmax.f32 %v595, 0.0
    %v628 = vadd.f32 %v596, 1e-05
    %v629 = vadd.f32 %v597, 1e-05
    %v630 = vadd.f32 %v598, 1e-05
    %v631 = vadd.f32 %v599, 1e-05
    %v632 = vadd.f32 %v600, 1e-05
    %v633 = vadd.f32 %v601, 1e-05
    %v634 = vadd.f32 %v602, 1e-05
    %v635 = vadd.f32 %v603, 1e-05
    %v636 = vadd.f32 %v604, 1e-05
    %v637 = vadd.f32 %v605, 1e-05
    %v638 = vadd.f32 %v606, 1e-05
    %v639 = vadd.f32 %v607, 1e-05
    %v640 = vadd.f32 %v608, 1e-05
    %v641 = vadd.f32 %v609, 1e-05
    %v642 = vadd.f32 %v610, 1e-05
    %v643 = vadd.f32 %v611, 1e-05
    %v644 = vadd.f32 %v612, 1e-05
    %v645 = vadd.f32 %v613, 1e-05
    %v646 = vadd.f32 %v614, 1e-05
    %v647 = vadd.f32 %v615, 1e-05
    %v648 = vadd.f32 %v616, 1e-05
    %v649 = vadd.f32 %v617, 1e-05
    %v650 = vadd.f32 %v618, 1e-05
    %v651 = vadd.f32 %v619, 1e-05
    %v652 = vadd.f32 %v620, 1e-05
    %v653 = vadd.f32 %v621, 1e-05
    %v654 = vadd.f32 %v622, 1e-05
    %v655 = vadd.f32 %v623, 1e-05
    %v656 = vadd.f32 %v624, 1e-05
    %v657 = vadd.f32 %v625, 1e-05
    %v658 = vadd.f32 %v626, 1e-05
    %v659 = vadd.f32 %v627, 1e-05
    %v660 = vrsqrt.pop %v628
    %v661 = vrsqrt.pop %v629
    %v662 = vrsqrt.pop %v630
    %v663 = vrsqrt.pop %v631
    %v664 = vrsqrt.pop %v632
    %v665 = vrsqrt.pop %v633
    %v666 = vrsqrt.pop %v634
    %v667 = vrsqrt.pop %v635
    %v668 = vrsqrt.pop %v636
    %v669 = vrsqrt.pop %v637
    %v670 = vrsqrt.pop %v638
    %v671 = vrsqrt.pop %v639
    %v672 = vrsqrt.pop %v640
    %v673 = vrsqrt.pop %v641
    %v674 = vrsqrt.pop %v642
    %v675 = vrsqrt.pop %v643
    %v676 = vrsqrt.pop %v644
    %v677 = vrsqrt.pop %v645
    %v678 = vrsqrt.pop %v646
    %v679 = vrsqrt.pop %v647
    %v680 = vrsqrt.pop %v648
    %v681 = vrsqrt.pop %v649
    %v682 = vrsqrt.pop %v650
    %v683 = vrsqrt.pop %v651
    %v684 = vrsqrt.pop %v652
    %v685 = vrsqrt.pop %v653
    %v686 = vrsqrt.pop %v654
    %v687 = vrsqrt.pop %v655
    %v688 = vrsqrt.pop %v656
    %v689 = vrsqrt.pop %v657
    %v690 = vrsqrt.pop %v658
    %v691 = vrsqrt.pop %v659
    %v692 = vlaneseq
    %v693 = vshrl.u32 %v692, 7
    %v694 = vsub.s32 1, %v693
    %v695 = vrot.slane %v60, %v694
    %v696 = vmul.f32 %v660, %v695
    %v697 = vmul.f32 %v661, %v695
    %v698 = vmul.f32 %v662, %v695
    %v699 = vmul.f32 %v663, %v695
    %v700 = vmul.f32 %v664, %v695
    %v701 = vmul.f32 %v665, %v695
    %v702 = vmul.f32 %v666, %v695
    %v703 = vmul.f32 %v667, %v695
    %v704 = vmul.f32 %v668, %v695
    %v705 = vmul.f32 %v669, %v695
    %v706 = vmul.f32 %v670, %v695
    %v707 = vmul.f32 %v671, %v695
    %v708 = vmul.f32 %v672, %v695
    %v709 = vmul.f32 %v673, %v695
    %v710 = vmul.f32 %v674, %v695
    %v711 = vmul.f32 %v675, %v695
    %v712 = vmul.f32 %v676, %v695
    %v713 = vmul.f32 %v677, %v695
    %v714 = vmul.f32 %v678, %v695
    %v715 = vmul.f32 %v679, %v695
    %v716 = vmul.f32 %v680, %v695
    %v717 = vmul.f32 %v681, %v695
    %v718 = vmul.f32 %v682, %v695
    %v719 = vmul.f32 %v683, %v695
    %v720 = vmul.f32 %v684, %v695
    %v721 = vmul.f32 %v685, %v695
    %v722 = vmul.f32 %v686, %v695
    %v723 = vmul.f32 %v687, %v695
    %v724 = vmul.f32 %v688, %v695
    %v725 = vmul.f32 %v689, %v695
    %v726 = vmul.f32 %v690, %v695
    %v727 = vmul.f32 %v691, %v695
    %v728 = vmul.f32 %v372, %v696
    %v729 = vmul.f32 %v373, %v697
    %v730 = vmul.f32 %v374, %v698
    %v731 = vmul.f32 %v375, %v699
    %v732 = vmul.f32 %v376, %v700
    %v733 = vmul.f32 %v377, %v701
    %v734 = vmul.f32 %v378, %v702
    %v735 = vmul.f32 %v379, %v703
    %v736 = vmul.f32 %v380, %v704
    %v737 = vmul.f32 %v381, %v705
    %v738 = vmul.f32 %v382, %v706
    %v739 = vmul.f32 %v383, %v707
    %v740 = vmul.f32 %v384, %v708
    %v741 = vmul.f32 %v385, %v709
    %v742 = vmul.f32 %v386, %v710
    %v743 = vmul.f32 %v387, %v711
    %v744 = vmul.f32 %v388, %v712
    %v745 = vmul.f32 %v389, %v713
    %v746 = vmul.f32 %v390, %v714
    %v747 = vmul.f32 %v391, %v715
    %v748 = vmul.f32 %v392, %v716
    %v749 = vmul.f32 %v393, %v717
    %v750 = vmul.f32 %v394, %v718
    %v751 = vmul.f32 %v395, %v719
    %v752 = vmul.f32 %v396, %v720
    %v753 = vmul.f32 %v397, %v721
    %v754 = vmul.f32 %v398, %v722
    %v755 = vmul.f32 %v399, %v723
    %v756 = vmul.f32 %v400, %v724
    %v757 = vmul.f32 %v401, %v725
    %v758 = vmul.f32 %v402, %v726
    %v759 = vmul.f32 %v403, %v727
    %v760 = vlaneseq
    %v761 = vshrl.u32 %v760, 7
    %v762 = vsub.s32 2, %v761
    %v763 = vrot.slane %v60, %v762
    %v764 = vsub.f32 %v763, %v728
    %v765 = vsub.f32 %v763, %v729
    %v766 = vsub.f32 %v763, %v730
    %v767 = vsub.f32 %v763, %v731
    %v768 = vsub.f32 %v763, %v732
    %v769 = vsub.f32 %v763, %v733
    %v770 = vsub.f32 %v763, %v734
    %v771 = vsub.f32 %v763, %v735
    %v772 = vsub.f32 %v763, %v736
    %v773 = vsub.f32 %v763, %v737
    %v774 = vsub.f32 %v763, %v738
    %v775 = vsub.f32 %v763, %v739
    %v776 = vsub.f32 %v763, %v740
    %v777 = vsub.f32 %v763, %v741
    %v778 = vsub.f32 %v763, %v742
    %v779 = vsub.f32 %v763, %v743
    %v780 = vsub.f32 %v763, %v744
    %v781 = vsub.f32 %v763, %v745
    %v782 = vsub.f32 %v763, %v746
    %v783 = vsub.f32 %v763, %v747
    %v784 = vsub.f32 %v763, %v748
    %v785 = vsub.f32 %v763, %v749
    %v786 = vsub.f32 %v763, %v750
    %v787 = vsub.f32 %v763, %v751
    %v788 = vsub.f32 %v763, %v752
    %v789 = vsub.f32 %v763, %v753
    %v790 = vsub.f32 %v763, %v754
    %v791 = vsub.f32 %v763, %v755
    %v792 = vsub.f32 %v763, %v756
    %v793 = vsub.f32 %v763, %v757
    %v794 = vsub.f32 %v763, %v758
    %v795 = vsub.f32 %v763, %v759
    %v796 = vmul.f32 %v181, %v696
    %v797 = vmul.f32 %v184, %v697
    %v798 = vmul.f32 %v189, %v698
    %v799 = vmul.f32 %v192, %v699
    %v800 = vmul.f32 %v197, %v700
    %v801 = vmul.f32 %v200, %v701
    %v802 = vmul.f32 %v205, %v702
    %v803 = vmul.f32 %v208, %v703
    %v804 = vmul.f32 %v213, %v704
    %v805 = vmul.f32 %v216, %v705
    %v806 = vmul.f32 %v221, %v706
    %v807 = vmul.f32 %v224, %v707
    %v808 = vmul.f32 %v229, %v708
    %v809 = vmul.f32 %v232, %v709
    %v810 = vmul.f32 %v237, %v710
    %v811 = vmul.f32 %v240, %v711
    %v812 = vmul.f32 %v245, %v712
    %v813 = vmul.f32 %v248, %v713
    %v814 = vmul.f32 %v253, %v714
    %v815 = vmul.f32 %v256, %v715
    %v816 = vmul.f32 %v261, %v716
    %v817 = vmul.f32 %v264, %v717
    %v818 = vmul.f32 %v269, %v718
    %v819 = vmul.f32 %v272, %v719
    %v820 = vmul.f32 %v277, %v720
    %v821 = vmul.f32 %v280, %v721
    %v822 = vmul.f32 %v285, %v722
    %v823 = vmul.f32 %v288, %v723
    %v824 = vmul.f32 %v293, %v724
    %v825 = vmul.f32 %v296, %v725
    %v826 = vmul.f32 %v301, %v726
    %v827 = vmul.f32 %v304, %v727
    %v828 = vadd.f32 %v796, %v764
    %v829 = vadd.f32 %v797, %v765
    %v830 = vadd.f32 %v798, %v766
    %v831 = vadd.f32 %v799, %v767
    %v832 = vadd.f32 %v800, %v768
    %v833 = vadd.f32 %v801, %v769
    %v834 = vadd.f32 %v802, %v770
    %v835 = vadd.f32 %v803, %v771
    %v836 = vadd.f32 %v804, %v772
    %v837 = vadd.f32 %v805, %v773
    %v838 = vadd.f32 %v806, %v774
    %v839 = vadd.f32 %v807, %v775
    %v840 = vadd.f32 %v808, %v776
    %v841 = vadd.f32 %v809, %v777
    %v842 = vadd.f32 %v810, %v778
    %v843 = vadd.f32 %v811, %v779
    %v844 = vadd.f32 %v812, %v780
    %v845 = vadd.f32 %v813, %v781
    %v846 = vadd.f32 %v814, %v782
    %v847 = vadd.f32 %v815, %v783
    %v848 = vadd.f32 %v816, %v784
    %v849 = vadd.f32 %v817, %v785
    %v850 = vadd.f32 %v818, %v786
    %v851 = vadd.f32 %v819, %v787
    %v852 = vadd.f32 %v820, %v788
    %v853 = vadd.f32 %v821, %v789
    %v854 = vadd.f32 %v822, %v790
    %v855 = vadd.f32 %v823, %v791
    %v856 = vadd.f32 %v824, %v792
    %v857 = vadd.f32 %v825, %v793
    %v858 = vadd.f32 %v826, %v794
    %v859 = vadd.f32 %v827, %v795
    %v860 = vmax.f32 %v828, 0.0
    %v861 = vmax.f32 %v829, 0.0
    %v862 = vmax.f32 %v830, 0.0
    %v863 = vmax.f32 %v831, 0.0
    %v864 = vmax.f32 %v832, 0.0
    %v865 = vmax.f32 %v833, 0.0
    %v866 = vmax.f32 %v834, 0.0
    %v867 = vmax.f32 %v835, 0.0
    %v868 = vmax.f32 %v836, 0.0
    %v869 = vmax.f32 %v837, 0.0
    %v870 = vmax.f32 %v838, 0.0
    %v871 = vmax.f32 %v839, 0.0
    %v872 = vmax.f32 %v840, 0.0
    %v873 = vmax.f32 %v841, 0.0
    %v874 = vmax.f32 %v842, 0.0
    %v875 = vmax.f32 %v843, 0.0
    %v876 = vmax.f32 %v844, 0.0
    %v877 = vmax.f32 %v845, 0.0
    %v878 = vmax.f32 %v846, 0.0
    %v879 = vmax.f32 %v847, 0.0
    %v880 = vmax.f32 %v848, 0.0
    %v881 = vmax.f32 %v849, 0.0
    %v882 = vmax.f32 %v850, 0.0
    %v883 = vmax.f32 %v851, 0.0
    %v884 = vmax.f32 %v852, 0.0
    %v885 = vmax.f32 %v853, 0.0
    %v886 = vmax.f32 %v854, 0.0
    %v887 = vmax.f32 %v855, 0.0
    %v888 = vmax.f32 %v856, 0.0
    %v889 = vmax.f32 %v857, 0.0
    %v890 = vmax.f32 %v858, 0.0
    %v891 = vmax.f32 %v859, 0.0
    %v892 = vld [vmem:[%s4] sm:$0x7]
    %v893 = vpack.c.bf16 %v861, %v860
    %v894 = vpack.c.bf16 %v863, %v862
    %v895 = vpack.c.bf16 %v865, %v864
    %v896 = vpack.c.bf16 %v867, %v866
    %v897 = vpack.c.bf16 %v869, %v868
    %v898 = vpack.c.bf16 %v871, %v870
    %v899 = vpack.c.bf16 %v873, %v872
    %v900 = vpack.c.bf16 %v875, %v874
    %v901 = vpack.c.bf16 %v877, %v876
    %v902 = vpack.c.bf16 %v879, %v878
    %v903 = vpack.c.bf16 %v881, %v880
    %v904 = vpack.c.bf16 %v883, %v882
    %v905 = vpack.c.bf16 %v885, %v884
    %v906 = vpack.c.bf16 %v887, %v886
    %v907 = vpack.c.bf16 %v889, %v888
    %v908 = vpack.c.bf16 %v891, %v890
    %v909 = vld [vmem:[%s3] sm:$0xf]
    %v910 = vld [vmem:[%s3 + $0x4] sm:$0xf]
    %v911 = vld [vmem:[%s3 + $0x8] sm:$0xf]
    %v912 = vld [vmem:[%s3 + $0xc] sm:$0xf]
    %v913 = vld [vmem:[%s3 + $0x10] sm:$0xf]
    %v914 = vld [vmem:[%s3 + $0x14] sm:$0xf]
    %v915 = vld [vmem:[%s3 + $0x18] sm:$0xf]
    %v916 = vld [vmem:[%s3 + $0x1c] sm:$0xf]
    %v917 = vld [vmem:[%s3 + $0x20] sm:$0xf]
    %v918 = vld [vmem:[%s3 + $0x24] sm:$0xf]
    %v919 = vld [vmem:[%s3 + $0x28] sm:$0xf]
    %v920 = vld [vmem:[%s3 + $0x2c] sm:$0xf]
    %v921 = vld [vmem:[%s3 + $0x30] sm:$0xf]
    %v922 = vld [vmem:[%s3 + $0x34] sm:$0xf]
    %v923 = vld [vmem:[%s3 + $0x38] sm:$0xf]
    %v924 = vld [vmem:[%s3 + $0x3c] sm:$0xf]
    %v925 = vlaneseq
    %v926 = vshrl.u32 %v925, 7
    %v927 = vsub.s32 0, %v926
    %v928 = vrot.slane %v892, %v927
    %v945 = vunpack.c.l.b16 %v909
    %v946 = vunpack.c.l.b16 %v910
    %v947 = vunpack.c.l.b16 %v911
    %v948 = vunpack.c.l.b16 %v912
    %v949 = vunpack.c.l.b16 %v913
    %v950 = vunpack.c.l.b16 %v914
    %v951 = vunpack.c.l.b16 %v915
    %v952 = vunpack.c.l.b16 %v916
    %v953 = vunpack.c.l.b16 %v917
    %v954 = vunpack.c.l.b16 %v918
    %v955 = vunpack.c.l.b16 %v919
    %v956 = vunpack.c.l.b16 %v920
    %v957 = vunpack.c.l.b16 %v921
    %v958 = vunpack.c.l.b16 %v922
    %v959 = vunpack.c.l.b16 %v923
    %v960 = vunpack.c.l.b16 %v924
    %v961 = vpack.c.b16 %v946, %v945
    %v962 = vpack.c.b16 %v948, %v947
    %v963 = vpack.c.b16 %v950, %v949
    %v964 = vpack.c.b16 %v952, %v951
    %v965 = vpack.c.b16 %v954, %v953
    %v966 = vpack.c.b16 %v956, %v955
    %v967 = vpack.c.b16 %v958, %v957
    %v968 = vpack.c.b16 %v960, %v959
    %977 = vmatprep.subr.bf16.mxu0 0
    %978 = vmatpush1.bf16.msra.mxu0 %v961
    %979 = vmatprep.subr.bf16.mxu0 0
    %980 = vmatpush1.bf16.msra.mxu0 %v962
    %981 = vmatprep.subr.bf16.mxu0 0
    %982 = vmatpush1.bf16.msra.mxu0 %v963
    %983 = vmatprep.subr.bf16.mxu0 0
    %984 = vmatpush1.bf16.msra.mxu0 %v964
    %985 = vmatprep.subr.bf16.mxu0 0
    %986 = vmatpush1.bf16.msra.mxu0 %v965
    %987 = vmatprep.subr.bf16.mxu0 0
    %988 = vmatpush1.bf16.msra.mxu0 %v966
    %989 = vmatprep.subr.bf16.mxu0 0
    %990 = vmatpush1.bf16.msra.mxu0 %v967
    %991 = vmatprep.subr.bf16.mxu0 0
    %992 = vmatpush1.bf16.msra.mxu0 %v968
    %993 = vmatprep.subr.bf16.mxu0 0
    %994 = vmatpush1.bf16.msra.mxu0 0
    %995 = vmatprep.subr.bf16.mxu0 0
    %996 = vmatpush1.bf16.msra.mxu0 0
    %997 = vmatprep.subr.bf16.mxu0 0
    %998 = vmatpush1.bf16.msra.mxu0 0
    %999 = vmatprep.subr.bf16.mxu0 0
    %1000 = vmatpush1.bf16.msra.mxu0 0
    %1001 = vmatprep.subr.bf16.mxu0 0
    %1002 = vmatpush1.bf16.msra.mxu0 0
    %1003 = vmatprep.subr.bf16.mxu0 0
    %1004 = vmatpush1.bf16.msra.mxu0 0
    %1005 = vmatprep.subr.bf16.mxu0 0
    %1006 = vmatpush1.bf16.msra.mxu0 0
    %1007 = vmatprep.subr.bf16.mxu0 0
    %1008 = vmatpush1.bf16.msra.mxu0 0
    %1009 = vmatprep.mubr.bf16.mxu0 0
    %1010 = vmatmul.mubr.bf16.gmra.mrb[0].mxu0 %v893
    %v1011 = vpop.f32.mrb[0].mxu0
    %v1012 = vadd.f32 %v928, %v1011
    %v1013 = vpop.f32.mrb[0].mxu0
    %v1014 = vpop.f32.mrb[0].mxu0
    %v1015 = vadd.f32 %v928, %v1014
    %v1016 = vpop.f32.mrb[0].mxu0
    %1017 = vmatprep.mubr.bf16.mxu0 0
    %1018 = vmatmul.mubr.bf16.gmra.mrb[0].mxu0 %v894
    %v1019 = vpop.f32.mrb[0].mxu0
    %v1020 = vadd.f32 %v928, %v1019
    %v1021 = vpop.f32.mrb[0].mxu0
    %v1022 = vpop.f32.mrb[0].mxu0
    %v1023 = vadd.f32 %v928, %v1022
    %v1024 = vpop.f32.mrb[0].mxu0
    %1025 = vmatprep.mubr.bf16.mxu0 0
    %1026 = vmatmul.mubr.bf16.gmra.mrb[0].mxu0 %v895
    %v1027 = vpop.f32.mrb[0].mxu0
    %v1028 = vadd.f32 %v928, %v1027
    %v1029 = vpop.f32.mrb[0].mxu0
    %v1030 = vpop.f32.mrb[0].mxu0
    %v1031 = vadd.f32 %v928, %v1030
    %v1032 = vpop.f32.mrb[0].mxu0
    %1033 = vmatprep.mubr.bf16.mxu0 0
    %1034 = vmatmul.mubr.bf16.gmra.mrb[0].mxu0 %v896
    %v1035 = vpop.f32.mrb[0].mxu0
    %v1036 = vadd.f32 %v928, %v1035
    %v1037 = vpop.f32.mrb[0].mxu0
    %v1038 = vpop.f32.mrb[0].mxu0
    %v1039 = vadd.f32 %v928, %v1038
    %v1040 = vpop.f32.mrb[0].mxu0
    %1041 = vmatprep.mubr.bf16.mxu0 0
    %1042 = vmatmul.mubr.bf16.gmra.mrb[0].mxu0 %v897
    %v1043 = vpop.f32.mrb[0].mxu0
    %v1044 = vadd.f32 %v928, %v1043
    %v1045 = vpop.f32.mrb[0].mxu0
    %v1046 = vpop.f32.mrb[0].mxu0
    %v1047 = vadd.f32 %v928, %v1046
    %v1048 = vpop.f32.mrb[0].mxu0
    %1049 = vmatprep.mubr.bf16.mxu0 0
    %1050 = vmatmul.mubr.bf16.gmra.mrb[0].mxu0 %v898
    %v1051 = vpop.f32.mrb[0].mxu0
    %v1052 = vadd.f32 %v928, %v1051
    %v1053 = vpop.f32.mrb[0].mxu0
    %v1054 = vpop.f32.mrb[0].mxu0
    %v1055 = vadd.f32 %v928, %v1054
    %v1056 = vpop.f32.mrb[0].mxu0
    %1057 = vmatprep.mubr.bf16.mxu0 0
    %1058 = vmatmul.mubr.bf16.gmra.mrb[0].mxu0 %v899
    %v1059 = vpop.f32.mrb[0].mxu0
    %v1060 = vadd.f32 %v928, %v1059
    %v1061 = vpop.f32.mrb[0].mxu0
    %v1062 = vpop.f32.mrb[0].mxu0
    %v1063 = vadd.f32 %v928, %v1062
    %v1064 = vpop.f32.mrb[0].mxu0
    %1065 = vmatprep.mubr.bf16.mxu0 0
    %1066 = vmatmul.mubr.bf16.gmra.mrb[0].mxu0 %v900
    %v1067 = vpop.f32.mrb[0].mxu0
    %v1068 = vadd.f32 %v928, %v1067
    %v1069 = vpop.f32.mrb[0].mxu0
    %v1070 = vpop.f32.mrb[0].mxu0
    %v1071 = vadd.f32 %v928, %v1070
    %v1072 = vpop.f32.mrb[0].mxu0
    %1073 = vmatprep.mubr.bf16.mxu0 0
    %1074 = vmatmul.mubr.bf16.gmra.mrb[0].mxu0 %v901
    %v1075 = vpop.f32.mrb[0].mxu0
    %v1076 = vadd.f32 %v928, %v1075
    %v1077 = vpop.f32.mrb[0].mxu0
    %v1078 = vpop.f32.mrb[0].mxu0
    %v1079 = vadd.f32 %v928, %v1078
    %v1080 = vpop.f32.mrb[0].mxu0
    %1081 = vmatprep.mubr.bf16.mxu0 0
    %1082 = vmatmul.mubr.bf16.gmra.mrb[0].mxu0 %v902
    %v1083 = vpop.f32.mrb[0].mxu0
    %v1084 = vadd.f32 %v928, %v1083
    %v1085 = vpop.f32.mrb[0].mxu0
    %v1086 = vpop.f32.mrb[0].mxu0
    %v1087 = vadd.f32 %v928, %v1086
    %v1088 = vpop.f32.mrb[0].mxu0
    %1089 = vmatprep.mubr.bf16.mxu0 0
    %1090 = vmatmul.mubr.bf16.gmra.mrb[0].mxu0 %v903
    %v1091 = vpop.f32.mrb[0].mxu0
    %v1092 = vadd.f32 %v928, %v1091
    %v1093 = vpop.f32.mrb[0].mxu0
    %v1094 = vpop.f32.mrb[0].mxu0
    %v1095 = vadd.f32 %v928, %v1094
    %v1096 = vpop.f32.mrb[0].mxu0
    %1097 = vmatprep.mubr.bf16.mxu0 0
    %1098 = vmatmul.mubr.bf16.gmra.mrb[0].mxu0 %v904
    %v1099 = vpop.f32.mrb[0].mxu0
    %v1100 = vadd.f32 %v928, %v1099
    %v1101 = vpop.f32.mrb[0].mxu0
    %v1102 = vpop.f32.mrb[0].mxu0
    %v1103 = vadd.f32 %v928, %v1102
    %v1104 = vpop.f32.mrb[0].mxu0
    %1105 = vmatprep.mubr.bf16.mxu0 0
    %1106 = vmatmul.mubr.bf16.gmra.mrb[0].mxu0 %v905
    %v1107 = vpop.f32.mrb[0].mxu0
    %v1108 = vadd.f32 %v928, %v1107
    %v1109 = vpop.f32.mrb[0].mxu0
    %v1110 = vpop.f32.mrb[0].mxu0
    %v1111 = vadd.f32 %v928, %v1110
    %v1112 = vpop.f32.mrb[0].mxu0
    %1113 = vmatprep.mubr.bf16.mxu0 0
    %1114 = vmatmul.mubr.bf16.gmra.mrb[0].mxu0 %v906
    %v1115 = vpop.f32.mrb[0].mxu0
    %v1116 = vadd.f32 %v928, %v1115
    %v1117 = vpop.f32.mrb[0].mxu0
    %v1118 = vpop.f32.mrb[0].mxu0
    %v1119 = vadd.f32 %v928, %v1118
    %v1120 = vpop.f32.mrb[0].mxu0
    %1121 = vmatprep.mubr.bf16.mxu0 0
    %1122 = vmatmul.mubr.bf16.gmra.mrb[0].mxu0 %v907
    %v1123 = vpop.f32.mrb[0].mxu0
    %v1124 = vadd.f32 %v928, %v1123
    %v1125 = vpop.f32.mrb[0].mxu0
    %v1126 = vpop.f32.mrb[0].mxu0
    %v1127 = vadd.f32 %v928, %v1126
    %v1128 = vpop.f32.mrb[0].mxu0
    %1129 = vmatprep.mubr.bf16.mxu0 0
    %1130 = vmatmul.mubr.bf16.gmra.mrb[0].mxu0 %v908
    %v1131 = vpop.f32.mrb[0].mxu0
    %v1132 = vadd.f32 %v928, %v1131
    %v1133 = vpop.f32.mrb[0].mxu0
    %v1134 = vpop.f32.mrb[0].mxu0
    %v1135 = vadd.f32 %v928, %v1134
    %v1136 = vpop.f32.mrb[0].mxu0
    %1137 = vdwg.mxu0
    %vm1138 = vcmask 523264
    %v1139 = vsel %vm1138, %v1012, 0.0
    %1140 = vadd.xlane.f32.xlu0 %v1139
    %v1141 = vpop.xlane.xlu0 %1140
    %v1142 = vsel %vm1138, %v1015, 0.0
    %1143 = vadd.xlane.f32.xlu0 %v1142
    %v1144 = vpop.xlane.xlu0 %1143
    %v1145 = vsel %vm1138, %v1020, 0.0
    %1146 = vadd.xlane.f32.xlu0 %v1145
    %v1147 = vpop.xlane.xlu0 %1146
    %v1148 = vsel %vm1138, %v1023, 0.0
    %1149 = vadd.xlane.f32.xlu0 %v1148
    %v1150 = vpop.xlane.xlu0 %1149
    %v1151 = vsel %vm1138, %v1028, 0.0
    %1152 = vadd.xlane.f32.xlu0 %v1151
    %v1153 = vpop.xlane.xlu0 %1152
    %v1154 = vsel %vm1138, %v1031, 0.0
    %1155 = vadd.xlane.f32.xlu0 %v1154
    %v1156 = vpop.xlane.xlu0 %1155
    %v1157 = vsel %vm1138, %v1036, 0.0
    %1158 = vadd.xlane.f32.xlu0 %v1157
    %v1159 = vpop.xlane.xlu0 %1158
    %v1160 = vsel %vm1138, %v1039, 0.0
    %1161 = vadd.xlane.f32.xlu0 %v1160
    %v1162 = vpop.xlane.xlu0 %1161
    %v1163 = vsel %vm1138, %v1044, 0.0
    %1164 = vadd.xlane.f32.xlu0 %v1163
    %v1165 = vpop.xlane.xlu0 %1164
    %v1166 = vsel %vm1138, %v1047, 0.0
    %1167 = vadd.xlane.f32.xlu0 %v1166
    %v1168 = vpop.xlane.xlu0 %1167
    %v1169 = vsel %vm1138, %v1052, 0.0
    %1170 = vadd.xlane.f32.xlu0 %v1169
    %v1171 = vpop.xlane.xlu0 %1170
    %v1172 = vsel %vm1138, %v1055, 0.0
    %1173 = vadd.xlane.f32.xlu0 %v1172
    %v1174 = vpop.xlane.xlu0 %1173
    %v1175 = vsel %vm1138, %v1060, 0.0
    %1176 = vadd.xlane.f32.xlu0 %v1175
    %v1177 = vpop.xlane.xlu0 %1176
    %v1178 = vsel %vm1138, %v1063, 0.0
    %1179 = vadd.xlane.f32.xlu0 %v1178
    %v1180 = vpop.xlane.xlu0 %1179
    %v1181 = vsel %vm1138, %v1068, 0.0
    %1182 = vadd.xlane.f32.xlu0 %v1181
    %v1183 = vpop.xlane.xlu0 %1182
    %v1184 = vsel %vm1138, %v1071, 0.0
    %1185 = vadd.xlane.f32.xlu0 %v1184
    %v1186 = vpop.xlane.xlu0 %1185
    %v1187 = vsel %vm1138, %v1076, 0.0
    %1188 = vadd.xlane.f32.xlu0 %v1187
    %v1189 = vpop.xlane.xlu0 %1188
    %v1190 = vsel %vm1138, %v1079, 0.0
    %1191 = vadd.xlane.f32.xlu0 %v1190
    %v1192 = vpop.xlane.xlu0 %1191
    %v1193 = vsel %vm1138, %v1084, 0.0
    %1194 = vadd.xlane.f32.xlu0 %v1193
    %v1195 = vpop.xlane.xlu0 %1194
    %v1196 = vsel %vm1138, %v1087, 0.0
    %1197 = vadd.xlane.f32.xlu0 %v1196
    %v1198 = vpop.xlane.xlu0 %1197
    %v1199 = vsel %vm1138, %v1092, 0.0
    %1200 = vadd.xlane.f32.xlu0 %v1199
    %v1201 = vpop.xlane.xlu0 %1200
    %v1202 = vsel %vm1138, %v1095, 0.0
    %1203 = vadd.xlane.f32.xlu0 %v1202
    %v1204 = vpop.xlane.xlu0 %1203
    %v1205 = vsel %vm1138, %v1100, 0.0
    %1206 = vadd.xlane.f32.xlu0 %v1205
    %v1207 = vpop.xlane.xlu0 %1206
    %v1208 = vsel %vm1138, %v1103, 0.0
    %1209 = vadd.xlane.f32.xlu0 %v1208
    %v1210 = vpop.xlane.xlu0 %1209
    %v1211 = vsel %vm1138, %v1108, 0.0
    %1212 = vadd.xlane.f32.xlu0 %v1211
    %v1213 = vpop.xlane.xlu0 %1212
    %v1214 = vsel %vm1138, %v1111, 0.0
    %1215 = vadd.xlane.f32.xlu0 %v1214
    %v1216 = vpop.xlane.xlu0 %1215
    %v1217 = vsel %vm1138, %v1116, 0.0
    %1218 = vadd.xlane.f32.xlu0 %v1217
    %v1219 = vpop.xlane.xlu0 %1218
    %v1220 = vsel %vm1138, %v1119, 0.0
    %1221 = vadd.xlane.f32.xlu0 %v1220
    %v1222 = vpop.xlane.xlu0 %1221
    %v1223 = vsel %vm1138, %v1124, 0.0
    %1224 = vadd.xlane.f32.xlu0 %v1223
    %v1225 = vpop.xlane.xlu0 %1224
    %v1226 = vsel %vm1138, %v1127, 0.0
    %1227 = vadd.xlane.f32.xlu0 %v1226
    %v1228 = vpop.xlane.xlu0 %1227
    %v1229 = vsel %vm1138, %v1132, 0.0
    %1230 = vadd.xlane.f32.xlu0 %v1229
    %v1231 = vpop.xlane.xlu0 %1230
    %v1232 = vsel %vm1138, %v1135, 0.0
    %1233 = vadd.xlane.f32.xlu0 %v1232
    %v1234 = vpop.xlane.xlu0 %1233
    %v1235 = vrcp.pop 64.0
    %v1236 = vmul.f32 %v1141, %v1235
    %v1237 = vmul.f32 %v1144, %v1235
    %v1238 = vmul.f32 %v1147, %v1235
    %v1239 = vmul.f32 %v1150, %v1235
    %v1240 = vmul.f32 %v1153, %v1235
    %v1241 = vmul.f32 %v1156, %v1235
    %v1242 = vmul.f32 %v1159, %v1235
    %v1243 = vmul.f32 %v1162, %v1235
    %v1244 = vmul.f32 %v1165, %v1235
    %v1245 = vmul.f32 %v1168, %v1235
    %v1246 = vmul.f32 %v1171, %v1235
    %v1247 = vmul.f32 %v1174, %v1235
    %v1248 = vmul.f32 %v1177, %v1235
    %v1249 = vmul.f32 %v1180, %v1235
    %v1250 = vmul.f32 %v1183, %v1235
    %v1251 = vmul.f32 %v1186, %v1235
    %v1252 = vmul.f32 %v1189, %v1235
    %v1253 = vmul.f32 %v1192, %v1235
    %v1254 = vmul.f32 %v1195, %v1235
    %v1255 = vmul.f32 %v1198, %v1235
    %v1256 = vmul.f32 %v1201, %v1235
    %v1257 = vmul.f32 %v1204, %v1235
    %v1258 = vmul.f32 %v1207, %v1235
    %v1259 = vmul.f32 %v1210, %v1235
    %v1260 = vmul.f32 %v1213, %v1235
    %v1261 = vmul.f32 %v1216, %v1235
    %v1262 = vmul.f32 %v1219, %v1235
    %v1263 = vmul.f32 %v1222, %v1235
    %v1264 = vmul.f32 %v1225, %v1235
    %v1265 = vmul.f32 %v1228, %v1235
    %v1266 = vmul.f32 %v1231, %v1235
    %v1267 = vmul.f32 %v1234, %v1235
    %v1268 = vmul.f32 %v1012, %v1012
    %v1269 = vmul.f32 %v1015, %v1015
    %v1270 = vmul.f32 %v1020, %v1020
    %v1271 = vmul.f32 %v1023, %v1023
    %v1272 = vmul.f32 %v1028, %v1028
    %v1273 = vmul.f32 %v1031, %v1031
    %v1274 = vmul.f32 %v1036, %v1036
    %v1275 = vmul.f32 %v1039, %v1039
    %v1276 = vmul.f32 %v1044, %v1044
    %v1277 = vmul.f32 %v1047, %v1047
    %v1278 = vmul.f32 %v1052, %v1052
    %v1279 = vmul.f32 %v1055, %v1055
    %v1280 = vmul.f32 %v1060, %v1060
    %v1281 = vmul.f32 %v1063, %v1063
    %v1282 = vmul.f32 %v1068, %v1068
    %v1283 = vmul.f32 %v1071, %v1071
    %v1284 = vmul.f32 %v1076, %v1076
    %v1285 = vmul.f32 %v1079, %v1079
    %v1286 = vmul.f32 %v1084, %v1084
    %v1287 = vmul.f32 %v1087, %v1087
    %v1288 = vmul.f32 %v1092, %v1092
    %v1289 = vmul.f32 %v1095, %v1095
    %v1290 = vmul.f32 %v1100, %v1100
    %v1291 = vmul.f32 %v1103, %v1103
    %v1292 = vmul.f32 %v1108, %v1108
    %v1293 = vmul.f32 %v1111, %v1111
    %v1294 = vmul.f32 %v1116, %v1116
    %v1295 = vmul.f32 %v1119, %v1119
    %v1296 = vmul.f32 %v1124, %v1124
    %v1297 = vmul.f32 %v1127, %v1127
    %v1298 = vmul.f32 %v1132, %v1132
    %v1299 = vmul.f32 %v1135, %v1135
    %v1300 = vsel %vm1138, %v1268, 0.0
    %1301 = vadd.xlane.f32.xlu0 %v1300
    %v1302 = vpop.xlane.xlu0 %1301
    %v1303 = vsel %vm1138, %v1269, 0.0
    %1304 = vadd.xlane.f32.xlu0 %v1303
    %v1305 = vpop.xlane.xlu0 %1304
    %v1306 = vsel %vm1138, %v1270, 0.0
    %1307 = vadd.xlane.f32.xlu0 %v1306
    %v1308 = vpop.xlane.xlu0 %1307
    %v1309 = vsel %vm1138, %v1271, 0.0
    %1310 = vadd.xlane.f32.xlu0 %v1309
    %v1311 = vpop.xlane.xlu0 %1310
    %v1312 = vsel %vm1138, %v1272, 0.0
    %1313 = vadd.xlane.f32.xlu0 %v1312
    %v1314 = vpop.xlane.xlu0 %1313
    %v1315 = vsel %vm1138, %v1273, 0.0
    %1316 = vadd.xlane.f32.xlu0 %v1315
    %v1317 = vpop.xlane.xlu0 %1316
    %v1318 = vsel %vm1138, %v1274, 0.0
    %1319 = vadd.xlane.f32.xlu0 %v1318
    %v1320 = vpop.xlane.xlu0 %1319
    %v1321 = vsel %vm1138, %v1275, 0.0
    %1322 = vadd.xlane.f32.xlu0 %v1321
    %v1323 = vpop.xlane.xlu0 %1322
    %v1324 = vsel %vm1138, %v1276, 0.0
    %1325 = vadd.xlane.f32.xlu0 %v1324
    %v1326 = vpop.xlane.xlu0 %1325
    %v1327 = vsel %vm1138, %v1277, 0.0
    %1328 = vadd.xlane.f32.xlu0 %v1327
    %v1329 = vpop.xlane.xlu0 %1328
    %v1330 = vsel %vm1138, %v1278, 0.0
    %1331 = vadd.xlane.f32.xlu0 %v1330
    %v1332 = vpop.xlane.xlu0 %1331
    %v1333 = vsel %vm1138, %v1279, 0.0
    %1334 = vadd.xlane.f32.xlu0 %v1333
    %v1335 = vpop.xlane.xlu0 %1334
    %v1336 = vsel %vm1138, %v1280, 0.0
    %1337 = vadd.xlane.f32.xlu0 %v1336
    %v1338 = vpop.xlane.xlu0 %1337
    %v1339 = vsel %vm1138, %v1281, 0.0
    %1340 = vadd.xlane.f32.xlu0 %v1339
    %v1341 = vpop.xlane.xlu0 %1340
    %v1342 = vsel %vm1138, %v1282, 0.0
    %1343 = vadd.xlane.f32.xlu0 %v1342
    %v1344 = vpop.xlane.xlu0 %1343
    %v1345 = vsel %vm1138, %v1283, 0.0
    %1346 = vadd.xlane.f32.xlu0 %v1345
    %v1347 = vpop.xlane.xlu0 %1346
    %v1348 = vsel %vm1138, %v1284, 0.0
    %1349 = vadd.xlane.f32.xlu0 %v1348
    %v1350 = vpop.xlane.xlu0 %1349
    %v1351 = vsel %vm1138, %v1285, 0.0
    %1352 = vadd.xlane.f32.xlu0 %v1351
    %v1353 = vpop.xlane.xlu0 %1352
    %v1354 = vsel %vm1138, %v1286, 0.0
    %1355 = vadd.xlane.f32.xlu0 %v1354
    %v1356 = vpop.xlane.xlu0 %1355
    %v1357 = vsel %vm1138, %v1287, 0.0
    %1358 = vadd.xlane.f32.xlu0 %v1357
    %v1359 = vpop.xlane.xlu0 %1358
    %v1360 = vsel %vm1138, %v1288, 0.0
    %1361 = vadd.xlane.f32.xlu0 %v1360
    %v1362 = vpop.xlane.xlu0 %1361
    %v1363 = vsel %vm1138, %v1289, 0.0
    %1364 = vadd.xlane.f32.xlu0 %v1363
    %v1365 = vpop.xlane.xlu0 %1364
    %v1366 = vsel %vm1138, %v1290, 0.0
    %1367 = vadd.xlane.f32.xlu0 %v1366
    %v1368 = vpop.xlane.xlu0 %1367
    %v1369 = vsel %vm1138, %v1291, 0.0
    %1370 = vadd.xlane.f32.xlu0 %v1369
    %v1371 = vpop.xlane.xlu0 %1370
    %v1372 = vsel %vm1138, %v1292, 0.0
    %1373 = vadd.xlane.f32.xlu0 %v1372
    %v1374 = vpop.xlane.xlu0 %1373
    %v1375 = vsel %vm1138, %v1293, 0.0
    %1376 = vadd.xlane.f32.xlu0 %v1375
    %v1377 = vpop.xlane.xlu0 %1376
    %v1378 = vsel %vm1138, %v1294, 0.0
    %1379 = vadd.xlane.f32.xlu0 %v1378
    %v1380 = vpop.xlane.xlu0 %1379
    %v1381 = vsel %vm1138, %v1295, 0.0
    %1382 = vadd.xlane.f32.xlu0 %v1381
    %v1383 = vpop.xlane.xlu0 %1382
    %v1384 = vsel %vm1138, %v1296, 0.0
    %1385 = vadd.xlane.f32.xlu0 %v1384
    %v1386 = vpop.xlane.xlu0 %1385
    %v1387 = vsel %vm1138, %v1297, 0.0
    %1388 = vadd.xlane.f32.xlu0 %v1387
    %v1389 = vpop.xlane.xlu0 %1388
    %v1390 = vsel %vm1138, %v1298, 0.0
    %1391 = vadd.xlane.f32.xlu0 %v1390
    %v1392 = vpop.xlane.xlu0 %1391
    %v1393 = vsel %vm1138, %v1299, 0.0
    %1394 = vadd.xlane.f32.xlu0 %v1393
    %v1395 = vpop.xlane.xlu0 %1394
    %v1396 = vmul.f32 %v1302, %v1235
    %v1397 = vmul.f32 %v1305, %v1235
    %v1398 = vmul.f32 %v1308, %v1235
    %v1399 = vmul.f32 %v1311, %v1235
    %v1400 = vmul.f32 %v1314, %v1235
    %v1401 = vmul.f32 %v1317, %v1235
    %v1402 = vmul.f32 %v1320, %v1235
    %v1403 = vmul.f32 %v1323, %v1235
    %v1404 = vmul.f32 %v1326, %v1235
    %v1405 = vmul.f32 %v1329, %v1235
    %v1406 = vmul.f32 %v1332, %v1235
    %v1407 = vmul.f32 %v1335, %v1235
    %v1408 = vmul.f32 %v1338, %v1235
    %v1409 = vmul.f32 %v1341, %v1235
    %v1410 = vmul.f32 %v1344, %v1235
    %v1411 = vmul.f32 %v1347, %v1235
    %v1412 = vmul.f32 %v1350, %v1235
    %v1413 = vmul.f32 %v1353, %v1235
    %v1414 = vmul.f32 %v1356, %v1235
    %v1415 = vmul.f32 %v1359, %v1235
    %v1416 = vmul.f32 %v1362, %v1235
    %v1417 = vmul.f32 %v1365, %v1235
    %v1418 = vmul.f32 %v1368, %v1235
    %v1419 = vmul.f32 %v1371, %v1235
    %v1420 = vmul.f32 %v1374, %v1235
    %v1421 = vmul.f32 %v1377, %v1235
    %v1422 = vmul.f32 %v1380, %v1235
    %v1423 = vmul.f32 %v1383, %v1235
    %v1424 = vmul.f32 %v1386, %v1235
    %v1425 = vmul.f32 %v1389, %v1235
    %v1426 = vmul.f32 %v1392, %v1235
    %v1427 = vmul.f32 %v1395, %v1235
    %v1428 = vmul.f32 %v1236, %v1236
    %v1429 = vmul.f32 %v1237, %v1237
    %v1430 = vmul.f32 %v1238, %v1238
    %v1431 = vmul.f32 %v1239, %v1239
    %v1432 = vmul.f32 %v1240, %v1240
    %v1433 = vmul.f32 %v1241, %v1241
    %v1434 = vmul.f32 %v1242, %v1242
    %v1435 = vmul.f32 %v1243, %v1243
    %v1436 = vmul.f32 %v1244, %v1244
    %v1437 = vmul.f32 %v1245, %v1245
    %v1438 = vmul.f32 %v1246, %v1246
    %v1439 = vmul.f32 %v1247, %v1247
    %v1440 = vmul.f32 %v1248, %v1248
    %v1441 = vmul.f32 %v1249, %v1249
    %v1442 = vmul.f32 %v1250, %v1250
    %v1443 = vmul.f32 %v1251, %v1251
    %v1444 = vmul.f32 %v1252, %v1252
    %v1445 = vmul.f32 %v1253, %v1253
    %v1446 = vmul.f32 %v1254, %v1254
    %v1447 = vmul.f32 %v1255, %v1255
    %v1448 = vmul.f32 %v1256, %v1256
    %v1449 = vmul.f32 %v1257, %v1257
    %v1450 = vmul.f32 %v1258, %v1258
    %v1451 = vmul.f32 %v1259, %v1259
    %v1452 = vmul.f32 %v1260, %v1260
    %v1453 = vmul.f32 %v1261, %v1261
    %v1454 = vmul.f32 %v1262, %v1262
    %v1455 = vmul.f32 %v1263, %v1263
    %v1456 = vmul.f32 %v1264, %v1264
    %v1457 = vmul.f32 %v1265, %v1265
    %v1458 = vmul.f32 %v1266, %v1266
    %v1459 = vmul.f32 %v1267, %v1267
    %v1460 = vsub.f32 %v1396, %v1428
    %v1461 = vsub.f32 %v1397, %v1429
    %v1462 = vsub.f32 %v1398, %v1430
    %v1463 = vsub.f32 %v1399, %v1431
    %v1464 = vsub.f32 %v1400, %v1432
    %v1465 = vsub.f32 %v1401, %v1433
    %v1466 = vsub.f32 %v1402, %v1434
    %v1467 = vsub.f32 %v1403, %v1435
    %v1468 = vsub.f32 %v1404, %v1436
    %v1469 = vsub.f32 %v1405, %v1437
    %v1470 = vsub.f32 %v1406, %v1438
    %v1471 = vsub.f32 %v1407, %v1439
    %v1472 = vsub.f32 %v1408, %v1440
    %v1473 = vsub.f32 %v1409, %v1441
    %v1474 = vsub.f32 %v1410, %v1442
    %v1475 = vsub.f32 %v1411, %v1443
    %v1476 = vsub.f32 %v1412, %v1444
    %v1477 = vsub.f32 %v1413, %v1445
    %v1478 = vsub.f32 %v1414, %v1446
    %v1479 = vsub.f32 %v1415, %v1447
    %v1480 = vsub.f32 %v1416, %v1448
    %v1481 = vsub.f32 %v1417, %v1449
    %v1482 = vsub.f32 %v1418, %v1450
    %v1483 = vsub.f32 %v1419, %v1451
    %v1484 = vsub.f32 %v1420, %v1452
    %v1485 = vsub.f32 %v1421, %v1453
    %v1486 = vsub.f32 %v1422, %v1454
    %v1487 = vsub.f32 %v1423, %v1455
    %v1488 = vsub.f32 %v1424, %v1456
    %v1489 = vsub.f32 %v1425, %v1457
    %v1490 = vsub.f32 %v1426, %v1458
    %v1491 = vsub.f32 %v1427, %v1459
    %v1492 = vmax.f32 %v1460, 0.0
    %v1493 = vmax.f32 %v1461, 0.0
    %v1494 = vmax.f32 %v1462, 0.0
    %v1495 = vmax.f32 %v1463, 0.0
    %v1496 = vmax.f32 %v1464, 0.0
    %v1497 = vmax.f32 %v1465, 0.0
    %v1498 = vmax.f32 %v1466, 0.0
    %v1499 = vmax.f32 %v1467, 0.0
    %v1500 = vmax.f32 %v1468, 0.0
    %v1501 = vmax.f32 %v1469, 0.0
    %v1502 = vmax.f32 %v1470, 0.0
    %v1503 = vmax.f32 %v1471, 0.0
    %v1504 = vmax.f32 %v1472, 0.0
    %v1505 = vmax.f32 %v1473, 0.0
    %v1506 = vmax.f32 %v1474, 0.0
    %v1507 = vmax.f32 %v1475, 0.0
    %v1508 = vmax.f32 %v1476, 0.0
    %v1509 = vmax.f32 %v1477, 0.0
    %v1510 = vmax.f32 %v1478, 0.0
    %v1511 = vmax.f32 %v1479, 0.0
    %v1512 = vmax.f32 %v1480, 0.0
    %v1513 = vmax.f32 %v1481, 0.0
    %v1514 = vmax.f32 %v1482, 0.0
    %v1515 = vmax.f32 %v1483, 0.0
    %v1516 = vmax.f32 %v1484, 0.0
    %v1517 = vmax.f32 %v1485, 0.0
    %v1518 = vmax.f32 %v1486, 0.0
    %v1519 = vmax.f32 %v1487, 0.0
    %v1520 = vmax.f32 %v1488, 0.0
    %v1521 = vmax.f32 %v1489, 0.0
    %v1522 = vmax.f32 %v1490, 0.0
    %v1523 = vmax.f32 %v1491, 0.0
    %v1524 = vadd.f32 %v1492, 1e-05
    %v1525 = vadd.f32 %v1493, 1e-05
    %v1526 = vadd.f32 %v1494, 1e-05
    %v1527 = vadd.f32 %v1495, 1e-05
    %v1528 = vadd.f32 %v1496, 1e-05
    %v1529 = vadd.f32 %v1497, 1e-05
    %v1530 = vadd.f32 %v1498, 1e-05
    %v1531 = vadd.f32 %v1499, 1e-05
    %v1532 = vadd.f32 %v1500, 1e-05
    %v1533 = vadd.f32 %v1501, 1e-05
    %v1534 = vadd.f32 %v1502, 1e-05
    %v1535 = vadd.f32 %v1503, 1e-05
    %v1536 = vadd.f32 %v1504, 1e-05
    %v1537 = vadd.f32 %v1505, 1e-05
    %v1538 = vadd.f32 %v1506, 1e-05
    %v1539 = vadd.f32 %v1507, 1e-05
    %v1540 = vadd.f32 %v1508, 1e-05
    %v1541 = vadd.f32 %v1509, 1e-05
    %v1542 = vadd.f32 %v1510, 1e-05
    %v1543 = vadd.f32 %v1511, 1e-05
    %v1544 = vadd.f32 %v1512, 1e-05
    %v1545 = vadd.f32 %v1513, 1e-05
    %v1546 = vadd.f32 %v1514, 1e-05
    %v1547 = vadd.f32 %v1515, 1e-05
    %v1548 = vadd.f32 %v1516, 1e-05
    %v1549 = vadd.f32 %v1517, 1e-05
    %v1550 = vadd.f32 %v1518, 1e-05
    %v1551 = vadd.f32 %v1519, 1e-05
    %v1552 = vadd.f32 %v1520, 1e-05
    %v1553 = vadd.f32 %v1521, 1e-05
    %v1554 = vadd.f32 %v1522, 1e-05
    %v1555 = vadd.f32 %v1523, 1e-05
    %v1556 = vrsqrt.pop %v1524
    %v1557 = vrsqrt.pop %v1525
    %v1558 = vrsqrt.pop %v1526
    %v1559 = vrsqrt.pop %v1527
    %v1560 = vrsqrt.pop %v1528
    %v1561 = vrsqrt.pop %v1529
    %v1562 = vrsqrt.pop %v1530
    %v1563 = vrsqrt.pop %v1531
    %v1564 = vrsqrt.pop %v1532
    %v1565 = vrsqrt.pop %v1533
    %v1566 = vrsqrt.pop %v1534
    %v1567 = vrsqrt.pop %v1535
    %v1568 = vrsqrt.pop %v1536
    %v1569 = vrsqrt.pop %v1537
    %v1570 = vrsqrt.pop %v1538
    %v1571 = vrsqrt.pop %v1539
    %v1572 = vrsqrt.pop %v1540
    %v1573 = vrsqrt.pop %v1541
    %v1574 = vrsqrt.pop %v1542
    %v1575 = vrsqrt.pop %v1543
    %v1576 = vrsqrt.pop %v1544
    %v1577 = vrsqrt.pop %v1545
    %v1578 = vrsqrt.pop %v1546
    %v1579 = vrsqrt.pop %v1547
    %v1580 = vrsqrt.pop %v1548
    %v1581 = vrsqrt.pop %v1549
    %v1582 = vrsqrt.pop %v1550
    %v1583 = vrsqrt.pop %v1551
    %v1584 = vrsqrt.pop %v1552
    %v1585 = vrsqrt.pop %v1553
    %v1586 = vrsqrt.pop %v1554
    %v1587 = vrsqrt.pop %v1555
    %v1588 = vlaneseq
    %v1589 = vshrl.u32 %v1588, 7
    %v1590 = vsub.s32 1, %v1589
    %v1591 = vrot.slane %v892, %v1590
    %v1592 = vmul.f32 %v1556, %v1591
    %v1593 = vmul.f32 %v1557, %v1591
    %v1594 = vmul.f32 %v1558, %v1591
    %v1595 = vmul.f32 %v1559, %v1591
    %v1596 = vmul.f32 %v1560, %v1591
    %v1597 = vmul.f32 %v1561, %v1591
    %v1598 = vmul.f32 %v1562, %v1591
    %v1599 = vmul.f32 %v1563, %v1591
    %v1600 = vmul.f32 %v1564, %v1591
    %v1601 = vmul.f32 %v1565, %v1591
    %v1602 = vmul.f32 %v1566, %v1591
    %v1603 = vmul.f32 %v1567, %v1591
    %v1604 = vmul.f32 %v1568, %v1591
    %v1605 = vmul.f32 %v1569, %v1591
    %v1606 = vmul.f32 %v1570, %v1591
    %v1607 = vmul.f32 %v1571, %v1591
    %v1608 = vmul.f32 %v1572, %v1591
    %v1609 = vmul.f32 %v1573, %v1591
    %v1610 = vmul.f32 %v1574, %v1591
    %v1611 = vmul.f32 %v1575, %v1591
    %v1612 = vmul.f32 %v1576, %v1591
    %v1613 = vmul.f32 %v1577, %v1591
    %v1614 = vmul.f32 %v1578, %v1591
    %v1615 = vmul.f32 %v1579, %v1591
    %v1616 = vmul.f32 %v1580, %v1591
    %v1617 = vmul.f32 %v1581, %v1591
    %v1618 = vmul.f32 %v1582, %v1591
    %v1619 = vmul.f32 %v1583, %v1591
    %v1620 = vmul.f32 %v1584, %v1591
    %v1621 = vmul.f32 %v1585, %v1591
    %v1622 = vmul.f32 %v1586, %v1591
    %v1623 = vmul.f32 %v1587, %v1591
    %v1624 = vmul.f32 %v1236, %v1592
    %v1625 = vmul.f32 %v1237, %v1593
    %v1626 = vmul.f32 %v1238, %v1594
    %v1627 = vmul.f32 %v1239, %v1595
    %v1628 = vmul.f32 %v1240, %v1596
    %v1629 = vmul.f32 %v1241, %v1597
    %v1630 = vmul.f32 %v1242, %v1598
    %v1631 = vmul.f32 %v1243, %v1599
    %v1632 = vmul.f32 %v1244, %v1600
    %v1633 = vmul.f32 %v1245, %v1601
    %v1634 = vmul.f32 %v1246, %v1602
    %v1635 = vmul.f32 %v1247, %v1603
    %v1636 = vmul.f32 %v1248, %v1604
    %v1637 = vmul.f32 %v1249, %v1605
    %v1638 = vmul.f32 %v1250, %v1606
    %v1639 = vmul.f32 %v1251, %v1607
    %v1640 = vmul.f32 %v1252, %v1608
    %v1641 = vmul.f32 %v1253, %v1609
    %v1642 = vmul.f32 %v1254, %v1610
    %v1643 = vmul.f32 %v1255, %v1611
    %v1644 = vmul.f32 %v1256, %v1612
    %v1645 = vmul.f32 %v1257, %v1613
    %v1646 = vmul.f32 %v1258, %v1614
    %v1647 = vmul.f32 %v1259, %v1615
    %v1648 = vmul.f32 %v1260, %v1616
    %v1649 = vmul.f32 %v1261, %v1617
    %v1650 = vmul.f32 %v1262, %v1618
    %v1651 = vmul.f32 %v1263, %v1619
    %v1652 = vmul.f32 %v1264, %v1620
    %v1653 = vmul.f32 %v1265, %v1621
    %v1654 = vmul.f32 %v1266, %v1622
    %v1655 = vmul.f32 %v1267, %v1623
    %v1656 = vlaneseq
    %v1657 = vshrl.u32 %v1656, 7
    %v1658 = vsub.s32 2, %v1657
    %v1659 = vrot.slane %v892, %v1658
    %v1660 = vsub.f32 %v1659, %v1624
    %v1661 = vsub.f32 %v1659, %v1625
    %v1662 = vsub.f32 %v1659, %v1626
    %v1663 = vsub.f32 %v1659, %v1627
    %v1664 = vsub.f32 %v1659, %v1628
    %v1665 = vsub.f32 %v1659, %v1629
    %v1666 = vsub.f32 %v1659, %v1630
    %v1667 = vsub.f32 %v1659, %v1631
    %v1668 = vsub.f32 %v1659, %v1632
    %v1669 = vsub.f32 %v1659, %v1633
    %v1670 = vsub.f32 %v1659, %v1634
    %v1671 = vsub.f32 %v1659, %v1635
    %v1672 = vsub.f32 %v1659, %v1636
    %v1673 = vsub.f32 %v1659, %v1637
    %v1674 = vsub.f32 %v1659, %v1638
    %v1675 = vsub.f32 %v1659, %v1639
    %v1676 = vsub.f32 %v1659, %v1640
    %v1677 = vsub.f32 %v1659, %v1641
    %v1678 = vsub.f32 %v1659, %v1642
    %v1679 = vsub.f32 %v1659, %v1643
    %v1680 = vsub.f32 %v1659, %v1644
    %v1681 = vsub.f32 %v1659, %v1645
    %v1682 = vsub.f32 %v1659, %v1646
    %v1683 = vsub.f32 %v1659, %v1647
    %v1684 = vsub.f32 %v1659, %v1648
    %v1685 = vsub.f32 %v1659, %v1649
    %v1686 = vsub.f32 %v1659, %v1650
    %v1687 = vsub.f32 %v1659, %v1651
    %v1688 = vsub.f32 %v1659, %v1652
    %v1689 = vsub.f32 %v1659, %v1653
    %v1690 = vsub.f32 %v1659, %v1654
    %v1691 = vsub.f32 %v1659, %v1655
    %v1692 = vmul.f32 %v1012, %v1592
    %v1693 = vmul.f32 %v1015, %v1593
    %v1694 = vmul.f32 %v1020, %v1594
    %v1695 = vmul.f32 %v1023, %v1595
    %v1696 = vmul.f32 %v1028, %v1596
    %v1697 = vmul.f32 %v1031, %v1597
    %v1698 = vmul.f32 %v1036, %v1598
    %v1699 = vmul.f32 %v1039, %v1599
    %v1700 = vmul.f32 %v1044, %v1600
    %v1701 = vmul.f32 %v1047, %v1601
    %v1702 = vmul.f32 %v1052, %v1602
    %v1703 = vmul.f32 %v1055, %v1603
    %v1704 = vmul.f32 %v1060, %v1604
    %v1705 = vmul.f32 %v1063, %v1605
    %v1706 = vmul.f32 %v1068, %v1606
    %v1707 = vmul.f32 %v1071, %v1607
    %v1708 = vmul.f32 %v1076, %v1608
    %v1709 = vmul.f32 %v1079, %v1609
    %v1710 = vmul.f32 %v1084, %v1610
    %v1711 = vmul.f32 %v1087, %v1611
    %v1712 = vmul.f32 %v1092, %v1612
    %v1713 = vmul.f32 %v1095, %v1613
    %v1714 = vmul.f32 %v1100, %v1614
    %v1715 = vmul.f32 %v1103, %v1615
    %v1716 = vmul.f32 %v1108, %v1616
    %v1717 = vmul.f32 %v1111, %v1617
    %v1718 = vmul.f32 %v1116, %v1618
    %v1719 = vmul.f32 %v1119, %v1619
    %v1720 = vmul.f32 %v1124, %v1620
    %v1721 = vmul.f32 %v1127, %v1621
    %v1722 = vmul.f32 %v1132, %v1622
    %v1723 = vmul.f32 %v1135, %v1623
    %v1724 = vadd.f32 %v1692, %v1660
    %v1725 = vadd.f32 %v1693, %v1661
    %v1726 = vadd.f32 %v1694, %v1662
    %v1727 = vadd.f32 %v1695, %v1663
    %v1728 = vadd.f32 %v1696, %v1664
    %v1729 = vadd.f32 %v1697, %v1665
    %v1730 = vadd.f32 %v1698, %v1666
    %v1731 = vadd.f32 %v1699, %v1667
    %v1732 = vadd.f32 %v1700, %v1668
    %v1733 = vadd.f32 %v1701, %v1669
    %v1734 = vadd.f32 %v1702, %v1670
    %v1735 = vadd.f32 %v1703, %v1671
    %v1736 = vadd.f32 %v1704, %v1672
    %v1737 = vadd.f32 %v1705, %v1673
    %v1738 = vadd.f32 %v1706, %v1674
    %v1739 = vadd.f32 %v1707, %v1675
    %v1740 = vadd.f32 %v1708, %v1676
    %v1741 = vadd.f32 %v1709, %v1677
    %v1742 = vadd.f32 %v1710, %v1678
    %v1743 = vadd.f32 %v1711, %v1679
    %v1744 = vadd.f32 %v1712, %v1680
    %v1745 = vadd.f32 %v1713, %v1681
    %v1746 = vadd.f32 %v1714, %v1682
    %v1747 = vadd.f32 %v1715, %v1683
    %v1748 = vadd.f32 %v1716, %v1684
    %v1749 = vadd.f32 %v1717, %v1685
    %v1750 = vadd.f32 %v1718, %v1686
    %v1751 = vadd.f32 %v1719, %v1687
    %v1752 = vadd.f32 %v1720, %v1688
    %v1753 = vadd.f32 %v1721, %v1689
    %v1754 = vadd.f32 %v1722, %v1690
    %v1755 = vadd.f32 %v1723, %v1691
    %v1756 = vmax.f32 %v1724, 0.0
    %v1757 = vmax.f32 %v1725, 0.0
    %v1758 = vmax.f32 %v1726, 0.0
    %v1759 = vmax.f32 %v1727, 0.0
    %v1760 = vmax.f32 %v1728, 0.0
    %v1761 = vmax.f32 %v1729, 0.0
    %v1762 = vmax.f32 %v1730, 0.0
    %v1763 = vmax.f32 %v1731, 0.0
    %v1764 = vmax.f32 %v1732, 0.0
    %v1765 = vmax.f32 %v1733, 0.0
    %v1766 = vmax.f32 %v1734, 0.0
    %v1767 = vmax.f32 %v1735, 0.0
    %v1768 = vmax.f32 %v1736, 0.0
    %v1769 = vmax.f32 %v1737, 0.0
    %v1770 = vmax.f32 %v1738, 0.0
    %v1771 = vmax.f32 %v1739, 0.0
    %v1772 = vmax.f32 %v1740, 0.0
    %v1773 = vmax.f32 %v1741, 0.0
    %v1774 = vmax.f32 %v1742, 0.0
    %v1775 = vmax.f32 %v1743, 0.0
    %v1776 = vmax.f32 %v1744, 0.0
    %v1777 = vmax.f32 %v1745, 0.0
    %v1778 = vmax.f32 %v1746, 0.0
    %v1779 = vmax.f32 %v1747, 0.0
    %v1780 = vmax.f32 %v1748, 0.0
    %v1781 = vmax.f32 %v1749, 0.0
    %v1782 = vmax.f32 %v1750, 0.0
    %v1783 = vmax.f32 %v1751, 0.0
    %v1784 = vmax.f32 %v1752, 0.0
    %v1785 = vmax.f32 %v1753, 0.0
    %v1786 = vmax.f32 %v1754, 0.0
    %v1787 = vmax.f32 %v1755, 0.0
    %v1788 = vpack.c.bf16 %v1757, %v1756
    %v1789 = vpack.c.bf16 %v1759, %v1758
    %v1790 = vpack.c.bf16 %v1761, %v1760
    %v1791 = vpack.c.bf16 %v1763, %v1762
    %v1792 = vpack.c.bf16 %v1765, %v1764
    %v1793 = vpack.c.bf16 %v1767, %v1766
    %v1794 = vpack.c.bf16 %v1769, %v1768
    %v1795 = vpack.c.bf16 %v1771, %v1770
    %v1796 = vpack.c.bf16 %v1773, %v1772
    %v1797 = vpack.c.bf16 %v1775, %v1774
    %v1798 = vpack.c.bf16 %v1777, %v1776
    %v1799 = vpack.c.bf16 %v1779, %v1778
    %v1800 = vpack.c.bf16 %v1781, %v1780
    %v1801 = vpack.c.bf16 %v1783, %v1782
    %v1802 = vpack.c.bf16 %v1785, %v1784
    %v1803 = vpack.c.bf16 %v1787, %v1786
    %v1804 = vld [vmem:[%s5] sm:$0xf]
    %v1805 = vld [vmem:[%s5 + $0x4] sm:$0xf]
    %v1806 = vld [vmem:[%s5 + $0x8] sm:$0xf]
    %v1807 = vld [vmem:[%s5 + $0xc] sm:$0xf]
    %v1808 = vld [vmem:[%s5 + $0x10] sm:$0xf]
    %v1809 = vld [vmem:[%s5 + $0x14] sm:$0xf]
    %v1810 = vld [vmem:[%s5 + $0x18] sm:$0xf]
    %v1811 = vld [vmem:[%s5 + $0x1c] sm:$0xf]
    %v1812 = vld [vmem:[%s6] sm:$0x1]
    %v1814 = vlaneseq
    %v1815 = vshrl.u32 %v1814, 7
    %v1816 = vsub.s32 0, %v1815
    %v1817 = vrot.slane %v1812, %v1816
    %v1827 = vunpack.c.l.b16 %v1804
    %v1828 = vunpack.c.l.b16 %v1805
    %v1829 = vunpack.c.l.b16 %v1806
    %v1830 = vunpack.c.l.b16 %v1807
    %v1831 = vunpack.c.l.b16 %v1808
    %v1832 = vunpack.c.l.b16 %v1809
    %v1833 = vunpack.c.l.b16 %v1810
    %v1834 = vunpack.c.l.b16 %v1811
    %v1835 = vpack.c.b16 %v1828, %v1827
    %v1836 = vpack.c.b16 %v1830, %v1829
    %v1837 = vpack.c.b16 %v1832, %v1831
    %v1838 = vpack.c.b16 %v1834, %v1833
    %v1844 = vsel %vm1138, %v1788, 0
    %v1847 = vsel %vm1138, %v1789, 0
    %v1850 = vsel %vm1138, %v1790, 0
    %v1853 = vsel %vm1138, %v1791, 0
    %v1856 = vsel %vm1138, %v1792, 0
    %v1859 = vsel %vm1138, %v1793, 0
    %v1862 = vsel %vm1138, %v1794, 0
    %v1865 = vsel %vm1138, %v1795, 0
    %v1868 = vsel %vm1138, %v1796, 0
    %v1871 = vsel %vm1138, %v1797, 0
    %v1874 = vsel %vm1138, %v1798, 0
    %v1877 = vsel %vm1138, %v1799, 0
    %v1880 = vsel %vm1138, %v1800, 0
    %v1883 = vsel %vm1138, %v1801, 0
    %v1886 = vsel %vm1138, %v1802, 0
    %v1889 = vsel %vm1138, %v1803, 0
    %1891 = vmatprep.subr.bf16.mxu0 0
    %1892 = vmatpush1.bf16.msra.mxu0 %v1835
    %1893 = vmatprep.subr.bf16.mxu0 0
    %1894 = vmatpush1.bf16.msra.mxu0 %v1836
    %1895 = vmatprep.subr.bf16.mxu0 0
    %1896 = vmatpush1.bf16.msra.mxu0 %v1837
    %1897 = vmatprep.subr.bf16.mxu0 0
    %1898 = vmatpush1.bf16.msra.mxu0 %v1838
    %1899 = vmatprep.subr.bf16.mxu0 0
    %1900 = vmatpush1.bf16.msra.mxu0 0
    %1901 = vmatprep.subr.bf16.mxu0 0
    %1902 = vmatpush1.bf16.msra.mxu0 0
    %1903 = vmatprep.subr.bf16.mxu0 0
    %1904 = vmatpush1.bf16.msra.mxu0 0
    %1905 = vmatprep.subr.bf16.mxu0 0
    %1906 = vmatpush1.bf16.msra.mxu0 0
    %1907 = vmatprep.subr.bf16.mxu0 0
    %1908 = vmatpush1.bf16.msra.mxu0 0
    %1909 = vmatprep.subr.bf16.mxu0 0
    %1910 = vmatpush1.bf16.msra.mxu0 0
    %1911 = vmatprep.subr.bf16.mxu0 0
    %1912 = vmatpush1.bf16.msra.mxu0 0
    %1913 = vmatprep.subr.bf16.mxu0 0
    %1914 = vmatpush1.bf16.msra.mxu0 0
    %1915 = vmatprep.subr.bf16.mxu0 0
    %1916 = vmatpush1.bf16.msra.mxu0 0
    %1917 = vmatprep.subr.bf16.mxu0 0
    %1918 = vmatpush1.bf16.msra.mxu0 0
    %1919 = vmatprep.subr.bf16.mxu0 0
    %1920 = vmatpush1.bf16.msra.mxu0 0
    %1921 = vmatprep.subr.bf16.mxu0 0
    %1922 = vmatpush1.bf16.msra.mxu0 0
    %1923 = vmatprep.mubr.bf16.mxu0 0
    %1924 = vmatmul.mubr.bf16.gmra.mrb[0].mxu0 %v1844
    %v1925 = vpop.f32.mrb[0].mxu0
    %v1926 = vadd.f32 %v1817, %v1925
    %v1927 = vpop.f32.mrb[0].mxu0
    %v1928 = vpop.f32.mrb[0].mxu0
    %v1929 = vadd.f32 %v1817, %v1928
    %v1930 = vpop.f32.mrb[0].mxu0
    %1931 = vmatprep.mubr.bf16.mxu0 0
    %1932 = vmatmul.mubr.bf16.gmra.mrb[0].mxu0 %v1847
    %v1933 = vpop.f32.mrb[0].mxu0
    %v1934 = vadd.f32 %v1817, %v1933
    %v1935 = vpop.f32.mrb[0].mxu0
    %v1936 = vpop.f32.mrb[0].mxu0
    %v1937 = vadd.f32 %v1817, %v1936
    %v1938 = vpop.f32.mrb[0].mxu0
    %1939 = vmatprep.mubr.bf16.mxu0 0
    %1940 = vmatmul.mubr.bf16.gmra.mrb[0].mxu0 %v1850
    %v1941 = vpop.f32.mrb[0].mxu0
    %v1942 = vadd.f32 %v1817, %v1941
    %v1943 = vpop.f32.mrb[0].mxu0
    %v1944 = vpop.f32.mrb[0].mxu0
    %v1945 = vadd.f32 %v1817, %v1944
    %v1946 = vpop.f32.mrb[0].mxu0
    %1947 = vmatprep.mubr.bf16.mxu0 0
    %1948 = vmatmul.mubr.bf16.gmra.mrb[0].mxu0 %v1853
    %v1949 = vpop.f32.mrb[0].mxu0
    %v1950 = vadd.f32 %v1817, %v1949
    %v1951 = vpop.f32.mrb[0].mxu0
    %v1952 = vpop.f32.mrb[0].mxu0
    %v1953 = vadd.f32 %v1817, %v1952
    %v1954 = vpop.f32.mrb[0].mxu0
    %1955 = vmatprep.mubr.bf16.mxu0 0
    %1956 = vmatmul.mubr.bf16.gmra.mrb[0].mxu0 %v1856
    %v1957 = vpop.f32.mrb[0].mxu0
    %v1958 = vadd.f32 %v1817, %v1957
    %v1959 = vpop.f32.mrb[0].mxu0
    %v1960 = vpop.f32.mrb[0].mxu0
    %v1961 = vadd.f32 %v1817, %v1960
    %v1962 = vpop.f32.mrb[0].mxu0
    %1963 = vmatprep.mubr.bf16.mxu0 0
    %1964 = vmatmul.mubr.bf16.gmra.mrb[0].mxu0 %v1859
    %v1965 = vpop.f32.mrb[0].mxu0
    %v1966 = vadd.f32 %v1817, %v1965
    %v1967 = vpop.f32.mrb[0].mxu0
    %v1968 = vpop.f32.mrb[0].mxu0
    %v1969 = vadd.f32 %v1817, %v1968
    %v1970 = vpop.f32.mrb[0].mxu0
    %1971 = vmatprep.mubr.bf16.mxu0 0
    %1972 = vmatmul.mubr.bf16.gmra.mrb[0].mxu0 %v1862
    %v1973 = vpop.f32.mrb[0].mxu0
    %v1974 = vadd.f32 %v1817, %v1973
    %v1975 = vpop.f32.mrb[0].mxu0
    %v1976 = vpop.f32.mrb[0].mxu0
    %v1977 = vadd.f32 %v1817, %v1976
    %v1978 = vpop.f32.mrb[0].mxu0
    %1979 = vmatprep.mubr.bf16.mxu0 0
    %1980 = vmatmul.mubr.bf16.gmra.mrb[0].mxu0 %v1865
    %v1981 = vpop.f32.mrb[0].mxu0
    %v1982 = vadd.f32 %v1817, %v1981
    %v1983 = vpop.f32.mrb[0].mxu0
    %v1984 = vpop.f32.mrb[0].mxu0
    %v1985 = vadd.f32 %v1817, %v1984
    %v1986 = vpop.f32.mrb[0].mxu0
    %1987 = vmatprep.mubr.bf16.mxu0 0
    %1988 = vmatmul.mubr.bf16.gmra.mrb[0].mxu0 %v1868
    %v1989 = vpop.f32.mrb[0].mxu0
    %v1990 = vadd.f32 %v1817, %v1989
    %v1991 = vpop.f32.mrb[0].mxu0
    %v1992 = vpop.f32.mrb[0].mxu0
    %v1993 = vadd.f32 %v1817, %v1992
    %v1994 = vpop.f32.mrb[0].mxu0
    %1995 = vmatprep.mubr.bf16.mxu0 0
    %1996 = vmatmul.mubr.bf16.gmra.mrb[0].mxu0 %v1871
    %v1997 = vpop.f32.mrb[0].mxu0
    %v1998 = vadd.f32 %v1817, %v1997
    %v1999 = vpop.f32.mrb[0].mxu0
    %v2000 = vpop.f32.mrb[0].mxu0
    %v2001 = vadd.f32 %v1817, %v2000
    %v2002 = vpop.f32.mrb[0].mxu0
    %2003 = vmatprep.mubr.bf16.mxu0 0
    %2004 = vmatmul.mubr.bf16.gmra.mrb[0].mxu0 %v1874
    %v2005 = vpop.f32.mrb[0].mxu0
    %v2006 = vadd.f32 %v1817, %v2005
    %v2007 = vpop.f32.mrb[0].mxu0
    %v2008 = vpop.f32.mrb[0].mxu0
    %v2009 = vadd.f32 %v1817, %v2008
    %v2010 = vpop.f32.mrb[0].mxu0
    %2011 = vmatprep.mubr.bf16.mxu0 0
    %2012 = vmatmul.mubr.bf16.gmra.mrb[0].mxu0 %v1877
    %v2013 = vpop.f32.mrb[0].mxu0
    %v2014 = vadd.f32 %v1817, %v2013
    %v2015 = vpop.f32.mrb[0].mxu0
    %v2016 = vpop.f32.mrb[0].mxu0
    %v2017 = vadd.f32 %v1817, %v2016
    %v2018 = vpop.f32.mrb[0].mxu0
    %2019 = vmatprep.mubr.bf16.mxu0 0
    %2020 = vmatmul.mubr.bf16.gmra.mrb[0].mxu0 %v1880
    %v2021 = vpop.f32.mrb[0].mxu0
    %v2022 = vadd.f32 %v1817, %v2021
    %v2023 = vpop.f32.mrb[0].mxu0
    %v2024 = vpop.f32.mrb[0].mxu0
    %v2025 = vadd.f32 %v1817, %v2024
    %v2026 = vpop.f32.mrb[0].mxu0
    %2027 = vmatprep.mubr.bf16.mxu0 0
    %2028 = vmatmul.mubr.bf16.gmra.mrb[0].mxu0 %v1883
    %v2029 = vpop.f32.mrb[0].mxu0
    %v2030 = vadd.f32 %v1817, %v2029
    %v2031 = vpop.f32.mrb[0].mxu0
    %v2032 = vpop.f32.mrb[0].mxu0
    %v2033 = vadd.f32 %v1817, %v2032
    %v2034 = vpop.f32.mrb[0].mxu0
    %2035 = vmatprep.mubr.bf16.mxu0 0
    %2036 = vmatmul.mubr.bf16.gmra.mrb[0].mxu0 %v1886
    %v2037 = vpop.f32.mrb[0].mxu0
    %v2038 = vadd.f32 %v1817, %v2037
    %v2039 = vpop.f32.mrb[0].mxu0
    %v2040 = vpop.f32.mrb[0].mxu0
    %v2041 = vadd.f32 %v1817, %v2040
    %v2042 = vpop.f32.mrb[0].mxu0
    %2043 = vmatprep.mubr.bf16.mxu0 0
    %2044 = vmatmul.mubr.bf16.gmra.mrb[0].mxu0 %v1889
    %v2045 = vpop.f32.mrb[0].mxu0
    %v2046 = vadd.f32 %v1817, %v2045
    %v2047 = vpop.f32.mrb[0].mxu0
    %v2048 = vpop.f32.mrb[0].mxu0
    %v2049 = vadd.f32 %v1817, %v2048
    %v2050 = vpop.f32.mrb[0].mxu0
    %2051 = vdwg.mxu0
    %v2052 = vlaneseq
    %v2053 = vand.u32 %v2052, 127
    %vm2054 = vcmp.lt.s32.totalorder %v2053, 4
    %v2055 = vsel %vm2054, %v1926, -inf
    %v2056 = vsel %vm2054, %v1929, -inf
    %v2057 = vsel %vm2054, %v1934, -inf
    %v2058 = vsel %vm2054, %v1937, -inf
    %v2059 = vsel %vm2054, %v1942, -inf
    %v2060 = vsel %vm2054, %v1945, -inf
    %v2061 = vsel %vm2054, %v1950, -inf
    %v2062 = vsel %vm2054, %v1953, -inf
    %v2063 = vsel %vm2054, %v1958, -inf
    %v2064 = vsel %vm2054, %v1961, -inf
    %v2065 = vsel %vm2054, %v1966, -inf
    %v2066 = vsel %vm2054, %v1969, -inf
    %v2067 = vsel %vm2054, %v1974, -inf
    %v2068 = vsel %vm2054, %v1977, -inf
    %v2069 = vsel %vm2054, %v1982, -inf
    %v2070 = vsel %vm2054, %v1985, -inf
    %v2071 = vsel %vm2054, %v1990, -inf
    %v2072 = vsel %vm2054, %v1993, -inf
    %v2073 = vsel %vm2054, %v1998, -inf
    %v2074 = vsel %vm2054, %v2001, -inf
    %v2075 = vsel %vm2054, %v2006, -inf
    %v2076 = vsel %vm2054, %v2009, -inf
    %v2077 = vsel %vm2054, %v2014, -inf
    %v2078 = vsel %vm2054, %v2017, -inf
    %v2079 = vsel %vm2054, %v2022, -inf
    %v2080 = vsel %vm2054, %v2025, -inf
    %v2081 = vsel %vm2054, %v2030, -inf
    %v2082 = vsel %vm2054, %v2033, -inf
    %v2083 = vsel %vm2054, %v2038, -inf
    %v2084 = vsel %vm2054, %v2041, -inf
    %v2085 = vsel %vm2054, %v2046, -inf
    %v2086 = vsel %vm2054, %v2049, -inf
    %2087 = vmax.xlane.f32.xlu0 %v2055
    %v2088 = vpop.xlane.xlu0 %2087
    %2089 = vmax.xlane.f32.xlu0 %v2056
    %v2090 = vpop.xlane.xlu0 %2089
    %2091 = vmax.xlane.f32.xlu0 %v2057
    %v2092 = vpop.xlane.xlu0 %2091
    %2093 = vmax.xlane.f32.xlu0 %v2058
    %v2094 = vpop.xlane.xlu0 %2093
    %2095 = vmax.xlane.f32.xlu0 %v2059
    %v2096 = vpop.xlane.xlu0 %2095
    %2097 = vmax.xlane.f32.xlu0 %v2060
    %v2098 = vpop.xlane.xlu0 %2097
    %2099 = vmax.xlane.f32.xlu0 %v2061
    %v2100 = vpop.xlane.xlu0 %2099
    %2101 = vmax.xlane.f32.xlu0 %v2062
    %v2102 = vpop.xlane.xlu0 %2101
    %2103 = vmax.xlane.f32.xlu0 %v2063
    %v2104 = vpop.xlane.xlu0 %2103
    %2105 = vmax.xlane.f32.xlu0 %v2064
    %v2106 = vpop.xlane.xlu0 %2105
    %2107 = vmax.xlane.f32.xlu0 %v2065
    %v2108 = vpop.xlane.xlu0 %2107
    %2109 = vmax.xlane.f32.xlu0 %v2066
    %v2110 = vpop.xlane.xlu0 %2109
    %2111 = vmax.xlane.f32.xlu0 %v2067
    %v2112 = vpop.xlane.xlu0 %2111
    %2113 = vmax.xlane.f32.xlu0 %v2068
    %v2114 = vpop.xlane.xlu0 %2113
    %2115 = vmax.xlane.f32.xlu0 %v2069
    %v2116 = vpop.xlane.xlu0 %2115
    %2117 = vmax.xlane.f32.xlu0 %v2070
    %v2118 = vpop.xlane.xlu0 %2117
    %2119 = vmax.xlane.f32.xlu0 %v2071
    %v2120 = vpop.xlane.xlu0 %2119
    %2121 = vmax.xlane.f32.xlu0 %v2072
    %v2122 = vpop.xlane.xlu0 %2121
    %2123 = vmax.xlane.f32.xlu0 %v2073
    %v2124 = vpop.xlane.xlu0 %2123
    %2125 = vmax.xlane.f32.xlu0 %v2074
    %v2126 = vpop.xlane.xlu0 %2125
    %2127 = vmax.xlane.f32.xlu0 %v2075
    %v2128 = vpop.xlane.xlu0 %2127
    %2129 = vmax.xlane.f32.xlu0 %v2076
    %v2130 = vpop.xlane.xlu0 %2129
    %2131 = vmax.xlane.f32.xlu0 %v2077
    %v2132 = vpop.xlane.xlu0 %2131
    %2133 = vmax.xlane.f32.xlu0 %v2078
    %v2134 = vpop.xlane.xlu0 %2133
    %2135 = vmax.xlane.f32.xlu0 %v2079
    %v2136 = vpop.xlane.xlu0 %2135
    %2137 = vmax.xlane.f32.xlu0 %v2080
    %v2138 = vpop.xlane.xlu0 %2137
    %2139 = vmax.xlane.f32.xlu0 %v2081
    %v2140 = vpop.xlane.xlu0 %2139
    %2141 = vmax.xlane.f32.xlu0 %v2082
    %v2142 = vpop.xlane.xlu0 %2141
    %2143 = vmax.xlane.f32.xlu0 %v2083
    %v2144 = vpop.xlane.xlu0 %2143
    %2145 = vmax.xlane.f32.xlu0 %v2084
    %v2146 = vpop.xlane.xlu0 %2145
    %2147 = vmax.xlane.f32.xlu0 %v2085
    %v2148 = vpop.xlane.xlu0 %2147
    %2149 = vmax.xlane.f32.xlu0 %v2086
    %v2150 = vpop.xlane.xlu0 %2149
    %v2151 = vsub.f32 %v2055, %v2088
    %v2152 = vsub.f32 %v2056, %v2090
    %v2153 = vsub.f32 %v2057, %v2092
    %v2154 = vsub.f32 %v2058, %v2094
    %v2155 = vsub.f32 %v2059, %v2096
    %v2156 = vsub.f32 %v2060, %v2098
    %v2157 = vsub.f32 %v2061, %v2100
    %v2158 = vsub.f32 %v2062, %v2102
    %v2159 = vsub.f32 %v2063, %v2104
    %v2160 = vsub.f32 %v2064, %v2106
    %v2161 = vsub.f32 %v2065, %v2108
    %v2162 = vsub.f32 %v2066, %v2110
    %v2163 = vsub.f32 %v2067, %v2112
    %v2164 = vsub.f32 %v2068, %v2114
    %v2165 = vsub.f32 %v2069, %v2116
    %v2166 = vsub.f32 %v2070, %v2118
    %v2167 = vsub.f32 %v2071, %v2120
    %v2168 = vsub.f32 %v2072, %v2122
    %v2169 = vsub.f32 %v2073, %v2124
    %v2170 = vsub.f32 %v2074, %v2126
    %v2171 = vsub.f32 %v2075, %v2128
    %v2172 = vsub.f32 %v2076, %v2130
    %v2173 = vsub.f32 %v2077, %v2132
    %v2174 = vsub.f32 %v2078, %v2134
    %v2175 = vsub.f32 %v2079, %v2136
    %v2176 = vsub.f32 %v2080, %v2138
    %v2177 = vsub.f32 %v2081, %v2140
    %v2178 = vsub.f32 %v2082, %v2142
    %v2179 = vsub.f32 %v2083, %v2144
    %v2180 = vsub.f32 %v2084, %v2146
    %v2181 = vsub.f32 %v2085, %v2148
    %v2182 = vsub.f32 %v2086, %v2150
    %v2183 = vmul.f32 %v2151, 1.442695
    %v2184 = vpow.pop %v2183
    %v2185 = vmul.f32 %v2152, 1.442695
    %v2186 = vpow.pop %v2185
    %v2187 = vmul.f32 %v2153, 1.442695
    %v2188 = vpow.pop %v2187
    %v2189 = vmul.f32 %v2154, 1.442695
    %v2190 = vpow.pop %v2189
    %v2191 = vmul.f32 %v2155, 1.442695
    %v2192 = vpow.pop %v2191
    %v2193 = vmul.f32 %v2156, 1.442695
    %v2194 = vpow.pop %v2193
    %v2195 = vmul.f32 %v2157, 1.442695
    %v2196 = vpow.pop %v2195
    %v2197 = vmul.f32 %v2158, 1.442695
    %v2198 = vpow.pop %v2197
    %v2199 = vmul.f32 %v2159, 1.442695
    %v2200 = vpow.pop %v2199
    %v2201 = vmul.f32 %v2160, 1.442695
    %v2202 = vpow.pop %v2201
    %v2203 = vmul.f32 %v2161, 1.442695
    %v2204 = vpow.pop %v2203
    %v2205 = vmul.f32 %v2162, 1.442695
    %v2206 = vpow.pop %v2205
    %v2207 = vmul.f32 %v2163, 1.442695
    %v2208 = vpow.pop %v2207
    %v2209 = vmul.f32 %v2164, 1.442695
    %v2210 = vpow.pop %v2209
    %v2211 = vmul.f32 %v2165, 1.442695
    %v2212 = vpow.pop %v2211
    %v2213 = vmul.f32 %v2166, 1.442695
    %v2214 = vpow.pop %v2213
    %v2215 = vmul.f32 %v2167, 1.442695
    %v2216 = vpow.pop %v2215
    %v2217 = vmul.f32 %v2168, 1.442695
    %v2218 = vpow.pop %v2217
    %v2219 = vmul.f32 %v2169, 1.442695
    %v2220 = vpow.pop %v2219
    %v2221 = vmul.f32 %v2170, 1.442695
    %v2222 = vpow.pop %v2221
    %v2223 = vmul.f32 %v2171, 1.442695
    %v2224 = vpow.pop %v2223
    %v2225 = vmul.f32 %v2172, 1.442695
    %v2226 = vpow.pop %v2225
    %v2227 = vmul.f32 %v2173, 1.442695
    %v2228 = vpow.pop %v2227
    %v2229 = vmul.f32 %v2174, 1.442695
    %v2230 = vpow.pop %v2229
    %v2231 = vmul.f32 %v2175, 1.442695
    %v2232 = vpow.pop %v2231
    %v2233 = vmul.f32 %v2176, 1.442695
    %v2234 = vpow.pop %v2233
    %v2235 = vmul.f32 %v2177, 1.442695
    %v2236 = vpow.pop %v2235
    %v2237 = vmul.f32 %v2178, 1.442695
    %v2238 = vpow.pop %v2237
    %v2239 = vmul.f32 %v2179, 1.442695
    %v2240 = vpow.pop %v2239
    %v2241 = vmul.f32 %v2180, 1.442695
    %v2242 = vpow.pop %v2241
    %v2243 = vmul.f32 %v2181, 1.442695
    %v2244 = vpow.pop %v2243
    %v2245 = vmul.f32 %v2182, 1.442695
    %v2246 = vpow.pop %v2245
    %2247 = vadd.xlane.f32.xlu0 %v2184
    %v2248 = vpop.xlane.xlu0 %2247
    %2249 = vadd.xlane.f32.xlu0 %v2186
    %v2250 = vpop.xlane.xlu0 %2249
    %2251 = vadd.xlane.f32.xlu0 %v2188
    %v2252 = vpop.xlane.xlu0 %2251
    %2253 = vadd.xlane.f32.xlu0 %v2190
    %v2254 = vpop.xlane.xlu0 %2253
    %2255 = vadd.xlane.f32.xlu0 %v2192
    %v2256 = vpop.xlane.xlu0 %2255
    %2257 = vadd.xlane.f32.xlu0 %v2194
    %v2258 = vpop.xlane.xlu0 %2257
    %2259 = vadd.xlane.f32.xlu0 %v2196
    %v2260 = vpop.xlane.xlu0 %2259
    %2261 = vadd.xlane.f32.xlu0 %v2198
    %v2262 = vpop.xlane.xlu0 %2261
    %2263 = vadd.xlane.f32.xlu0 %v2200
    %v2264 = vpop.xlane.xlu0 %2263
    %2265 = vadd.xlane.f32.xlu0 %v2202
    %v2266 = vpop.xlane.xlu0 %2265
    %2267 = vadd.xlane.f32.xlu0 %v2204
    %v2268 = vpop.xlane.xlu0 %2267
    %2269 = vadd.xlane.f32.xlu0 %v2206
    %v2270 = vpop.xlane.xlu0 %2269
    %2271 = vadd.xlane.f32.xlu0 %v2208
    %v2272 = vpop.xlane.xlu0 %2271
    %2273 = vadd.xlane.f32.xlu0 %v2210
    %v2274 = vpop.xlane.xlu0 %2273
    %2275 = vadd.xlane.f32.xlu0 %v2212
    %v2276 = vpop.xlane.xlu0 %2275
    %2277 = vadd.xlane.f32.xlu0 %v2214
    %v2278 = vpop.xlane.xlu0 %2277
    %2279 = vadd.xlane.f32.xlu0 %v2216
    %v2280 = vpop.xlane.xlu0 %2279
    %2281 = vadd.xlane.f32.xlu0 %v2218
    %v2282 = vpop.xlane.xlu0 %2281
    %2283 = vadd.xlane.f32.xlu0 %v2220
    %v2284 = vpop.xlane.xlu0 %2283
    %2285 = vadd.xlane.f32.xlu0 %v2222
    %v2286 = vpop.xlane.xlu0 %2285
    %2287 = vadd.xlane.f32.xlu0 %v2224
    %v2288 = vpop.xlane.xlu0 %2287
    %2289 = vadd.xlane.f32.xlu0 %v2226
    %v2290 = vpop.xlane.xlu0 %2289
    %2291 = vadd.xlane.f32.xlu0 %v2228
    %v2292 = vpop.xlane.xlu0 %2291
    %2293 = vadd.xlane.f32.xlu0 %v2230
    %v2294 = vpop.xlane.xlu0 %2293
    %2295 = vadd.xlane.f32.xlu0 %v2232
    %v2296 = vpop.xlane.xlu0 %2295
    %2297 = vadd.xlane.f32.xlu0 %v2234
    %v2298 = vpop.xlane.xlu0 %2297
    %2299 = vadd.xlane.f32.xlu0 %v2236
    %v2300 = vpop.xlane.xlu0 %2299
    %2301 = vadd.xlane.f32.xlu0 %v2238
    %v2302 = vpop.xlane.xlu0 %2301
    %2303 = vadd.xlane.f32.xlu0 %v2240
    %v2304 = vpop.xlane.xlu0 %2303
    %2305 = vadd.xlane.f32.xlu0 %v2242
    %v2306 = vpop.xlane.xlu0 %2305
    %2307 = vadd.xlane.f32.xlu0 %v2244
    %v2308 = vpop.xlane.xlu0 %2307
    %2309 = vadd.xlane.f32.xlu0 %v2246
    %v2310 = vpop.xlane.xlu0 %2309
    %v2311 = vrcp.pop %v2248
    %v2312 = vrcp.pop %v2250
    %v2313 = vrcp.pop %v2252
    %v2314 = vrcp.pop %v2254
    %v2315 = vrcp.pop %v2256
    %v2316 = vrcp.pop %v2258
    %v2317 = vrcp.pop %v2260
    %v2318 = vrcp.pop %v2262
    %v2319 = vrcp.pop %v2264
    %v2320 = vrcp.pop %v2266
    %v2321 = vrcp.pop %v2268
    %v2322 = vrcp.pop %v2270
    %v2323 = vrcp.pop %v2272
    %v2324 = vrcp.pop %v2274
    %v2325 = vrcp.pop %v2276
    %v2326 = vrcp.pop %v2278
    %v2327 = vrcp.pop %v2280
    %v2328 = vrcp.pop %v2282
    %v2329 = vrcp.pop %v2284
    %v2330 = vrcp.pop %v2286
    %v2331 = vrcp.pop %v2288
    %v2332 = vrcp.pop %v2290
    %v2333 = vrcp.pop %v2292
    %v2334 = vrcp.pop %v2294
    %v2335 = vrcp.pop %v2296
    %v2336 = vrcp.pop %v2298
    %v2337 = vrcp.pop %v2300
    %v2338 = vrcp.pop %v2302
    %v2339 = vrcp.pop %v2304
    %v2340 = vrcp.pop %v2306
    %v2341 = vrcp.pop %v2308
    %v2342 = vrcp.pop %v2310
    %v2343 = vmul.f32 %v2184, %v2311
    %v2344 = vmul.f32 %v2186, %v2312
    %v2345 = vmul.f32 %v2188, %v2313
    %v2346 = vmul.f32 %v2190, %v2314
    %v2347 = vmul.f32 %v2192, %v2315
    %v2348 = vmul.f32 %v2194, %v2316
    %v2349 = vmul.f32 %v2196, %v2317
    %v2350 = vmul.f32 %v2198, %v2318
    %v2351 = vmul.f32 %v2200, %v2319
    %v2352 = vmul.f32 %v2202, %v2320
    %v2353 = vmul.f32 %v2204, %v2321
    %v2354 = vmul.f32 %v2206, %v2322
    %v2355 = vmul.f32 %v2208, %v2323
    %v2356 = vmul.f32 %v2210, %v2324
    %v2357 = vmul.f32 %v2212, %v2325
    %v2358 = vmul.f32 %v2214, %v2326
    %v2359 = vmul.f32 %v2216, %v2327
    %v2360 = vmul.f32 %v2218, %v2328
    %v2361 = vmul.f32 %v2220, %v2329
    %v2362 = vmul.f32 %v2222, %v2330
    %v2363 = vmul.f32 %v2224, %v2331
    %v2364 = vmul.f32 %v2226, %v2332
    %v2365 = vmul.f32 %v2228, %v2333
    %v2366 = vmul.f32 %v2230, %v2334
    %v2367 = vmul.f32 %v2232, %v2335
    %v2368 = vmul.f32 %v2234, %v2336
    %v2369 = vmul.f32 %v2236, %v2337
    %v2370 = vmul.f32 %v2238, %v2338
    %v2371 = vmul.f32 %v2240, %v2339
    %v2372 = vmul.f32 %v2242, %v2340
    %v2373 = vmul.f32 %v2244, %v2341
    %v2374 = vmul.f32 %v2246, %v2342
    %vm2375 = vcmp.eq.s32.totalorder %v2053, 4
    %v2376 = vsel %vm2375, %v1926, %v2343
    %v2377 = vsel %vm2375, %v1929, %v2344
    %v2378 = vsel %vm2375, %v1934, %v2345
    %v2379 = vsel %vm2375, %v1937, %v2346
    %v2380 = vsel %vm2375, %v1942, %v2347
    %v2381 = vsel %vm2375, %v1945, %v2348
    %v2382 = vsel %vm2375, %v1950, %v2349
    %v2383 = vsel %vm2375, %v1953, %v2350
    %v2384 = vsel %vm2375, %v1958, %v2351
    %v2385 = vsel %vm2375, %v1961, %v2352
    %v2386 = vsel %vm2375, %v1966, %v2353
    %v2387 = vsel %vm2375, %v1969, %v2354
    %v2388 = vsel %vm2375, %v1974, %v2355
    %v2389 = vsel %vm2375, %v1977, %v2356
    %v2390 = vsel %vm2375, %v1982, %v2357
    %v2391 = vsel %vm2375, %v1985, %v2358
    %v2392 = vsel %vm2375, %v1990, %v2359
    %v2393 = vsel %vm2375, %v1993, %v2360
    %v2394 = vsel %vm2375, %v1998, %v2361
    %v2395 = vsel %vm2375, %v2001, %v2362
    %v2396 = vsel %vm2375, %v2006, %v2363
    %v2397 = vsel %vm2375, %v2009, %v2364
    %v2398 = vsel %vm2375, %v2014, %v2365
    %v2399 = vsel %vm2375, %v2017, %v2366
    %v2400 = vsel %vm2375, %v2022, %v2367
    %v2401 = vsel %vm2375, %v2025, %v2368
    %v2402 = vsel %vm2375, %v2030, %v2369
    %v2403 = vsel %vm2375, %v2033, %v2370
    %v2404 = vsel %vm2375, %v2038, %v2371
    %v2405 = vsel %vm2375, %v2041, %v2372
    %v2406 = vsel %vm2375, %v2046, %v2373
    %v2407 = vsel %vm2375, %v2049, %v2374
    %2408 = vst [vmem:[#allocation2] sm:$0xff] %v2376
    %2409 = vst [vmem:[#allocation2 + $0x8] sm:$0xff] %v2377
    %2410 = vst [vmem:[#allocation2 + $0x10] sm:$0xff] %v2378
    %2411 = vst [vmem:[#allocation2 + $0x18] sm:$0xff] %v2379
    %2412 = vst [vmem:[#allocation2 + $0x20] sm:$0xff] %v2380
    %2413 = vst [vmem:[#allocation2 + $0x28] sm:$0xff] %v2381
    %2414 = vst [vmem:[#allocation2 + $0x30] sm:$0xff] %v2382
    %2415 = vst [vmem:[#allocation2 + $0x38] sm:$0xff] %v2383
    %2416 = vst [vmem:[#allocation2 + $0x40] sm:$0xff] %v2384
    %2417 = vst [vmem:[#allocation2 + $0x48] sm:$0xff] %v2385
    %2418 = vst [vmem:[#allocation2 + $0x50] sm:$0xff] %v2386
    %2419 = vst [vmem:[#allocation2 + $0x58] sm:$0xff] %v2387
    %2420 = vst [vmem:[#allocation2 + $0x60] sm:$0xff] %v2388
    %2421 = vst [vmem:[#allocation2 + $0x68] sm:$0xff] %v2389
    %2422 = vst [vmem:[#allocation2 + $0x70] sm:$0xff] %v2390
    %2423 = vst [vmem:[#allocation2 + $0x78] sm:$0xff] %v2391
    %2424 = vst [vmem:[#allocation2 + $0x80] sm:$0xff] %v2392
    %2425 = vst [vmem:[#allocation2 + $0x88] sm:$0xff] %v2393
    %2426 = vst [vmem:[#allocation2 + $0x90] sm:$0xff] %v2394
    %2427 = vst [vmem:[#allocation2 + $0x98] sm:$0xff] %v2395
    %2428 = vst [vmem:[#allocation2 + $0xa0] sm:$0xff] %v2396
    %2429 = vst [vmem:[#allocation2 + $0xa8] sm:$0xff] %v2397
    %2430 = vst [vmem:[#allocation2 + $0xb0] sm:$0xff] %v2398
    %2431 = vst [vmem:[#allocation2 + $0xb8] sm:$0xff] %v2399
    %2432 = vst [vmem:[#allocation2 + $0xc0] sm:$0xff] %v2400
    %2433 = vst [vmem:[#allocation2 + $0xc8] sm:$0xff] %v2401
    %2434 = vst [vmem:[#allocation2 + $0xd0] sm:$0xff] %v2402
    %2435 = vst [vmem:[#allocation2 + $0xd8] sm:$0xff] %v2403
    %2436 = vst [vmem:[#allocation2 + $0xe0] sm:$0xff] %v2404
    %2437 = vst [vmem:[#allocation2 + $0xe8] sm:$0xff] %v2405
    %2438 = vst [vmem:[#allocation2 + $0xf0] sm:$0xff] %v2406
    %2439 = vst [vmem:[#allocation2 + $0xf8] sm:$0xff] %v2407
    // Predicated region
    $region30: #{tpu_custom_call.1} parent=1 // pred_check
      _
    $region31: #{tpu_custom_call.1} parent=1 // pred_check_branch
      %2441 = sbr.rel (0) target = $region33
    $region32: #{tpu_custom_call.1} parent=1 // pred_region
      %s2443 = ssub.s32 4096, 4096
      %2444 = vsyncadd [#allocation3], %s2443
      %s2445 = sshll.u32 [#allocation2], 4
      %s2446 = int_to_ptr.vmem [resolvable:$true] %s2445
      %2451 = dma.vmem_to_hbm [thread:$0]  %s2446, 4096, %s7, [#allocation3], 128, 128, 8
    $region33: #{tpu_custom_call.1} parent=1 // pred_fallthru
      _
    // Predicated region
    $region34: #{tpu_custom_call.1} parent=1 // pred_check
      _
    $region35: #{tpu_custom_call.1} parent=1 // pred_check_branch
      %2453 = sbr.rel (0) target = $region37
    $region36: #{tpu_custom_call.1} parent=1 // pred_region
      %2454 = dma.done [#allocation3], 4096
    $region37: #{tpu_custom_call.1} parent=1 // pred_fallthru
      _
    %2455 = vsyncpa [#allocation3], 1

</llo_original>
